<compile_context>
chip_gen: v7x
topology: tpu7x:2x2x1
jax: 0.10.0
libtpu: 0.0.40
codegen_flags: <defaults>
</compile_context>

<pallas_src>
import jax
import jax.numpy as jnp
from jax.experimental import pallas as pl
from jax.experimental.pallas import tpu as pltpu

BB = 8  # samples per grid step (stacked along rows inside the kernel)


# ----------------------------------------------------------------------------
# One-time parameter preprocessing (outside the forward path)
# ----------------------------------------------------------------------------
def _band_weights(w, width):
    """Lower a (Cout, Cin, k, k) conv weight to k banded matrices.

    Per-sample activations are laid out as  A[h, ci*W + jc] = act[ci, h, jc].
    Then  conv(act, w)[co, i, j] == (sum_ki A[ki+i, :] @ B[ki])[co*Wo + j]
    with  B[ki][(ci, jc), (co, j)] = w[co, ci, ki, jc - j]  for 0 <= jc - j < k.
    """
    cout, cin, k, _ = w.shape
    wo = width - k + 1
    j = jnp.arange(wo)[None, :]              # output column
    jc = jnp.arange(width)[:, None]          # input column
    d = jc - j                               # (W, Wo)
    valid = (d >= 0) & (d < k)
    dc = jnp.clip(d, 0, k - 1)
    wt = jnp.transpose(w, (2, 1, 0, 3))      # (ki, ci, co, kj)
    band = wt[:, :, :, dc]                   # (ki, ci, co, W, Wo)
    band = jnp.where(valid[None, None, None], band, 0.0)
    band = jnp.transpose(band, (0, 1, 3, 2, 4))   # (ki, ci, W, co, Wo)
    return band.reshape(k, cin * width, cout * wo).astype(jnp.float32)


def _pool_rows(out_h, in_h):
    """(out_h, in_h) matrix with 0.5 at [r, 2r] and [r, 2r+1] (pairs-average)."""
    r = jnp.arange(out_h)[:, None]
    c = jnp.arange(in_h)[None, :]
    return jnp.where((c == 2 * r) | (c == 2 * r + 1), 0.5, 0.0).astype(jnp.float32)


def prepare_params(params):
    """Build the VMEM-resident constants the fused kernel consumes (run once)."""
    (w1, b1), (w2, b2), (w3, b3), (fw1, fb1), (fw2, fb2) = params
    f32 = jnp.float32
    eye = lambda n: jnp.eye(n, dtype=f32)

    # Block-diagonal row-pool / row-select matrices for the BB-sample stack.
    # Trailing columns (beyond the conv-output row count) are all-zero in the
    # per-sample pool matrix, so truncation is exact.
    rp1 = jnp.kron(eye(BB), _pool_rows(14, 32))[:, :BB * 32 - 4]   # (112, 252)
    rp2 = jnp.kron(eye(BB), _pool_rows(5, 14))[:, :BB * 14 - 4]    # (40, 108)
    sel3 = (jnp.arange(BB)[:, None] * 5
            == jnp.arange(BB * 5 - 4)[None, :]).astype(f32)        # (8, 36)

    return dict(
        # conv1: 1x32x32 (padded) -> 6x28x28
        w1b=_band_weights(w1, 32), b1r=jnp.repeat(b1, 28)[None, :].astype(f32),
        cw1=jnp.kron(eye(6), _pool_rows(14, 28).T), rp1=rp1,       # (168,84),(112,252)
        # conv2: 6x14x14 -> 16x10x10
        w2b=_band_weights(w2, 14), b2r=jnp.repeat(b2, 10)[None, :].astype(f32),
        cw2=jnp.kron(eye(16), _pool_rows(5, 10).T), rp2=rp2,       # (160,80),(40,108)
        # conv3: 16x5x5 -> 120x1x1
        w3b=_band_weights(w3, 5), b3r=b3[None, :].astype(f32), sel3=sel3,
        # fc layers, pre-transposed once (row-vector activations in-kernel)
        fw1t=fw1.T.astype(f32), fb1r=fb1[None, :].astype(f32),
        fw2t=fw2.T.astype(f32), fb2r=fb2[None, :].astype(f32),
    )


# ----------------------------------------------------------------------------
# Fused LeNet kernel (BB samples per grid step, stacked along rows)
# ----------------------------------------------------------------------------
def _lenet_kernel(x_ref, w1_ref, b1_ref, cw1_ref, rp1_ref,
                  w2_ref, b2_ref, cw2_ref, rp2_ref,
                  w3_ref, b3_ref, sel3_ref, fw1_ref, fb1_ref, fw2_ref, fb2_ref,
                  o_ref, s2_ref, s3_ref):
    def dot(a, b):
        return jnp.dot(a, b, preferred_element_type=jnp.float32)

    R1 = BB * 32 - 4   # 252 stacked conv1 output rows (incl. inter-sample junk)
    R2 = BB * 14 - 4   # 108 stacked conv2 output rows
    R3 = BB * 5 - 4    # 36  stacked conv3 output rows

    # conv1 (5x5, padding folded into the 32x32 input) + sigmoid -> (252, 6*28)
    a = dot(x_ref[0:R1, :], w1_ref[0])
    for ki in range(1, 5):
        a = a + dot(x_ref[ki:ki + R1, :], w1_ref[ki])
    a = jax.nn.sigmoid(a + b1_ref[...])

    # avgpool 2x2: column pool, then block-diag row pool (drops junk rows)
    # -> stacked (BB*14, 6*14); stash in scratch so conv2 can slice row windows
    s2_ref[...] = dot(rp1_ref[...], dot(a, cw1_ref[...]))

    # conv2 (5x5) + sigmoid -> (108, 16*10)
    a = dot(s2_ref[0:R2, :], w2_ref[0])
    for ki in range(1, 5):
        a = a + dot(s2_ref[ki:ki + R2, :], w2_ref[ki])
    a = jax.nn.sigmoid(a + b2_ref[...])

    # avgpool 2x2 -> stacked (BB*5, 16*5)
    s3_ref[...] = dot(rp2_ref[...], dot(a, cw2_ref[...]))

    # conv3 (5x5) -> one row per sample; select valid rows, + sigmoid -> (BB, 120)
    a = dot(s3_ref[0:R3, :], w3_ref[0])
    for ki in range(1, 5):
        a = a + dot(s3_ref[ki:ki + R3, :], w3_ref[ki])
    a = jax.nn.sigmoid(dot(sel3_ref[...], a) + b3_ref[...])   # PyTorch flatten order

    # fc1 + sigmoid -> (BB, 84);  fc2 -> (BB, 10), single block store
    h = jax.nn.sigmoid(dot(a, fw1_ref[...]) + fb1_ref[...])
    o_ref[...] = dot(h, fw2_ref[...]) + fb2_ref[...]


def lenet_forward(x, prep):
    """x: (N, 1, 28, 28) float32 -> logits (N, 10)."""
    n = x.shape[0]
    n_pad = ((n + BB - 1) // BB) * BB
    # batch padding + conv1's padding=2 in one tiny XLA pad; drop the channel;
    # stack samples along rows so each grid step sees a 2-D (BB*32, 32) block.
    xp = jnp.pad(x, ((0, n_pad - n), (0, 0), (2, 2), (2, 2)))[:, 0]   # (n_pad,32,32)
    xs = xp.reshape(n_pad * 32, 32)

    order = ("w1b", "b1r", "cw1", "rp1", "w2b", "b2r", "cw2", "rp2",
             "w3b", "b3r", "sel3", "fw1t", "fb1r", "fw2t", "fb2r")
    consts = [prep[k] for k in order]

    def const_spec(a):
        nd = a.ndim
        return pl.BlockSpec(a.shape, lambda i: (0,) * nd)   # fetched once, reused

    grid_spec = pltpu.PrefetchScalarGridSpec(
        num_scalar_prefetch=0,
        grid=(n_pad // BB,),
        in_specs=[pl.BlockSpec((BB * 32, 32), lambda i: (i, 0))]
                 + [const_spec(a) for a in consts],
        out_specs=pl.BlockSpec((BB, 10), lambda i: (i, 0)),
        scratch_shapes=[pltpu.VMEM((BB * 14, 6 * 14), jnp.float32),
                        pltpu.VMEM((BB * 5, 16 * 5), jnp.float32)],
    )
    out = pl.pallas_call(
        _lenet_kernel,
        out_shape=jax.ShapeDtypeStruct((n_pad, 10), jnp.float32),
        grid_spec=grid_spec,
        compiler_params=pltpu.CompilerParams(dimension_semantics=("parallel",)),
    )(xs, *consts)
    return out[:n]


# ----------------------------------------------------------------------------
# Pure-JAX reference (independent of the Pallas path) for validation
# ----------------------------------------------------------------------------
def lenet_reference(x, params):
    (w1, b1), (w2, b2), (w3, b3), (fw1, fb1), (fw2, fb2) = params

    def conv(x, w, b, pad):
        out = jax.lax.conv_general_dilated(
            x, w, (1, 1), [(pad, pad), (pad, pad)],
            dimension_numbers=("NCHW", "OIHW", "NCHW"))
        return jax.nn.sigmoid(out + b[None, :, None, None])

    def pool(x):
        n, c, h, w = x.shape
        return x.reshape(n, c, h // 2, 2, w // 2, 2).mean(axis=(3, 5))

    x = pool(conv(x, w1, b1, 2))
    x = pool(conv(x, w2, b2, 0))
    x = conv(x, w3, b3, 0)
    x = x.reshape(x.shape[0], -1)
    x = jax.nn.sigmoid(x @ fw1.T + fb1)
    return x @ fw2.T + fb2


# ----------------------------------------------------------------------------
# Deterministic parameter init (PyTorch-default-style uniform bounds)
# ----------------------------------------------------------------------------
def _init_conv(key, cout, cin, k):
    fan_in = cin * k * k
    bound = 1.0 / float(fan_in) ** 0.5
    kw, kb = jax.random.split(key)
    w = jax.random.uniform(kw, (cout, cin, k, k), jnp.float32, -bound, bound)
    b = jax.random.uniform(kb, (cout,), jnp.float32, -bound, bound)
    return w, b


def _init_linear(key, cout, cin):
    bound = 1.0 / float(cin) ** 0.5
    kw, kb = jax.random.split(key)
    w = jax.random.uniform(kw, (cout, cin), jnp.float32, -bound, bound)
    b = jax.random.uniform(kb, (cout,), jnp.float32, -bound, bound)
    return w, b


def init_params(seed=42):
    keys = jax.random.split(jax.random.PRNGKey(seed), 5)
    return (
        _init_conv(keys[0], 6, 1, 5),      # Conv2d(1, 6, 5, padding=2)
        _init_conv(keys[1], 16, 6, 5),     # Conv2d(6, 16, 5)
        _init_conv(keys[2], 120, 16, 5),   # Conv2d(16, 120, 5)
        _init_linear(keys[3], 84, 120),    # Linear(120, 84)
        _init_linear(keys[4], 10, 84),     # Linear(84, 10)
    )


if __name__ == "__main__":
    # LeNet's conv/pool arithmetic requires 28x28 single-channel input.
    batch = 2
    x = jax.random.normal(jax.random.PRNGKey(0), (batch, 1, 28, 28), jnp.float32)
    params = init_params()
    prep = prepare_params(params)          # one-time weight preprocessing

    fwd = jax.jit(lenet_forward)
    out = jax.block_until_ready(fwd(x, prep))
    ref = jax.block_until_ready(lenet_reference(x, params))

    assert out.shape == (batch, 10), out.shape
    assert bool(jnp.all(jnp.isfinite(out)))
    max_err = float(jnp.max(jnp.abs(out - ref)))
    assert jnp.allclose(out, ref, atol=5e-4, rtol=5e-4), max_err
    print("KERNEL_OK")
</pallas_src>

<mosaic_0001>
module attributes {stable_mosaic.version = 11 : i64} {
  func.func @_lenet_kernel(%arg0: i32, %arg1: memref<256x32xf32, #tpu.memory_space<vmem>>, %arg2: memref<5x32x168xf32, #tpu.memory_space<vmem>>, %arg3: memref<1x168xf32, #tpu.memory_space<vmem>>, %arg4: memref<168x84xf32, #tpu.memory_space<vmem>>, %arg5: memref<112x252xf32, #tpu.memory_space<vmem>>, %arg6: memref<5x84x160xf32, #tpu.memory_space<vmem>>, %arg7: memref<1x160xf32, #tpu.memory_space<vmem>>, %arg8: memref<160x80xf32, #tpu.memory_space<vmem>>, %arg9: memref<40x108xf32, #tpu.memory_space<vmem>>, %arg10: memref<5x80x120xf32, #tpu.memory_space<vmem>>, %arg11: memref<1x120xf32, #tpu.memory_space<vmem>>, %arg12: memref<8x36xf32, #tpu.memory_space<vmem>>, %arg13: memref<120x84xf32, #tpu.memory_space<vmem>>, %arg14: memref<1x84xf32, #tpu.memory_space<vmem>>, %arg15: memref<84x10xf32, #tpu.memory_space<vmem>>, %arg16: memref<1x10xf32, #tpu.memory_space<vmem>>, %arg17: memref<8x10xf32, #tpu.memory_space<vmem>>, %arg18: memref<112x84xf32, #tpu.memory_space<vmem>>, %arg19: memref<40x80xf32, #tpu.memory_space<vmem>>) attributes {dimension_semantics = [#tpu.dimension_semantics<parallel>], iteration_bounds = array<i64: 1>, scalar_prefetch = 0 : i64, scratch_operands = 2 : i64, tpu.core_type = #tpu.core_type<tc>, window_params = [{transform_indices = @transform_0, window_bounds = array<i64: 256, 32>}, {pipeline_mode = #tpu.pipeline_mode<synchronous>, transform_indices = @transform_1, window_bounds = array<i64: 5, 32, 168>}, {pipeline_mode = #tpu.pipeline_mode<synchronous>, transform_indices = @transform_2, window_bounds = array<i64: 1, 168>}, {pipeline_mode = #tpu.pipeline_mode<synchronous>, transform_indices = @transform_3, window_bounds = array<i64: 168, 84>}, {pipeline_mode = #tpu.pipeline_mode<synchronous>, transform_indices = @transform_4, window_bounds = array<i64: 112, 252>}, {pipeline_mode = #tpu.pipeline_mode<synchronous>, transform_indices = @transform_5, window_bounds = array<i64: 5, 84, 160>}, {pipeline_mode = #tpu.pipeline_mode<synchronous>, transform_indices = @transform_6, window_bounds = array<i64: 1, 160>}, {pipeline_mode = #tpu.pipeline_mode<synchronous>, transform_indices = @transform_7, window_bounds = array<i64: 160, 80>}, {pipeline_mode = #tpu.pipeline_mode<synchronous>, transform_indices = @transform_8, window_bounds = array<i64: 40, 108>}, {pipeline_mode = #tpu.pipeline_mode<synchronous>, transform_indices = @transform_9, window_bounds = array<i64: 5, 80, 120>}, {pipeline_mode = #tpu.pipeline_mode<synchronous>, transform_indices = @transform_10, window_bounds = array<i64: 1, 120>}, {pipeline_mode = #tpu.pipeline_mode<synchronous>, transform_indices = @transform_11, window_bounds = array<i64: 8, 36>}, {pipeline_mode = #tpu.pipeline_mode<synchronous>, transform_indices = @transform_12, window_bounds = array<i64: 120, 84>}, {pipeline_mode = #tpu.pipeline_mode<synchronous>, transform_indices = @transform_13, window_bounds = array<i64: 1, 84>}, {pipeline_mode = #tpu.pipeline_mode<synchronous>, transform_indices = @transform_14, window_bounds = array<i64: 84, 10>}, {pipeline_mode = #tpu.pipeline_mode<synchronous>, transform_indices = @transform_15, window_bounds = array<i64: 1, 10>}, {transform_indices = @transform_16, window_bounds = array<i64: 8, 10>}]} {
    %c0 = arith.constant 0 : index
    %c0_0 = arith.constant 0 : index
    %0 = vector.load %arg1[%c0, %c0_0] : memref<256x32xf32, #tpu.memory_space<vmem>>, vector<252x32xf32>
    %c0_1 = arith.constant 0 : index
    %c0_2 = arith.constant 0 : index
    %c0_3 = arith.constant 0 : index
    %1 = vector.load %arg2[%c0_1, %c0_2, %c0_3] : memref<5x32x168xf32, #tpu.memory_space<vmem>>, vector<1x32x168xf32>
    %2 = vector.shape_cast %1 : vector<1x32x168xf32> to vector<32x168xf32>
    %cst = arith.constant dense<0.000000e+00> : vector<252x168xf32>
    %3 = tpu.matmul %0, %2, %cst {dimension_numbers = #tpu.dot_dimension_numbers<[1], [0], [0], [1], [0, 0, 1, 1], [], []>} : vector<252x32xf32>, vector<32x168xf32>, vector<252x168xf32> -> vector<252x168xf32>
    %c1 = arith.constant 1 : index
    %c0_4 = arith.constant 0 : index
    %4 = vector.load %arg1[%c1, %c0_4] : memref<256x32xf32, #tpu.memory_space<vmem>>, vector<252x32xf32>
    %c1_5 = arith.constant 1 : index
    %c0_6 = arith.constant 0 : index
    %c0_7 = arith.constant 0 : index
    %5 = vector.load %arg2[%c1_5, %c0_6, %c0_7] : memref<5x32x168xf32, #tpu.memory_space<vmem>>, vector<1x32x168xf32>
    %6 = vector.shape_cast %5 : vector<1x32x168xf32> to vector<32x168xf32>
    %cst_8 = arith.constant dense<0.000000e+00> : vector<252x168xf32>
    %7 = tpu.matmul %4, %6, %cst_8 {dimension_numbers = #tpu.dot_dimension_numbers<[1], [0], [0], [1], [0, 0, 1, 1], [], []>} : vector<252x32xf32>, vector<32x168xf32>, vector<252x168xf32> -> vector<252x168xf32>
    %8 = arith.addf %3, %7 : vector<252x168xf32>
    %c2 = arith.constant 2 : index
    %c0_9 = arith.constant 0 : index
    %9 = vector.load %arg1[%c2, %c0_9] : memref<256x32xf32, #tpu.memory_space<vmem>>, vector<252x32xf32>
    %c2_10 = arith.constant 2 : index
    %c0_11 = arith.constant 0 : index
    %c0_12 = arith.constant 0 : index
    %10 = vector.load %arg2[%c2_10, %c0_11, %c0_12] : memref<5x32x168xf32, #tpu.memory_space<vmem>>, vector<1x32x168xf32>
    %11 = vector.shape_cast %10 : vector<1x32x168xf32> to vector<32x168xf32>
    %cst_13 = arith.constant dense<0.000000e+00> : vector<252x168xf32>
    %12 = tpu.matmul %9, %11, %cst_13 {dimension_numbers = #tpu.dot_dimension_numbers<[1], [0], [0], [1], [0, 0, 1, 1], [], []>} : vector<252x32xf32>, vector<32x168xf32>, vector<252x168xf32> -> vector<252x168xf32>
    %13 = arith.addf %8, %12 : vector<252x168xf32>
    %c3 = arith.constant 3 : index
    %c0_14 = arith.constant 0 : index
    %14 = vector.load %arg1[%c3, %c0_14] : memref<256x32xf32, #tpu.memory_space<vmem>>, vector<252x32xf32>
    %c3_15 = arith.constant 3 : index
    %c0_16 = arith.constant 0 : index
    %c0_17 = arith.constant 0 : index
    %15 = vector.load %arg2[%c3_15, %c0_16, %c0_17] : memref<5x32x168xf32, #tpu.memory_space<vmem>>, vector<1x32x168xf32>
    %16 = vector.shape_cast %15 : vector<1x32x168xf32> to vector<32x168xf32>
    %cst_18 = arith.constant dense<0.000000e+00> : vector<252x168xf32>
    %17 = tpu.matmul %14, %16, %cst_18 {dimension_numbers = #tpu.dot_dimension_numbers<[1], [0], [0], [1], [0, 0, 1, 1], [], []>} : vector<252x32xf32>, vector<32x168xf32>, vector<252x168xf32> -> vector<252x168xf32>
    %18 = arith.addf %13, %17 : vector<252x168xf32>
    %c4 = arith.constant 4 : index
    %c0_19 = arith.constant 0 : index
    %19 = vector.load %arg1[%c4, %c0_19] : memref<256x32xf32, #tpu.memory_space<vmem>>, vector<252x32xf32>
    %c4_20 = arith.constant 4 : index
    %c0_21 = arith.constant 0 : index
    %c0_22 = arith.constant 0 : index
    %20 = vector.load %arg2[%c4_20, %c0_21, %c0_22] : memref<5x32x168xf32, #tpu.memory_space<vmem>>, vector<1x32x168xf32>
    %21 = vector.shape_cast %20 : vector<1x32x168xf32> to vector<32x168xf32>
    %cst_23 = arith.constant dense<0.000000e+00> : vector<252x168xf32>
    %22 = tpu.matmul %19, %21, %cst_23 {dimension_numbers = #tpu.dot_dimension_numbers<[1], [0], [0], [1], [0, 0, 1, 1], [], []>} : vector<252x32xf32>, vector<32x168xf32>, vector<252x168xf32> -> vector<252x168xf32>
    %23 = arith.addf %18, %22 : vector<252x168xf32>
    %c0_24 = arith.constant 0 : index
    %c0_25 = arith.constant 0 : index
    %24 = vector.load %arg3[%c0_24, %c0_25] : memref<1x168xf32, #tpu.memory_space<vmem>>, vector<1x168xf32>
    %25 = vector.broadcast %24 : vector<1x168xf32> to vector<252x168xf32>
    %26 = arith.addf %23, %25 : vector<252x168xf32>
    %27 = arith.negf %26 : vector<252x168xf32>
    %28 = math.exp %27 : vector<252x168xf32>
    %cst_26 = arith.constant 1.000000e+00 : f32
    %29 = vector.broadcast %cst_26 : f32 to vector<252x168xf32>
    %30 = arith.addf %29, %28 : vector<252x168xf32>
    %31 = arith.divf %29, %30 : vector<252x168xf32>
    %c0_27 = arith.constant 0 : index
    %c0_28 = arith.constant 0 : index
    %32 = vector.load %arg5[%c0_27, %c0_28] : memref<112x252xf32, #tpu.memory_space<vmem>>, vector<112x252xf32>
    %c0_29 = arith.constant 0 : index
    %c0_30 = arith.constant 0 : index
    %33 = vector.load %arg4[%c0_29, %c0_30] : memref<168x84xf32, #tpu.memory_space<vmem>>, vector<168x84xf32>
    %cst_31 = arith.constant dense<0.000000e+00> : vector<252x84xf32>
    %34 = tpu.matmul %31, %33, %cst_31 {dimension_numbers = #tpu.dot_dimension_numbers<[1], [0], [0], [1], [0, 0, 1, 1], [], []>} : vector<252x168xf32>, vector<168x84xf32>, vector<252x84xf32> -> vector<252x84xf32>
    %cst_32 = arith.constant dense<0.000000e+00> : vector<112x84xf32>
    %35 = tpu.matmul %32, %34, %cst_32 {dimension_numbers = #tpu.dot_dimension_numbers<[1], [0], [0], [1], [0, 0, 1, 1], [], []>} : vector<112x252xf32>, vector<252x84xf32>, vector<112x84xf32> -> vector<112x84xf32>
    %c0_33 = arith.constant 0 : index
    %c0_34 = arith.constant 0 : index
    %36 = vector.load %arg18[%c0_33, %c0_34] : memref<112x84xf32, #tpu.memory_space<vmem>>, vector<112x84xf32>
    tpu.vector_store %arg18[%c0_33, %c0_34], %35 {strides = array<i32>} : memref<112x84xf32, #tpu.memory_space<vmem>>, vector<112x84xf32>,
    %c0_35 = arith.constant 0 : index
    %c0_36 = arith.constant 0 : index
    %37 = vector.load %arg18[%c0_35, %c0_36] : memref<112x84xf32, #tpu.memory_space<vmem>>, vector<108x84xf32>
    %c0_37 = arith.constant 0 : index
    %c0_38 = arith.constant 0 : index
    %c0_39 = arith.constant 0 : index
    %38 = vector.load %arg6[%c0_37, %c0_38, %c0_39] : memref<5x84x160xf32, #tpu.memory_space<vmem>>, vector<1x84x160xf32>
    %39 = vector.shape_cast %38 : vector<1x84x160xf32> to vector<84x160xf32>
    %cst_40 = arith.constant dense<0.000000e+00> : vector<108x160xf32>
    %40 = tpu.matmul %37, %39, %cst_40 {dimension_numbers = #tpu.dot_dimension_numbers<[1], [0], [0], [1], [0, 0, 1, 1], [], []>} : vector<108x84xf32>, vector<84x160xf32>, vector<108x160xf32> -> vector<108x160xf32>
    %c1_41 = arith.constant 1 : index
    %c0_42 = arith.constant 0 : index
    %41 = vector.load %arg18[%c1_41, %c0_42] : memref<112x84xf32, #tpu.memory_space<vmem>>, vector<108x84xf32>
    %c1_43 = arith.constant 1 : index
    %c0_44 = arith.constant 0 : index
    %c0_45 = arith.constant 0 : index
    %42 = vector.load %arg6[%c1_43, %c0_44, %c0_45] : memref<5x84x160xf32, #tpu.memory_space<vmem>>, vector<1x84x160xf32>
    %43 = vector.shape_cast %42 : vector<1x84x160xf32> to vector<84x160xf32>
    %cst_46 = arith.constant dense<0.000000e+00> : vector<108x160xf32>
    %44 = tpu.matmul %41, %43, %cst_46 {dimension_numbers = #tpu.dot_dimension_numbers<[1], [0], [0], [1], [0, 0, 1, 1], [], []>} : vector<108x84xf32>, vector<84x160xf32>, vector<108x160xf32> -> vector<108x160xf32>
    %45 = arith.addf %40, %44 : vector<108x160xf32>
    %c2_47 = arith.constant 2 : index
    %c0_48 = arith.constant 0 : index
    %46 = vector.load %arg18[%c2_47, %c0_48] : memref<112x84xf32, #tpu.memory_space<vmem>>, vector<108x84xf32>
    %c2_49 = arith.constant 2 : index
    %c0_50 = arith.constant 0 : index
    %c0_51 = arith.constant 0 : index
    %47 = vector.load %arg6[%c2_49, %c0_50, %c0_51] : memref<5x84x160xf32, #tpu.memory_space<vmem>>, vector<1x84x160xf32>
    %48 = vector.shape_cast %47 : vector<1x84x160xf32> to vector<84x160xf32>
    %cst_52 = arith.constant dense<0.000000e+00> : vector<108x160xf32>
    %49 = tpu.matmul %46, %48, %cst_52 {dimension_numbers = #tpu.dot_dimension_numbers<[1], [0], [0], [1], [0, 0, 1, 1], [], []>} : vector<108x84xf32>, vector<84x160xf32>, vector<108x160xf32> -> vector<108x160xf32>
    %50 = arith.addf %45, %49 : vector<108x160xf32>
    %c3_53 = arith.constant 3 : index
    %c0_54 = arith.constant 0 : index
    %51 = vector.load %arg18[%c3_53, %c0_54] : memref<112x84xf32, #tpu.memory_space<vmem>>, vector<108x84xf32>
    %c3_55 = arith.constant 3 : index
    %c0_56 = arith.constant 0 : index
    %c0_57 = arith.constant 0 : index
    %52 = vector.load %arg6[%c3_55, %c0_56, %c0_57] : memref<5x84x160xf32, #tpu.memory_space<vmem>>, vector<1x84x160xf32>
    %53 = vector.shape_cast %52 : vector<1x84x160xf32> to vector<84x160xf32>
    %cst_58 = arith.constant dense<0.000000e+00> : vector<108x160xf32>
    %54 = tpu.matmul %51, %53, %cst_58 {dimension_numbers = #tpu.dot_dimension_numbers<[1], [0], [0], [1], [0, 0, 1, 1], [], []>} : vector<108x84xf32>, vector<84x160xf32>, vector<108x160xf32> -> vector<108x160xf32>
    %55 = arith.addf %50, %54 : vector<108x160xf32>
    %c4_59 = arith.constant 4 : index
    %c0_60 = arith.constant 0 : index
    %56 = vector.load %arg18[%c4_59, %c0_60] : memref<112x84xf32, #tpu.memory_space<vmem>>, vector<108x84xf32>
    %c4_61 = arith.constant 4 : index
    %c0_62 = arith.constant 0 : index
    %c0_63 = arith.constant 0 : index
    %57 = vector.load %arg6[%c4_61, %c0_62, %c0_63] : memref<5x84x160xf32, #tpu.memory_space<vmem>>, vector<1x84x160xf32>
    %58 = vector.shape_cast %57 : vector<1x84x160xf32> to vector<84x160xf32>
    %cst_64 = arith.constant dense<0.000000e+00> : vector<108x160xf32>
    %59 = tpu.matmul %56, %58, %cst_64 {dimension_numbers = #tpu.dot_dimension_numbers<[1], [0], [0], [1], [0, 0, 1, 1], [], []>} : vector<108x84xf32>, vector<84x160xf32>, vector<108x160xf32> -> vector<108x160xf32>
    %60 = arith.addf %55, %59 : vector<108x160xf32>
    %c0_65 = arith.constant 0 : index
    %c0_66 = arith.constant 0 : index
    %61 = vector.load %arg7[%c0_65, %c0_66] : memref<1x160xf32, #tpu.memory_space<vmem>>, vector<1x160xf32>
    %62 = vector.broadcast %61 : vector<1x160xf32> to vector<108x160xf32>
    %63 = arith.addf %60, %62 : vector<108x160xf32>
    %64 = arith.negf %63 : vector<108x160xf32>
    %65 = math.exp %64 : vector<108x160xf32>
    %cst_67 = arith.constant 1.000000e+00 : f32
    %66 = vector.broadcast %cst_67 : f32 to vector<108x160xf32>
    %67 = arith.addf %66, %65 : vector<108x160xf32>
    %68 = arith.divf %66, %67 : vector<108x160xf32>
    %c0_68 = arith.constant 0 : index
    %c0_69 = arith.constant 0 : index
    %69 = vector.load %arg9[%c0_68, %c0_69] : memref<40x108xf32, #tpu.memory_space<vmem>>, vector<40x108xf32>
    %c0_70 = arith.constant 0 : index
    %c0_71 = arith.constant 0 : index
    %70 = vector.load %arg8[%c0_70, %c0_71] : memref<160x80xf32, #tpu.memory_space<vmem>>, vector<160x80xf32>
    %cst_72 = arith.constant dense<0.000000e+00> : vector<108x80xf32>
    %71 = tpu.matmul %68, %70, %cst_72 {dimension_numbers = #tpu.dot_dimension_numbers<[1], [0], [0], [1], [0, 0, 1, 1], [], []>} : vector<108x160xf32>, vector<160x80xf32>, vector<108x80xf32> -> vector<108x80xf32>
    %cst_73 = arith.constant dense<0.000000e+00> : vector<40x80xf32>
    %72 = tpu.matmul %69, %71, %cst_73 {dimension_numbers = #tpu.dot_dimension_numbers<[1], [0], [0], [1], [0, 0, 1, 1], [], []>} : vector<40x108xf32>, vector<108x80xf32>, vector<40x80xf32> -> vector<40x80xf32>
    %c0_74 = arith.constant 0 : index
    %c0_75 = arith.constant 0 : index
    %73 = vector.load %arg19[%c0_74, %c0_75] : memref<40x80xf32, #tpu.memory_space<vmem>>, vector<40x80xf32>
    tpu.vector_store %arg19[%c0_74, %c0_75], %72 {strides = array<i32>} : memref<40x80xf32, #tpu.memory_space<vmem>>, vector<40x80xf32>,
    %c0_76 = arith.constant 0 : index
    %c0_77 = arith.constant 0 : index
    %74 = vector.load %arg19[%c0_76, %c0_77] : memref<40x80xf32, #tpu.memory_space<vmem>>, vector<36x80xf32>
    %c0_78 = arith.constant 0 : index
    %c0_79 = arith.constant 0 : index
    %c0_80 = arith.constant 0 : index
    %75 = vector.load %arg10[%c0_78, %c0_79, %c0_80] : memref<5x80x120xf32, #tpu.memory_space<vmem>>, vector<1x80x120xf32>
    %76 = vector.shape_cast %75 : vector<1x80x120xf32> to vector<80x120xf32>
    %cst_81 = arith.constant dense<0.000000e+00> : vector<36x120xf32>
    %77 = tpu.matmul %74, %76, %cst_81 {dimension_numbers = #tpu.dot_dimension_numbers<[1], [0], [0], [1], [0, 0, 1, 1], [], []>} : vector<36x80xf32>, vector<80x120xf32>, vector<36x120xf32> -> vector<36x120xf32>
    %c1_82 = arith.constant 1 : index
    %c0_83 = arith.constant 0 : index
    %78 = vector.load %arg19[%c1_82, %c0_83] : memref<40x80xf32, #tpu.memory_space<vmem>>, vector<36x80xf32>
    %c1_84 = arith.constant 1 : index
    %c0_85 = arith.constant 0 : index
    %c0_86 = arith.constant 0 : index
    %79 = vector.load %arg10[%c1_84, %c0_85, %c0_86] : memref<5x80x120xf32, #tpu.memory_space<vmem>>, vector<1x80x120xf32>
    %80 = vector.shape_cast %79 : vector<1x80x120xf32> to vector<80x120xf32>
    %cst_87 = arith.constant dense<0.000000e+00> : vector<36x120xf32>
    %81 = tpu.matmul %78, %80, %cst_87 {dimension_numbers = #tpu.dot_dimension_numbers<[1], [0], [0], [1], [0, 0, 1, 1], [], []>} : vector<36x80xf32>, vector<80x120xf32>, vector<36x120xf32> -> vector<36x120xf32>
    %82 = arith.addf %77, %81 : vector<36x120xf32>
    %c2_88 = arith.constant 2 : index
    %c0_89 = arith.constant 0 : index
    %83 = vector.load %arg19[%c2_88, %c0_89] : memref<40x80xf32, #tpu.memory_space<vmem>>, vector<36x80xf32>
    %c2_90 = arith.constant 2 : index
    %c0_91 = arith.constant 0 : index
    %c0_92 = arith.constant 0 : index
    %84 = vector.load %arg10[%c2_90, %c0_91, %c0_92] : memref<5x80x120xf32, #tpu.memory_space<vmem>>, vector<1x80x120xf32>
    %85 = vector.shape_cast %84 : vector<1x80x120xf32> to vector<80x120xf32>
    %cst_93 = arith.constant dense<0.000000e+00> : vector<36x120xf32>
    %86 = tpu.matmul %83, %85, %cst_93 {dimension_numbers = #tpu.dot_dimension_numbers<[1], [0], [0], [1], [0, 0, 1, 1], [], []>} : vector<36x80xf32>, vector<80x120xf32>, vector<36x120xf32> -> vector<36x120xf32>
    %87 = arith.addf %82, %86 : vector<36x120xf32>
    %c3_94 = arith.constant 3 : index
    %c0_95 = arith.constant 0 : index
    %88 = vector.load %arg19[%c3_94, %c0_95] : memref<40x80xf32, #tpu.memory_space<vmem>>, vector<36x80xf32>
    %c3_96 = arith.constant 3 : index
    %c0_97 = arith.constant 0 : index
    %c0_98 = arith.constant 0 : index
    %89 = vector.load %arg10[%c3_96, %c0_97, %c0_98] : memref<5x80x120xf32, #tpu.memory_space<vmem>>, vector<1x80x120xf32>
    %90 = vector.shape_cast %89 : vector<1x80x120xf32> to vector<80x120xf32>
    %cst_99 = arith.constant dense<0.000000e+00> : vector<36x120xf32>
    %91 = tpu.matmul %88, %90, %cst_99 {dimension_numbers = #tpu.dot_dimension_numbers<[1], [0], [0], [1], [0, 0, 1, 1], [], []>} : vector<36x80xf32>, vector<80x120xf32>, vector<36x120xf32> -> vector<36x120xf32>
    %92 = arith.addf %87, %91 : vector<36x120xf32>
    %c4_100 = arith.constant 4 : index
    %c0_101 = arith.constant 0 : index
    %93 = vector.load %arg19[%c4_100, %c0_101] : memref<40x80xf32, #tpu.memory_space<vmem>>, vector<36x80xf32>
    %c4_102 = arith.constant 4 : index
    %c0_103 = arith.constant 0 : index
    %c0_104 = arith.constant 0 : index
    %94 = vector.load %arg10[%c4_102, %c0_103, %c0_104] : memref<5x80x120xf32, #tpu.memory_space<vmem>>, vector<1x80x120xf32>
    %95 = vector.shape_cast %94 : vector<1x80x120xf32> to vector<80x120xf32>
    %cst_105 = arith.constant dense<0.000000e+00> : vector<36x120xf32>
    %96 = tpu.matmul %93, %95, %cst_105 {dimension_numbers = #tpu.dot_dimension_numbers<[1], [0], [0], [1], [0, 0, 1, 1], [], []>} : vector<36x80xf32>, vector<80x120xf32>, vector<36x120xf32> -> vector<36x120xf32>
    %97 = arith.addf %92, %96 : vector<36x120xf32>
    %c0_106 = arith.constant 0 : index
    %c0_107 = arith.constant 0 : index
    %98 = vector.load %arg12[%c0_106, %c0_107] : memref<8x36xf32, #tpu.memory_space<vmem>>, vector<8x36xf32>
    %cst_108 = arith.constant dense<0.000000e+00> : vector<8x120xf32>
    %99 = tpu.matmul %98, %97, %cst_108 {dimension_numbers = #tpu.dot_dimension_numbers<[1], [0], [0], [1], [0, 0, 1, 1], [], []>} : vector<8x36xf32>, vector<36x120xf32>, vector<8x120xf32> -> vector<8x120xf32>
    %c0_109 = arith.constant 0 : index
    %c0_110 = arith.constant 0 : index
    %100 = vector.load %arg11[%c0_109, %c0_110] : memref<1x120xf32, #tpu.memory_space<vmem>>, vector<1x120xf32>
    %101 = vector.broadcast %100 : vector<1x120xf32> to vector<8x120xf32>
    %102 = arith.addf %99, %101 : vector<8x120xf32>
    %103 = arith.negf %102 : vector<8x120xf32>
    %104 = math.exp %103 : vector<8x120xf32>
    %cst_111 = arith.constant 1.000000e+00 : f32
    %105 = vector.broadcast %cst_111 : f32 to vector<8x120xf32>
    %106 = arith.addf %105, %104 : vector<8x120xf32>
    %107 = arith.divf %105, %106 : vector<8x120xf32>
    %c0_112 = arith.constant 0 : index
    %c0_113 = arith.constant 0 : index
    %108 = vector.load %arg13[%c0_112, %c0_113] : memref<120x84xf32, #tpu.memory_space<vmem>>, vector<120x84xf32>
    %cst_114 = arith.constant dense<0.000000e+00> : vector<8x84xf32>
    %109 = tpu.matmul %107, %108, %cst_114 {dimension_numbers = #tpu.dot_dimension_numbers<[1], [0], [0], [1], [0, 0, 1, 1], [], []>} : vector<8x120xf32>, vector<120x84xf32>, vector<8x84xf32> -> vector<8x84xf32>
    %c0_115 = arith.constant 0 : index
    %c0_116 = arith.constant 0 : index
    %110 = vector.load %arg14[%c0_115, %c0_116] : memref<1x84xf32, #tpu.memory_space<vmem>>, vector<1x84xf32>
    %111 = vector.broadcast %110 : vector<1x84xf32> to vector<8x84xf32>
    %112 = arith.addf %109, %111 : vector<8x84xf32>
    %113 = arith.negf %112 : vector<8x84xf32>
    %114 = math.exp %113 : vector<8x84xf32>
    %cst_117 = arith.constant 1.000000e+00 : f32
    %115 = vector.broadcast %cst_117 : f32 to vector<8x84xf32>
    %116 = arith.addf %115, %114 : vector<8x84xf32>
    %117 = arith.divf %115, %116 : vector<8x84xf32>
    %c0_118 = arith.constant 0 : index
    %c0_119 = arith.constant 0 : index
    %118 = vector.load %arg15[%c0_118, %c0_119] : memref<84x10xf32, #tpu.memory_space<vmem>>, vector<84x10xf32>
    %cst_120 = arith.constant dense<0.000000e+00> : vector<8x10xf32>
    %119 = tpu.matmul %117, %118, %cst_120 {dimension_numbers = #tpu.dot_dimension_numbers<[1], [0], [0], [1], [0, 0, 1, 1], [], []>} : vector<8x84xf32>, vector<84x10xf32>, vector<8x10xf32> -> vector<8x10xf32>
    %c0_121 = arith.constant 0 : index
    %c0_122 = arith.constant 0 : index
    %120 = vector.load %arg16[%c0_121, %c0_122] : memref<1x10xf32, #tpu.memory_space<vmem>>, vector<1x10xf32>
    %121 = vector.broadcast %120 : vector<1x10xf32> to vector<8x10xf32>
    %122 = arith.addf %119, %121 : vector<8x10xf32>
    %c0_123 = arith.constant 0 : index
    %c0_124 = arith.constant 0 : index
    %123 = vector.load %arg17[%c0_123, %c0_124] : memref<8x10xf32, #tpu.memory_space<vmem>>, vector<8x10xf32>
    tpu.vector_store %arg17[%c0_123, %c0_124], %122 {strides = array<i32>} : memref<8x10xf32, #tpu.memory_space<vmem>>, vector<8x10xf32>,
    return
  }
  func.func @transform_0(%arg0: i32) -> (i32, i32) {
    %c0_i32 = arith.constant 0 : i32
    %c0_i32_0 = arith.constant 0 : i32
    return %arg0, %c0_i32 : i32, i32
  }
  func.func @transform_1(%arg0: i32) -> (i32, i32, i32) {
    %c0_i32 = arith.constant 0 : i32
    %c0_i32_0 = arith.constant 0 : i32
    %c0_i32_1 = arith.constant 0 : i32
    %c0_i32_2 = arith.constant 0 : i32
    return %c0_i32, %c0_i32_0, %c0_i32_1 : i32, i32, i32
  }
  func.func @transform_2(%arg0: i32) -> (i32, i32) {
    %c0_i32 = arith.constant 0 : i32
    %c0_i32_0 = arith.constant 0 : i32
    %c0_i32_1 = arith.constant 0 : i32
    return %c0_i32, %c0_i32_0 : i32, i32
  }
  func.func @transform_3(%arg0: i32) -> (i32, i32) {
    %c0_i32 = arith.constant 0 : i32
    %c0_i32_0 = arith.constant 0 : i32
    %c0_i32_1 = arith.constant 0 : i32
    return %c0_i32, %c0_i32_0 : i32, i32
  }
  func.func @transform_4(%arg0: i32) -> (i32, i32) {
    %c0_i32 = arith.constant 0 : i32
    %c0_i32_0 = arith.constant 0 : i32
    %c0_i32_1 = arith.constant 0 : i32
    return %c0_i32, %c0_i32_0 : i32, i32
  }
  func.func @transform_5(%arg0: i32) -> (i32, i32, i32) {
    %c0_i32 = arith.constant 0 : i32
    %c0_i32_0 = arith.constant 0 : i32
    %c0_i32_1 = arith.constant 0 : i32
    %c0_i32_2 = arith.constant 0 : i32
    return %c0_i32, %c0_i32_0, %c0_i32_1 : i32, i32, i32
  }
  func.func @transform_6(%arg0: i32) -> (i32, i32) {
    %c0_i32 = arith.constant 0 : i32
    %c0_i32_0 = arith.constant 0 : i32
    %c0_i32_1 = arith.constant 0 : i32
    return %c0_i32, %c0_i32_0 : i32, i32
  }
  func.func @transform_7(%arg0: i32) -> (i32, i32) {
    %c0_i32 = arith.constant 0 : i32
    %c0_i32_0 = arith.constant 0 : i32
    %c0_i32_1 = arith.constant 0 : i32
    return %c0_i32, %c0_i32_0 : i32, i32
  }
  func.func @transform_8(%arg0: i32) -> (i32, i32) {
    %c0_i32 = arith.constant 0 : i32
    %c0_i32_0 = arith.constant 0 : i32
    %c0_i32_1 = arith.constant 0 : i32
    return %c0_i32, %c0_i32_0 : i32, i32
  }
  func.func @transform_9(%arg0: i32) -> (i32, i32, i32) {
    %c0_i32 = arith.constant 0 : i32
    %c0_i32_0 = arith.constant 0 : i32
    %c0_i32_1 = arith.constant 0 : i32
    %c0_i32_2 = arith.constant 0 : i32
    return %c0_i32, %c0_i32_0, %c0_i32_1 : i32, i32, i32
  }
  func.func @transform_10(%arg0: i32) -> (i32, i32) {
    %c0_i32 = arith.constant 0 : i32
    %c0_i32_0 = arith.constant 0 : i32
    %c0_i32_1 = arith.constant 0 : i32
    return %c0_i32, %c0_i32_0 : i32, i32
  }
  func.func @transform_11(%arg0: i32) -> (i32, i32) {
    %c0_i32 = arith.constant 0 : i32
    %c0_i32_0 = arith.constant 0 : i32
    %c0_i32_1 = arith.constant 0 : i32
    return %c0_i32, %c0_i32_0 : i32, i32
  }
  func.func @transform_12(%arg0: i32) -> (i32, i32) {
    %c0_i32 = arith.constant 0 : i32
    %c0_i32_0 = arith.constant 0 : i32
    %c0_i32_1 = arith.constant 0 : i32
    return %c0_i32, %c0_i32_0 : i32, i32
  }
  func.func @transform_13(%arg0: i32) -> (i32, i32) {
    %c0_i32 = arith.constant 0 : i32
    %c0_i32_0 = arith.constant 0 : i32
    %c0_i32_1 = arith.constant 0 : i32
    return %c0_i32, %c0_i32_0 : i32, i32
  }
  func.func @transform_14(%arg0: i32) -> (i32, i32) {
    %c0_i32 = arith.constant 0 : i32
    %c0_i32_0 = arith.constant 0 : i32
    %c0_i32_1 = arith.constant 0 : i32
    return %c0_i32, %c0_i32_0 : i32, i32
  }
  func.func @transform_15(%arg0: i32) -> (i32, i32) {
    %c0_i32 = arith.constant 0 : i32
    %c0_i32_0 = arith.constant 0 : i32
    %c0_i32_1 = arith.constant 0 : i32
    return %c0_i32, %c0_i32_0 : i32, i32
  }
  func.func @transform_16(%arg0: i32) -> (i32, i32) {
    %c0_i32 = arith.constant 0 : i32
    %c0_i32_0 = arith.constant 0 : i32
    return %arg0, %c0_i32 : i32, i32
  }
}

</mosaic_0001>

<llo_original>
// kernel: lenet_forward.1
$region0: #{lenet_forward.1}
  #allocation0 [shape = 'u32[]', space=smem, size = 0x4, offset = 0x4, fixed_abs, tag = 'smem constant byte address 0x4 - core index']
  #allocation1 [shape = 'u32[144,128]{1,0:T(1,128)}', space=vmem, size = 0x12000, scoped, tag = 'internal scratch']
  #allocation2 [shape = 'f32[112,84]{1,0:T(8,128)}', space=vmem, size = 0xe000, scoped, tag = 'scratch operand']
  #allocation3 [shape = 'f32[40,80]{1,0:T(8,128)}', space=vmem, size = 0x5000, scoped, tag = 'scratch operand']
  %s0 = inlined_call_operand.vmem [shape: f32[256,32], index: 0, kind: input, shape index: {}]
  %s1 = inlined_call_operand.vmem [shape: f32[5,32,168], index: 1, kind: input, shape index: {}]
  %s2 = inlined_call_operand.vmem [shape: f32[1,168], index: 2, kind: input, shape index: {}]
  %s3 = inlined_call_operand.vmem [shape: f32[168,84], index: 3, kind: input, shape index: {}]
  %s4 = inlined_call_operand.vmem [shape: f32[112,252], index: 4, kind: input, shape index: {}]
  %s5 = inlined_call_operand.vmem [shape: f32[5,84,160], index: 5, kind: input, shape index: {}]
  %s6 = inlined_call_operand.vmem [shape: f32[1,160], index: 6, kind: input, shape index: {}]
  %s7 = inlined_call_operand.vmem [shape: f32[160,80], index: 7, kind: input, shape index: {}]
  %s8 = inlined_call_operand.vmem [shape: f32[40,108], index: 8, kind: input, shape index: {}]
  %s9 = inlined_call_operand.vmem [shape: f32[5,80,120], index: 9, kind: input, shape index: {}]
  %s10 = inlined_call_operand.vmem [shape: f32[1,120], index: 10, kind: input, shape index: {}]
  %s11 = inlined_call_operand.vmem [shape: f32[8,36], index: 11, kind: input, shape index: {}]
  %s12 = inlined_call_operand.vmem [shape: f32[120,84], index: 12, kind: input, shape index: {}]
  %s13 = inlined_call_operand.vmem [shape: f32[1,84], index: 13, kind: input, shape index: {}]
  %s14 = inlined_call_operand.vmem [shape: f32[84,10], index: 14, kind: input, shape index: {}]
  %s15 = inlined_call_operand.vmem [shape: f32[1,10], index: 15, kind: input, shape index: {}]
  %s16 = inlined_call_operand.vmem [shape: f32[8,10], index: 16, kind: output, shape index: {}]
  %s17 = sld [smem:[#allocation0]]
  $region74: #{lenet_forward.1} parent=0
    _
  %s19 = ssub.s32 1, %s17
  %s20 = scalar_select 0, %s19, %s17
  // Predicated region
  $region2: #{lenet_forward.1} parent=0 // pred_check
    _
  $region3: #{lenet_forward.1} parent=0 // pred_check_branch
    %22 = sbr.rel (0) target = $region5
  $region4: #{lenet_forward.1} parent=0 // pred_region
    _
  $region5: #{lenet_forward.1} parent=0 // pred_fallthru
    _
  // Predicated region
  $region6: #{lenet_forward.1} parent=0 // pred_check
    _
  $region7: #{lenet_forward.1} parent=0 // pred_check_branch
    %24 = sbr.rel (0) target = $region9
  $region8: #{lenet_forward.1} parent=0 // pred_region
    _
  $region9: #{lenet_forward.1} parent=0 // pred_fallthru
    _
  // Predicated region
  $region10: #{lenet_forward.1} parent=0 // pred_check
    _
  $region11: #{lenet_forward.1} parent=0 // pred_check_branch
    %26 = sbr.rel (0) target = $region13
  $region12: #{lenet_forward.1} parent=0 // pred_region
    _
  $region13: #{lenet_forward.1} parent=0 // pred_fallthru
    _
  // Predicated region
  $region14: #{lenet_forward.1} parent=0 // pred_check
    _
  $region15: #{lenet_forward.1} parent=0 // pred_check_branch
    %28 = sbr.rel (0) target = $region17
  $region16: #{lenet_forward.1} parent=0 // pred_region
    _
  $region17: #{lenet_forward.1} parent=0 // pred_fallthru
    _
  // Predicated region
  $region18: #{lenet_forward.1} parent=0 // pred_check
    _
  $region19: #{lenet_forward.1} parent=0 // pred_check_branch
    %30 = sbr.rel (0) target = $region21
  $region20: #{lenet_forward.1} parent=0 // pred_region
    _
  $region21: #{lenet_forward.1} parent=0 // pred_fallthru
    _
  // Predicated region
  $region22: #{lenet_forward.1} parent=0 // pred_check
    _
  $region23: #{lenet_forward.1} parent=0 // pred_check_branch
    %32 = sbr.rel (0) target = $region25
  $region24: #{lenet_forward.1} parent=0 // pred_region
    _
  $region25: #{lenet_forward.1} parent=0 // pred_fallthru
    _
  // Predicated region
  $region26: #{lenet_forward.1} parent=0 // pred_check
    _
  $region27: #{lenet_forward.1} parent=0 // pred_check_branch
    %34 = sbr.rel (0) target = $region29
  $region28: #{lenet_forward.1} parent=0 // pred_region
    _
  $region29: #{lenet_forward.1} parent=0 // pred_fallthru
    _
  // Predicated region
  $region30: #{lenet_forward.1} parent=0 // pred_check
    _
  $region31: #{lenet_forward.1} parent=0 // pred_check_branch
    %36 = sbr.rel (0) target = $region33
  $region32: #{lenet_forward.1} parent=0 // pred_region
    _
  $region33: #{lenet_forward.1} parent=0 // pred_fallthru
    _
  // Predicated region
  $region34: #{lenet_forward.1} parent=0 // pred_check
    _
  $region35: #{lenet_forward.1} parent=0 // pred_check_branch
    %38 = sbr.rel (0) target = $region37
  $region36: #{lenet_forward.1} parent=0 // pred_region
    _
  $region37: #{lenet_forward.1} parent=0 // pred_fallthru
    _
  // Predicated region
  $region38: #{lenet_forward.1} parent=0 // pred_check
    _
  $region39: #{lenet_forward.1} parent=0 // pred_check_branch
    %40 = sbr.rel (0) target = $region41
  $region40: #{lenet_forward.1} parent=0 // pred_region
    _
  $region41: #{lenet_forward.1} parent=0 // pred_fallthru
    _
  // Predicated region
  $region42: #{lenet_forward.1} parent=0 // pred_check
    _
  $region43: #{lenet_forward.1} parent=0 // pred_check_branch
    %42 = sbr.rel (0) target = $region45
  $region44: #{lenet_forward.1} parent=0 // pred_region
    _
  $region45: #{lenet_forward.1} parent=0 // pred_fallthru
    _
  // Predicated region
  $region46: #{lenet_forward.1} parent=0 // pred_check
    _
  $region47: #{lenet_forward.1} parent=0 // pred_check_branch
    %44 = sbr.rel (0) target = $region49
  $region48: #{lenet_forward.1} parent=0 // pred_region
    _
  $region49: #{lenet_forward.1} parent=0 // pred_fallthru
    _
  // Predicated region
  $region50: #{lenet_forward.1} parent=0 // pred_check
    _
  $region51: #{lenet_forward.1} parent=0 // pred_check_branch
    %46 = sbr.rel (0) target = $region53
  $region52: #{lenet_forward.1} parent=0 // pred_region
    _
  $region53: #{lenet_forward.1} parent=0 // pred_fallthru
    _
  // Predicated region
  $region54: #{lenet_forward.1} parent=0 // pred_check
    _
  $region55: #{lenet_forward.1} parent=0 // pred_check_branch
    %48 = sbr.rel (0) target = $region57
  $region56: #{lenet_forward.1} parent=0 // pred_region
    _
  $region57: #{lenet_forward.1} parent=0 // pred_fallthru
    _
  // Predicated region
  $region58: #{lenet_forward.1} parent=0 // pred_check
    _
  $region59: #{lenet_forward.1} parent=0 // pred_check_branch
    %50 = sbr.rel (0) target = $region61
  $region60: #{lenet_forward.1} parent=0 // pred_region
    _
  $region61: #{lenet_forward.1} parent=0 // pred_fallthru
    _
  // Predicated region
  $region62: #{lenet_forward.1} parent=0 // pred_check
    _
  $region63: #{lenet_forward.1} parent=0 // pred_check_branch
    %52 = sbr.rel (0) target = $region65
  $region64: #{lenet_forward.1} parent=0 // pred_region
    _
  $region65: #{lenet_forward.1} parent=0 // pred_fallthru
    _
  %v53 = vld [vmem:[%s0] sm:$0xff]
  %v54 = vld [vmem:[%s0 + $0x8] sm:$0xff]
  %v55 = vld [vmem:[%s0 + $0x10] sm:$0xff]
  %v56 = vld [vmem:[%s0 + $0x18] sm:$0xff]
  %v57 = vld [vmem:[%s0 + $0x20] sm:$0xff]
  %v58 = vld [vmem:[%s0 + $0x28] sm:$0xff]
  %v59 = vld [vmem:[%s0 + $0x30] sm:$0xff]
  %v60 = vld [vmem:[%s0 + $0x38] sm:$0xff]
  %v61 = vld [vmem:[%s0 + $0x40] sm:$0xff]
  %v62 = vld [vmem:[%s0 + $0x48] sm:$0xff]
  %v63 = vld [vmem:[%s0 + $0x50] sm:$0xff]
  %v64 = vld [vmem:[%s0 + $0x58] sm:$0xff]
  %v65 = vld [vmem:[%s0 + $0x60] sm:$0xff]
  %v66 = vld [vmem:[%s0 + $0x68] sm:$0xff]
  %v67 = vld [vmem:[%s0 + $0x70] sm:$0xff]
  %v68 = vld [vmem:[%s0 + $0x78] sm:$0xff]
  %v69 = vld [vmem:[%s0 + $0x80] sm:$0xff]
  %v70 = vld [vmem:[%s0 + $0x88] sm:$0xff]
  %v71 = vld [vmem:[%s0 + $0x90] sm:$0xff]
  %v72 = vld [vmem:[%s0 + $0x98] sm:$0xff]
  %v73 = vld [vmem:[%s0 + $0xa0] sm:$0xff]
  %v74 = vld [vmem:[%s0 + $0xa8] sm:$0xff]
  %v75 = vld [vmem:[%s0 + $0xb0] sm:$0xff]
  %v76 = vld [vmem:[%s0 + $0xb8] sm:$0xff]
  %v77 = vld [vmem:[%s0 + $0xc0] sm:$0xff]
  %v78 = vld [vmem:[%s0 + $0xc8] sm:$0xff]
  %v79 = vld [vmem:[%s0 + $0xd0] sm:$0xff]
  %v80 = vld [vmem:[%s0 + $0xd8] sm:$0xff]
  %v81 = vld [vmem:[%s0 + $0xe0] sm:$0xff]
  %v82 = vld [vmem:[%s0 + $0xe8] sm:$0xff]
  %v83 = vld [vmem:[%s0 + $0xf0] sm:$0xff]
  %v84 = vld [vmem:[%s0 + $0xf8] sm:$0xf]
  %v85 = vld [vmem:[%s1] sm:$0xff]
  %v86 = vld [vmem:[%s1 + $0x8] sm:$0xff]
  %v87 = vld [vmem:[%s1 + $0x10] sm:$0xff]
  %v88 = vld [vmem:[%s1 + $0x18] sm:$0xff]
  %v89 = vld [vmem:[%s1 + $0x20] sm:$0xff]
  %v90 = vld [vmem:[%s1 + $0x28] sm:$0xff]
  %v91 = vld [vmem:[%s1 + $0x30] sm:$0xff]
  %v92 = vld [vmem:[%s1 + $0x38] sm:$0xff]
  %v93 = vld [vmem:[%s0 + $0x1] sm:$0xff]
  %v94 = vld [vmem:[%s0 + $0x9] sm:$0xff]
  %v95 = vld [vmem:[%s0 + $0x11] sm:$0xff]
  %v96 = vld [vmem:[%s0 + $0x19] sm:$0xff]
  %v97 = vld [vmem:[%s0 + $0x21] sm:$0xff]
  %v98 = vld [vmem:[%s0 + $0x29] sm:$0xff]
  %v99 = vld [vmem:[%s0 + $0x31] sm:$0xff]
  %v100 = vld [vmem:[%s0 + $0x39] sm:$0xff]
  %v101 = vld [vmem:[%s0 + $0x41] sm:$0xff]
  %v102 = vld [vmem:[%s0 + $0x49] sm:$0xff]
  %v103 = vld [vmem:[%s0 + $0x51] sm:$0xff]
  %v104 = vld [vmem:[%s0 + $0x59] sm:$0xff]
  %v105 = vld [vmem:[%s0 + $0x61] sm:$0xff]
  %v106 = vld [vmem:[%s0 + $0x69] sm:$0xff]
  %v107 = vld [vmem:[%s0 + $0x71] sm:$0xff]
  %v108 = vld [vmem:[%s0 + $0x79] sm:$0xff]
  %v109 = vld [vmem:[%s0 + $0x81] sm:$0xff]
  %v110 = vld [vmem:[%s0 + $0x89] sm:$0xff]
  %v111 = vld [vmem:[%s0 + $0x91] sm:$0xff]
  %v112 = vld [vmem:[%s0 + $0x99] sm:$0xff]
  %v113 = vld [vmem:[%s0 + $0xa1] sm:$0xff]
  %v114 = vld [vmem:[%s0 + $0xa9] sm:$0xff]
  %v115 = vld [vmem:[%s0 + $0xb1] sm:$0xff]
  %v116 = vld [vmem:[%s0 + $0xb9] sm:$0xff]
  %v117 = vld [vmem:[%s0 + $0xc1] sm:$0xff]
  %v118 = vld [vmem:[%s0 + $0xc9] sm:$0xff]
  %v119 = vld [vmem:[%s0 + $0xd1] sm:$0xff]
  %v120 = vld [vmem:[%s0 + $0xd9] sm:$0xff]
  %v121 = vld [vmem:[%s0 + $0xe1] sm:$0xff]
  %v122 = vld [vmem:[%s0 + $0xe9] sm:$0xff]
  %v123 = vld [vmem:[%s0 + $0xf1] sm:$0xff]
  %v124 = vld [vmem:[%s0 + $0xf9] sm:$0xf]
  %s125 = scalar_lea.vmem %s1, 64
  %v126 = vld [vmem:[%s125] sm:$0xff]
  %v127 = vld [vmem:[%s125 + $0x8] sm:$0xff]
  %v128 = vld [vmem:[%s125 + $0x10] sm:$0xff]
  %v129 = vld [vmem:[%s125 + $0x18] sm:$0xff]
  %v130 = vld [vmem:[%s125 + $0x20] sm:$0xff]
  %v131 = vld [vmem:[%s125 + $0x28] sm:$0xff]
  %v132 = vld [vmem:[%s125 + $0x30] sm:$0xff]
  %v133 = vld [vmem:[%s125 + $0x38] sm:$0xff]
  %vm134 = vcmask 261120
  %v136 = vsel %vm134, %v93, 0
  %v139 = vsel %vm134, %v94, 0
  %v142 = vsel %vm134, %v95, 0
  %v145 = vsel %vm134, %v96, 0
  %v148 = vsel %vm134, %v97, 0
  %v151 = vsel %vm134, %v98, 0
  %v154 = vsel %vm134, %v99, 0
  %v157 = vsel %vm134, %v100, 0
  %v160 = vsel %vm134, %v101, 0
  %v163 = vsel %vm134, %v102, 0
  %v166 = vsel %vm134, %v103, 0
  %v169 = vsel %vm134, %v104, 0
  %v172 = vsel %vm134, %v105, 0
  %v175 = vsel %vm134, %v106, 0
  %v178 = vsel %vm134, %v107, 0
  %v181 = vsel %vm134, %v108, 0
  %v184 = vsel %vm134, %v109, 0
  %v187 = vsel %vm134, %v110, 0
  %v190 = vsel %vm134, %v111, 0
  %v193 = vsel %vm134, %v112, 0
  %v196 = vsel %vm134, %v113, 0
  %v199 = vsel %vm134, %v114, 0
  %v202 = vsel %vm134, %v115, 0
  %v205 = vsel %vm134, %v116, 0
  %v208 = vsel %vm134, %v117, 0
  %v211 = vsel %vm134, %v118, 0
  %v214 = vsel %vm134, %v119, 0
  %v217 = vsel %vm134, %v120, 0
  %v220 = vsel %vm134, %v121, 0
  %v223 = vsel %vm134, %v122, 0
  %v226 = vsel %vm134, %v123, 0
  %v229 = vsel %vm134, %v124, 0
  %231 = vmatprep.subr.mxu0 %v127
  %232 = vmatpush1.msra.mxu0 %v126
  %233 = vmatprep.subr.mxu0 %v129
  %234 = vmatpush1.msra.mxu0 %v128
  %235 = vmatprep.subr.mxu0 %v131
  %236 = vmatpush1.msra.mxu0 %v130
  %237 = vmatprep.subr.mxu0 %v133
  %238 = vmatpush1.msra.mxu0 %v132
  %239 = vmatprep.subr.mxu0 0.0
  %240 = vmatpush1.msra.mxu0 0.0
  %241 = vmatprep.subr.mxu0 0.0
  %242 = vmatpush1.msra.mxu0 0.0
  %243 = vmatprep.subr.mxu0 0.0
  %244 = vmatpush1.msra.mxu0 0.0
  %245 = vmatprep.subr.mxu0 0.0
  %246 = vmatpush1.msra.mxu0 0.0
  %247 = vmatprep.subr.mxu0 0.0
  %248 = vmatpush1.msra.mxu0 0.0
  %249 = vmatprep.subr.mxu0 0.0
  %250 = vmatpush1.msra.mxu0 0.0
  %251 = vmatprep.subr.mxu0 0.0
  %252 = vmatpush1.msra.mxu0 0.0
  %253 = vmatprep.subr.mxu0 0.0
  %254 = vmatpush1.msra.mxu0 0.0
  %255 = vmatprep.subr.mxu0 0.0
  %256 = vmatpush1.msra.mxu0 0.0
  %257 = vmatprep.subr.mxu0 0.0
  %258 = vmatpush1.msra.mxu0 0.0
  %259 = vmatprep.subr.mxu0 0.0
  %260 = vmatpush1.msra.mxu0 0.0
  %261 = vmatprep.subr.mxu0 0.0
  %262 = vmatpush1.msra.mxu0 0.0
  %263 = vmatprep.subr.mxu0 0.0
  %264 = vmatpush1.msra.mxu0 0.0
  %265 = vmatprep.subr.mxu0 0.0
  %266 = vmatpush1.msra.mxu0 0.0
  %267 = vmatprep.subr.mxu0 0.0
  %268 = vmatpush1.msra.mxu0 0.0
  %269 = vmatprep.subr.mxu0 0.0
  %270 = vmatpush1.msra.mxu0 0.0
  %271 = vmatprep.subr.mxu0 0.0
  %272 = vmatpush1.msra.mxu0 0.0
  %273 = vmatprep.subr.mxu0 0.0
  %274 = vmatpush1.msra.mxu0 0.0
  %275 = vmatprep.subr.mxu0 0.0
  %276 = vmatpush1.msra.mxu0 0.0
  %277 = vmatprep.subr.mxu0 0.0
  %278 = vmatpush1.msra.mxu0 0.0
  %279 = vmatprep.subr.mxu0 0.0
  %280 = vmatpush1.msra.mxu0 0.0
  %281 = vmatprep.subr.mxu0 0.0
  %282 = vmatpush1.msra.mxu0 0.0
  %283 = vmatprep.subr.mxu0 0.0
  %284 = vmatpush1.msra.mxu0 0.0
  %285 = vmatprep.subr.mxu0 0.0
  %286 = vmatpush1.msra.mxu0 0.0
  %287 = vmatprep.subr.mxu0 0.0
  %288 = vmatpush1.msra.mxu0 0.0
  %289 = vmatprep.subr.mxu0 0.0
  %290 = vmatpush1.msra.mxu0 0.0
  %291 = vmatprep.subr.mxu0 0.0
  %292 = vmatpush1.msra.mxu0 0.0
  %293 = vmatprep.subr.mxu0 0.0
  %294 = vmatpush1.msra.mxu0 0.0
  %295 = vmatprep.mubr.f32.mxu0 0.0
  %296 = vmatmul.mubr.f32.gmra.mrb[0].mxu0 %v136
  %v297 = vpop.f32.mrb[0].mxu0
  %v298 = vadd.f32 0.0, %v297
  %v299 = vpop.f32.mrb[0].mxu0
  %v300 = vadd.f32 0.0, %v299
  %301 = vmatprep.mubr.f32.mxu0 0.0
  %302 = vmatmul.mubr.f32.gmra.mrb[0].mxu0 %v139
  %v303 = vpop.f32.mrb[0].mxu0
  %v304 = vadd.f32 0.0, %v303
  %v305 = vpop.f32.mrb[0].mxu0
  %v306 = vadd.f32 0.0, %v305
  %307 = vmatprep.mubr.f32.mxu0 0.0
  %308 = vmatmul.mubr.f32.gmra.mrb[0].mxu0 %v142
  %v309 = vpop.f32.mrb[0].mxu0
  %v310 = vadd.f32 0.0, %v309
  %v311 = vpop.f32.mrb[0].mxu0
  %v312 = vadd.f32 0.0, %v311
  %313 = vmatprep.mubr.f32.mxu0 0.0
  %314 = vmatmul.mubr.f32.gmra.mrb[0].mxu0 %v145
  %v315 = vpop.f32.mrb[0].mxu0
  %v316 = vadd.f32 0.0, %v315
  %v317 = vpop.f32.mrb[0].mxu0
  %v318 = vadd.f32 0.0, %v317
  %319 = vmatprep.mubr.f32.mxu0 0.0
  %320 = vmatmul.mubr.f32.gmra.mrb[0].mxu0 %v148
  %v321 = vpop.f32.mrb[0].mxu0
  %v322 = vadd.f32 0.0, %v321
  %v323 = vpop.f32.mrb[0].mxu0
  %v324 = vadd.f32 0.0, %v323
  %325 = vmatprep.mubr.f32.mxu0 0.0
  %326 = vmatmul.mubr.f32.gmra.mrb[0].mxu0 %v151
  %v327 = vpop.f32.mrb[0].mxu0
  %v328 = vadd.f32 0.0, %v327
  %v329 = vpop.f32.mrb[0].mxu0
  %v330 = vadd.f32 0.0, %v329
  %331 = vmatprep.mubr.f32.mxu0 0.0
  %332 = vmatmul.mubr.f32.gmra.mrb[0].mxu0 %v154
  %v333 = vpop.f32.mrb[0].mxu0
  %v334 = vadd.f32 0.0, %v333
  %v335 = vpop.f32.mrb[0].mxu0
  %v336 = vadd.f32 0.0, %v335
  %337 = vmatprep.mubr.f32.mxu0 0.0
  %338 = vmatmul.mubr.f32.gmra.mrb[0].mxu0 %v157
  %v339 = vpop.f32.mrb[0].mxu0
  %v340 = vadd.f32 0.0, %v339
  %v341 = vpop.f32.mrb[0].mxu0
  %v342 = vadd.f32 0.0, %v341
  %343 = vmatprep.mubr.f32.mxu0 0.0
  %344 = vmatmul.mubr.f32.gmra.mrb[0].mxu0 %v160
  %v345 = vpop.f32.mrb[0].mxu0
  %v346 = vadd.f32 0.0, %v345
  %v347 = vpop.f32.mrb[0].mxu0
  %v348 = vadd.f32 0.0, %v347
  %349 = vmatprep.mubr.f32.mxu0 0.0
  %350 = vmatmul.mubr.f32.gmra.mrb[0].mxu0 %v163
  %v351 = vpop.f32.mrb[0].mxu0
  %v352 = vadd.f32 0.0, %v351
  %v353 = vpop.f32.mrb[0].mxu0
  %v354 = vadd.f32 0.0, %v353
  %355 = vmatprep.mubr.f32.mxu0 0.0
  %356 = vmatmul.mubr.f32.gmra.mrb[0].mxu0 %v166
  %v357 = vpop.f32.mrb[0].mxu0
  %v358 = vadd.f32 0.0, %v357
  %v359 = vpop.f32.mrb[0].mxu0
  %v360 = vadd.f32 0.0, %v359
  %361 = vmatprep.mubr.f32.mxu0 0.0
  %362 = vmatmul.mubr.f32.gmra.mrb[0].mxu0 %v169
  %v363 = vpop.f32.mrb[0].mxu0
  %v364 = vadd.f32 0.0, %v363
  %v365 = vpop.f32.mrb[0].mxu0
  %v366 = vadd.f32 0.0, %v365
  %367 = vmatprep.mubr.f32.mxu0 0.0
  %368 = vmatmul.mubr.f32.gmra.mrb[0].mxu0 %v172
  %v369 = vpop.f32.mrb[0].mxu0
  %v370 = vadd.f32 0.0, %v369
  %v371 = vpop.f32.mrb[0].mxu0
  %v372 = vadd.f32 0.0, %v371
  %373 = vmatprep.mubr.f32.mxu0 0.0
  %374 = vmatmul.mubr.f32.gmra.mrb[0].mxu0 %v175
  %v375 = vpop.f32.mrb[0].mxu0
  %v376 = vadd.f32 0.0, %v375
  %v377 = vpop.f32.mrb[0].mxu0
  %v378 = vadd.f32 0.0, %v377
  %379 = vmatprep.mubr.f32.mxu0 0.0
  %380 = vmatmul.mubr.f32.gmra.mrb[0].mxu0 %v178
  %v381 = vpop.f32.mrb[0].mxu0
  %v382 = vadd.f32 0.0, %v381
  %v383 = vpop.f32.mrb[0].mxu0
  %v384 = vadd.f32 0.0, %v383
  %385 = vmatprep.mubr.f32.mxu0 0.0
  %386 = vmatmul.mubr.f32.gmra.mrb[0].mxu0 %v181
  %v387 = vpop.f32.mrb[0].mxu0
  %v388 = vadd.f32 0.0, %v387
  %v389 = vpop.f32.mrb[0].mxu0
  %v390 = vadd.f32 0.0, %v389
  %391 = vmatprep.mubr.f32.mxu0 0.0
  %392 = vmatmul.mubr.f32.gmra.mrb[0].mxu0 %v184
  %v393 = vpop.f32.mrb[0].mxu0
  %v394 = vadd.f32 0.0, %v393
  %v395 = vpop.f32.mrb[0].mxu0
  %v396 = vadd.f32 0.0, %v395
  %397 = vmatprep.mubr.f32.mxu0 0.0
  %398 = vmatmul.mubr.f32.gmra.mrb[0].mxu0 %v187
  %v399 = vpop.f32.mrb[0].mxu0
  %v400 = vadd.f32 0.0, %v399
  %v401 = vpop.f32.mrb[0].mxu0
  %v402 = vadd.f32 0.0, %v401
  %403 = vmatprep.mubr.f32.mxu0 0.0
  %404 = vmatmul.mubr.f32.gmra.mrb[0].mxu0 %v190
  %v405 = vpop.f32.mrb[0].mxu0
  %v406 = vadd.f32 0.0, %v405
  %v407 = vpop.f32.mrb[0].mxu0
  %v408 = vadd.f32 0.0, %v407
  %409 = vmatprep.mubr.f32.mxu0 0.0
  %410 = vmatmul.mubr.f32.gmra.mrb[0].mxu0 %v193
  %v411 = vpop.f32.mrb[0].mxu0
  %v412 = vadd.f32 0.0, %v411
  %v413 = vpop.f32.mrb[0].mxu0
  %v414 = vadd.f32 0.0, %v413
  %415 = vmatprep.mubr.f32.mxu0 0.0
  %416 = vmatmul.mubr.f32.gmra.mrb[0].mxu0 %v196
  %v417 = vpop.f32.mrb[0].mxu0
  %v418 = vadd.f32 0.0, %v417
  %v419 = vpop.f32.mrb[0].mxu0
  %v420 = vadd.f32 0.0, %v419
  %421 = vmatprep.mubr.f32.mxu0 0.0
  %422 = vmatmul.mubr.f32.gmra.mrb[0].mxu0 %v199
  %v423 = vpop.f32.mrb[0].mxu0
  %v424 = vadd.f32 0.0, %v423
  %v425 = vpop.f32.mrb[0].mxu0
  %v426 = vadd.f32 0.0, %v425
  %427 = vmatprep.mubr.f32.mxu0 0.0
  %428 = vmatmul.mubr.f32.gmra.mrb[0].mxu0 %v202
  %v429 = vpop.f32.mrb[0].mxu0
  %v430 = vadd.f32 0.0, %v429
  %v431 = vpop.f32.mrb[0].mxu0
  %v432 = vadd.f32 0.0, %v431
  %433 = vmatprep.mubr.f32.mxu0 0.0
  %434 = vmatmul.mubr.f32.gmra.mrb[0].mxu0 %v205
  %v435 = vpop.f32.mrb[0].mxu0
  %v436 = vadd.f32 0.0, %v435
  %v437 = vpop.f32.mrb[0].mxu0
  %v438 = vadd.f32 0.0, %v437
  %439 = vmatprep.mubr.f32.mxu0 0.0
  %440 = vmatmul.mubr.f32.gmra.mrb[0].mxu0 %v208
  %v441 = vpop.f32.mrb[0].mxu0
  %v442 = vadd.f32 0.0, %v441
  %v443 = vpop.f32.mrb[0].mxu0
  %v444 = vadd.f32 0.0, %v443
  %445 = vmatprep.mubr.f32.mxu0 0.0
  %446 = vmatmul.mubr.f32.gmra.mrb[0].mxu0 %v211
  %v447 = vpop.f32.mrb[0].mxu0
  %v448 = vadd.f32 0.0, %v447
  %v449 = vpop.f32.mrb[0].mxu0
  %v450 = vadd.f32 0.0, %v449
  %451 = vmatprep.mubr.f32.mxu0 0.0
  %452 = vmatmul.mubr.f32.gmra.mrb[0].mxu0 %v214
  %v453 = vpop.f32.mrb[0].mxu0
  %v454 = vadd.f32 0.0, %v453
  %v455 = vpop.f32.mrb[0].mxu0
  %v456 = vadd.f32 0.0, %v455
  %457 = vmatprep.mubr.f32.mxu0 0.0
  %458 = vmatmul.mubr.f32.gmra.mrb[0].mxu0 %v217
  %v459 = vpop.f32.mrb[0].mxu0
  %v460 = vadd.f32 0.0, %v459
  %v461 = vpop.f32.mrb[0].mxu0
  %v462 = vadd.f32 0.0, %v461
  %463 = vmatprep.mubr.f32.mxu0 0.0
  %464 = vmatmul.mubr.f32.gmra.mrb[0].mxu0 %v220
  %v465 = vpop.f32.mrb[0].mxu0
  %v466 = vadd.f32 0.0, %v465
  %v467 = vpop.f32.mrb[0].mxu0
  %v468 = vadd.f32 0.0, %v467
  %469 = vmatprep.mubr.f32.mxu0 0.0
  %470 = vmatmul.mubr.f32.gmra.mrb[0].mxu0 %v223
  %v471 = vpop.f32.mrb[0].mxu0
  %v472 = vadd.f32 0.0, %v471
  %v473 = vpop.f32.mrb[0].mxu0
  %v474 = vadd.f32 0.0, %v473
  %475 = vmatprep.mubr.f32.mxu0 0.0
  %476 = vmatmul.mubr.f32.gmra.mrb[0].mxu0 %v226
  %v477 = vpop.f32.mrb[0].mxu0
  %v478 = vadd.f32 0.0, %v477
  %v479 = vpop.f32.mrb[0].mxu0
  %v480 = vadd.f32 0.0, %v479
  %481 = vmatprep.mubr.f32.mxu0 0.0
  %482 = vmatmul.mubr.f32.gmra.mrb[0].mxu0 %v229
  %v483 = vpop.f32.mrb[0].mxu0
  %v484 = vadd.f32 0.0, %v483
  %v485 = vpop.f32.mrb[0].mxu0
  %v486 = vadd.f32 0.0, %v485
  %487 = vdwg.mxu0
  %v489 = vsel %vm134, %v53, 0
  %v492 = vsel %vm134, %v54, 0
  %v495 = vsel %vm134, %v55, 0
  %v498 = vsel %vm134, %v56, 0
  %v501 = vsel %vm134, %v57, 0
  %v504 = vsel %vm134, %v58, 0
  %v507 = vsel %vm134, %v59, 0
  %v510 = vsel %vm134, %v60, 0
  %v513 = vsel %vm134, %v61, 0
  %v516 = vsel %vm134, %v62, 0
  %v519 = vsel %vm134, %v63, 0
  %v522 = vsel %vm134, %v64, 0
  %v525 = vsel %vm134, %v65, 0
  %v528 = vsel %vm134, %v66, 0
  %v531 = vsel %vm134, %v67, 0
  %v534 = vsel %vm134, %v68, 0
  %v537 = vsel %vm134, %v69, 0
  %v540 = vsel %vm134, %v70, 0
  %v543 = vsel %vm134, %v71, 0
  %v546 = vsel %vm134, %v72, 0
  %v549 = vsel %vm134, %v73, 0
  %v552 = vsel %vm134, %v74, 0
  %v555 = vsel %vm134, %v75, 0
  %v558 = vsel %vm134, %v76, 0
  %v561 = vsel %vm134, %v77, 0
  %v564 = vsel %vm134, %v78, 0
  %v567 = vsel %vm134, %v79, 0
  %v570 = vsel %vm134, %v80, 0
  %v573 = vsel %vm134, %v81, 0
  %v576 = vsel %vm134, %v82, 0
  %v579 = vsel %vm134, %v83, 0
  %v582 = vsel %vm134, %v84, 0
  %584 = vmatprep.subr.mxu0 %v86
  %585 = vmatpush1.msra.mxu0 %v85
  %586 = vmatprep.subr.mxu0 %v88
  %587 = vmatpush1.msra.mxu0 %v87
  %588 = vmatprep.subr.mxu0 %v90
  %589 = vmatpush1.msra.mxu0 %v89
  %590 = vmatprep.subr.mxu0 %v92
  %591 = vmatpush1.msra.mxu0 %v91
  %592 = vmatprep.subr.mxu0 0.0
  %593 = vmatpush1.msra.mxu0 0.0
  %594 = vmatprep.subr.mxu0 0.0
  %595 = vmatpush1.msra.mxu0 0.0
  %596 = vmatprep.subr.mxu0 0.0
  %597 = vmatpush1.msra.mxu0 0.0
  %598 = vmatprep.subr.mxu0 0.0
  %599 = vmatpush1.msra.mxu0 0.0
  %600 = vmatprep.subr.mxu0 0.0
  %601 = vmatpush1.msra.mxu0 0.0
  %602 = vmatprep.subr.mxu0 0.0
  %603 = vmatpush1.msra.mxu0 0.0
  %604 = vmatprep.subr.mxu0 0.0
  %605 = vmatpush1.msra.mxu0 0.0
  %606 = vmatprep.subr.mxu0 0.0
  %607 = vmatpush1.msra.mxu0 0.0
  %608 = vmatprep.subr.mxu0 0.0
  %609 = vmatpush1.msra.mxu0 0.0
  %610 = vmatprep.subr.mxu0 0.0
  %611 = vmatpush1.msra.mxu0 0.0
  %612 = vmatprep.subr.mxu0 0.0
  %613 = vmatpush1.msra.mxu0 0.0
  %614 = vmatprep.subr.mxu0 0.0
  %615 = vmatpush1.msra.mxu0 0.0
  %616 = vmatprep.subr.mxu0 0.0
  %617 = vmatpush1.msra.mxu0 0.0
  %618 = vmatprep.subr.mxu0 0.0
  %619 = vmatpush1.msra.mxu0 0.0
  %620 = vmatprep.subr.mxu0 0.0
  %621 = vmatpush1.msra.mxu0 0.0
  %622 = vmatprep.subr.mxu0 0.0
  %623 = vmatpush1.msra.mxu0 0.0
  %624 = vmatprep.subr.mxu0 0.0
  %625 = vmatpush1.msra.mxu0 0.0
  %626 = vmatprep.subr.mxu0 0.0
  %627 = vmatpush1.msra.mxu0 0.0
  %628 = vmatprep.subr.mxu0 0.0
  %629 = vmatpush1.msra.mxu0 0.0
  %630 = vmatprep.subr.mxu0 0.0
  %631 = vmatpush1.msra.mxu0 0.0
  %632 = vmatprep.subr.mxu0 0.0
  %633 = vmatpush1.msra.mxu0 0.0
  %634 = vmatprep.subr.mxu0 0.0
  %635 = vmatpush1.msra.mxu0 0.0
  %636 = vmatprep.subr.mxu0 0.0
  %637 = vmatpush1.msra.mxu0 0.0
  %638 = vmatprep.subr.mxu0 0.0
  %639 = vmatpush1.msra.mxu0 0.0
  %640 = vmatprep.subr.mxu0 0.0
  %641 = vmatpush1.msra.mxu0 0.0
  %642 = vmatprep.subr.mxu0 0.0
  %643 = vmatpush1.msra.mxu0 0.0
  %644 = vmatprep.subr.mxu0 0.0
  %645 = vmatpush1.msra.mxu0 0.0
  %646 = vmatprep.subr.mxu0 0.0
  %647 = vmatpush1.msra.mxu0 0.0
  %648 = vmatprep.mubr.f32.mxu0 0.0
  %649 = vmatmul.mubr.f32.gmra.mrb[0].mxu0 %v489
  %v650 = vpop.f32.mrb[0].mxu0
  %v651 = vadd.f32 %v298, %v650
  %v652 = vpop.f32.mrb[0].mxu0
  %v653 = vadd.f32 %v300, %v652
  %654 = vmatprep.mubr.f32.mxu0 0.0
  %655 = vmatmul.mubr.f32.gmra.mrb[0].mxu0 %v492
  %v656 = vpop.f32.mrb[0].mxu0
  %v657 = vadd.f32 %v304, %v656
  %v658 = vpop.f32.mrb[0].mxu0
  %v659 = vadd.f32 %v306, %v658
  %660 = vmatprep.mubr.f32.mxu0 0.0
  %661 = vmatmul.mubr.f32.gmra.mrb[0].mxu0 %v495
  %v662 = vpop.f32.mrb[0].mxu0
  %v663 = vadd.f32 %v310, %v662
  %v664 = vpop.f32.mrb[0].mxu0
  %v665 = vadd.f32 %v312, %v664
  %666 = vmatprep.mubr.f32.mxu0 0.0
  %667 = vmatmul.mubr.f32.gmra.mrb[0].mxu0 %v498
  %v668 = vpop.f32.mrb[0].mxu0
  %v669 = vadd.f32 %v316, %v668
  %v670 = vpop.f32.mrb[0].mxu0
  %v671 = vadd.f32 %v318, %v670
  %672 = vmatprep.mubr.f32.mxu0 0.0
  %673 = vmatmul.mubr.f32.gmra.mrb[0].mxu0 %v501
  %v674 = vpop.f32.mrb[0].mxu0
  %v675 = vadd.f32 %v322, %v674
  %v676 = vpop.f32.mrb[0].mxu0
  %v677 = vadd.f32 %v324, %v676
  %678 = vmatprep.mubr.f32.mxu0 0.0
  %679 = vmatmul.mubr.f32.gmra.mrb[0].mxu0 %v504
  %v680 = vpop.f32.mrb[0].mxu0
  %v681 = vadd.f32 %v328, %v680
  %v682 = vpop.f32.mrb[0].mxu0
  %v683 = vadd.f32 %v330, %v682
  %684 = vmatprep.mubr.f32.mxu0 0.0
  %685 = vmatmul.mubr.f32.gmra.mrb[0].mxu0 %v507
  %v686 = vpop.f32.mrb[0].mxu0
  %v687 = vadd.f32 %v334, %v686
  %v688 = vpop.f32.mrb[0].mxu0
  %v689 = vadd.f32 %v336, %v688
  %690 = vmatprep.mubr.f32.mxu0 0.0
  %691 = vmatmul.mubr.f32.gmra.mrb[0].mxu0 %v510
  %v692 = vpop.f32.mrb[0].mxu0
  %v693 = vadd.f32 %v340, %v692
  %v694 = vpop.f32.mrb[0].mxu0
  %v695 = vadd.f32 %v342, %v694
  %696 = vmatprep.mubr.f32.mxu0 0.0
  %697 = vmatmul.mubr.f32.gmra.mrb[0].mxu0 %v513
  %v698 = vpop.f32.mrb[0].mxu0
  %v699 = vadd.f32 %v346, %v698
  %v700 = vpop.f32.mrb[0].mxu0
  %v701 = vadd.f32 %v348, %v700
  %702 = vmatprep.mubr.f32.mxu0 0.0
  %703 = vmatmul.mubr.f32.gmra.mrb[0].mxu0 %v516
  %v704 = vpop.f32.mrb[0].mxu0
  %v705 = vadd.f32 %v352, %v704
  %v706 = vpop.f32.mrb[0].mxu0
  %v707 = vadd.f32 %v354, %v706
  %708 = vmatprep.mubr.f32.mxu0 0.0
  %709 = vmatmul.mubr.f32.gmra.mrb[0].mxu0 %v519
  %v710 = vpop.f32.mrb[0].mxu0
  %v711 = vadd.f32 %v358, %v710
  %v712 = vpop.f32.mrb[0].mxu0
  %v713 = vadd.f32 %v360, %v712
  %714 = vmatprep.mubr.f32.mxu0 0.0
  %715 = vmatmul.mubr.f32.gmra.mrb[0].mxu0 %v522
  %v716 = vpop.f32.mrb[0].mxu0
  %v717 = vadd.f32 %v364, %v716
  %v718 = vpop.f32.mrb[0].mxu0
  %v719 = vadd.f32 %v366, %v718
  %720 = vmatprep.mubr.f32.mxu0 0.0
  %721 = vmatmul.mubr.f32.gmra.mrb[0].mxu0 %v525
  %v722 = vpop.f32.mrb[0].mxu0
  %v723 = vadd.f32 %v370, %v722
  %v724 = vpop.f32.mrb[0].mxu0
  %v725 = vadd.f32 %v372, %v724
  %726 = vmatprep.mubr.f32.mxu0 0.0
  %727 = vmatmul.mubr.f32.gmra.mrb[0].mxu0 %v528
  %v728 = vpop.f32.mrb[0].mxu0
  %v729 = vadd.f32 %v376, %v728
  %v730 = vpop.f32.mrb[0].mxu0
  %v731 = vadd.f32 %v378, %v730
  %732 = vmatprep.mubr.f32.mxu0 0.0
  %733 = vmatmul.mubr.f32.gmra.mrb[0].mxu0 %v531
  %v734 = vpop.f32.mrb[0].mxu0
  %v735 = vadd.f32 %v382, %v734
  %v736 = vpop.f32.mrb[0].mxu0
  %v737 = vadd.f32 %v384, %v736
  %738 = vmatprep.mubr.f32.mxu0 0.0
  %739 = vmatmul.mubr.f32.gmra.mrb[0].mxu0 %v534
  %v740 = vpop.f32.mrb[0].mxu0
  %v741 = vadd.f32 %v388, %v740
  %v742 = vpop.f32.mrb[0].mxu0
  %v743 = vadd.f32 %v390, %v742
  %744 = vmatprep.mubr.f32.mxu0 0.0
  %745 = vmatmul.mubr.f32.gmra.mrb[0].mxu0 %v537
  %v746 = vpop.f32.mrb[0].mxu0
  %v747 = vadd.f32 %v394, %v746
  %v748 = vpop.f32.mrb[0].mxu0
  %v749 = vadd.f32 %v396, %v748
  %750 = vmatprep.mubr.f32.mxu0 0.0
  %751 = vmatmul.mubr.f32.gmra.mrb[0].mxu0 %v540
  %v752 = vpop.f32.mrb[0].mxu0
  %v753 = vadd.f32 %v400, %v752
  %v754 = vpop.f32.mrb[0].mxu0
  %v755 = vadd.f32 %v402, %v754
  %756 = vmatprep.mubr.f32.mxu0 0.0
  %757 = vmatmul.mubr.f32.gmra.mrb[0].mxu0 %v543
  %v758 = vpop.f32.mrb[0].mxu0
  %v759 = vadd.f32 %v406, %v758
  %v760 = vpop.f32.mrb[0].mxu0
  %v761 = vadd.f32 %v408, %v760
  %762 = vmatprep.mubr.f32.mxu0 0.0
  %763 = vmatmul.mubr.f32.gmra.mrb[0].mxu0 %v546
  %v764 = vpop.f32.mrb[0].mxu0
  %v765 = vadd.f32 %v412, %v764
  %v766 = vpop.f32.mrb[0].mxu0
  %v767 = vadd.f32 %v414, %v766
  %768 = vmatprep.mubr.f32.mxu0 0.0
  %769 = vmatmul.mubr.f32.gmra.mrb[0].mxu0 %v549
  %v770 = vpop.f32.mrb[0].mxu0
  %v771 = vadd.f32 %v418, %v770
  %v772 = vpop.f32.mrb[0].mxu0
  %v773 = vadd.f32 %v420, %v772
  %774 = vmatprep.mubr.f32.mxu0 0.0
  %775 = vmatmul.mubr.f32.gmra.mrb[0].mxu0 %v552
  %v776 = vpop.f32.mrb[0].mxu0
  %v777 = vadd.f32 %v424, %v776
  %v778 = vpop.f32.mrb[0].mxu0
  %v779 = vadd.f32 %v426, %v778
  %780 = vmatprep.mubr.f32.mxu0 0.0
  %781 = vmatmul.mubr.f32.gmra.mrb[0].mxu0 %v555
  %v782 = vpop.f32.mrb[0].mxu0
  %v783 = vadd.f32 %v430, %v782
  %v784 = vpop.f32.mrb[0].mxu0
  %v785 = vadd.f32 %v432, %v784
  %786 = vmatprep.mubr.f32.mxu0 0.0
  %787 = vmatmul.mubr.f32.gmra.mrb[0].mxu0 %v558
  %v788 = vpop.f32.mrb[0].mxu0
  %v789 = vadd.f32 %v436, %v788
  %v790 = vpop.f32.mrb[0].mxu0
  %v791 = vadd.f32 %v438, %v790
  %792 = vmatprep.mubr.f32.mxu0 0.0
  %793 = vmatmul.mubr.f32.gmra.mrb[0].mxu0 %v561
  %v794 = vpop.f32.mrb[0].mxu0
  %v795 = vadd.f32 %v442, %v794
  %v796 = vpop.f32.mrb[0].mxu0
  %v797 = vadd.f32 %v444, %v796
  %798 = vmatprep.mubr.f32.mxu0 0.0
  %799 = vmatmul.mubr.f32.gmra.mrb[0].mxu0 %v564
  %v800 = vpop.f32.mrb[0].mxu0
  %v801 = vadd.f32 %v448, %v800
  %v802 = vpop.f32.mrb[0].mxu0
  %v803 = vadd.f32 %v450, %v802
  %804 = vmatprep.mubr.f32.mxu0 0.0
  %805 = vmatmul.mubr.f32.gmra.mrb[0].mxu0 %v567
  %v806 = vpop.f32.mrb[0].mxu0
  %v807 = vadd.f32 %v454, %v806
  %v808 = vpop.f32.mrb[0].mxu0
  %v809 = vadd.f32 %v456, %v808
  %810 = vmatprep.mubr.f32.mxu0 0.0
  %811 = vmatmul.mubr.f32.gmra.mrb[0].mxu0 %v570
  %v812 = vpop.f32.mrb[0].mxu0
  %v813 = vadd.f32 %v460, %v812
  %v814 = vpop.f32.mrb[0].mxu0
  %v815 = vadd.f32 %v462, %v814
  %816 = vmatprep.mubr.f32.mxu0 0.0
  %817 = vmatmul.mubr.f32.gmra.mrb[0].mxu0 %v573
  %v818 = vpop.f32.mrb[0].mxu0
  %v819 = vadd.f32 %v466, %v818
  %v820 = vpop.f32.mrb[0].mxu0
  %v821 = vadd.f32 %v468, %v820
  %822 = vmatprep.mubr.f32.mxu0 0.0
  %823 = vmatmul.mubr.f32.gmra.mrb[0].mxu0 %v576
  %v824 = vpop.f32.mrb[0].mxu0
  %v825 = vadd.f32 %v472, %v824
  %v826 = vpop.f32.mrb[0].mxu0
  %v827 = vadd.f32 %v474, %v826
  %828 = vmatprep.mubr.f32.mxu0 0.0
  %829 = vmatmul.mubr.f32.gmra.mrb[0].mxu0 %v579
  %v830 = vpop.f32.mrb[0].mxu0
  %v831 = vadd.f32 %v478, %v830
  %v832 = vpop.f32.mrb[0].mxu0
  %v833 = vadd.f32 %v480, %v832
  %834 = vmatprep.mubr.f32.mxu0 0.0
  %835 = vmatmul.mubr.f32.gmra.mrb[0].mxu0 %v582
  %v836 = vpop.f32.mrb[0].mxu0
  %v837 = vadd.f32 %v484, %v836
  %v838 = vpop.f32.mrb[0].mxu0
  %v839 = vadd.f32 %v486, %v838
  %840 = vdwg.mxu0
  %v841 = vld [vmem:[%s0 + $0x2] sm:$0xff]
  %v842 = vld [vmem:[%s0 + $0xa] sm:$0xff]
  %v843 = vld [vmem:[%s0 + $0x12] sm:$0xff]
  %v844 = vld [vmem:[%s0 + $0x1a] sm:$0xff]
  %v845 = vld [vmem:[%s0 + $0x22] sm:$0xff]
  %v846 = vld [vmem:[%s0 + $0x2a] sm:$0xff]
  %v847 = vld [vmem:[%s0 + $0x32] sm:$0xff]
  %v848 = vld [vmem:[%s0 + $0x3a] sm:$0xff]
  %v849 = vld [vmem:[%s0 + $0x42] sm:$0xff]
  %v850 = vld [vmem:[%s0 + $0x4a] sm:$0xff]
  %v851 = vld [vmem:[%s0 + $0x52] sm:$0xff]
  %v852 = vld [vmem:[%s0 + $0x5a] sm:$0xff]
  %v853 = vld [vmem:[%s0 + $0x62] sm:$0xff]
  %v854 = vld [vmem:[%s0 + $0x6a] sm:$0xff]
  %v855 = vld [vmem:[%s0 + $0x72] sm:$0xff]
  %v856 = vld [vmem:[%s0 + $0x7a] sm:$0xff]
  %v857 = vld [vmem:[%s0 + $0x82] sm:$0xff]
  %v858 = vld [vmem:[%s0 + $0x8a] sm:$0xff]
  %v859 = vld [vmem:[%s0 + $0x92] sm:$0xff]
  %v860 = vld [vmem:[%s0 + $0x9a] sm:$0xff]
  %v861 = vld [vmem:[%s0 + $0xa2] sm:$0xff]
  %v862 = vld [vmem:[%s0 + $0xaa] sm:$0xff]
  %v863 = vld [vmem:[%s0 + $0xb2] sm:$0xff]
  %v864 = vld [vmem:[%s0 + $0xba] sm:$0xff]
  %v865 = vld [vmem:[%s0 + $0xc2] sm:$0xff]
  %v866 = vld [vmem:[%s0 + $0xca] sm:$0xff]
  %v867 = vld [vmem:[%s0 + $0xd2] sm:$0xff]
  %v868 = vld [vmem:[%s0 + $0xda] sm:$0xff]
  %v869 = vld [vmem:[%s0 + $0xe2] sm:$0xff]
  %v870 = vld [vmem:[%s0 + $0xea] sm:$0xff]
  %v871 = vld [vmem:[%s0 + $0xf2] sm:$0xff]
  %v872 = vld [vmem:[%s0 + $0xfa] sm:$0xf]
  %s873 = scalar_lea.vmem %s1, 128
  %v874 = vld [vmem:[%s873] sm:$0xff]
  %v875 = vld [vmem:[%s873 + $0x8] sm:$0xff]
  %v876 = vld [vmem:[%s873 + $0x10] sm:$0xff]
  %v877 = vld [vmem:[%s873 + $0x18] sm:$0xff]
  %v878 = vld [vmem:[%s873 + $0x20] sm:$0xff]
  %v879 = vld [vmem:[%s873 + $0x28] sm:$0xff]
  %v880 = vld [vmem:[%s873 + $0x30] sm:$0xff]
  %v881 = vld [vmem:[%s873 + $0x38] sm:$0xff]
  %v883 = vsel %vm134, %v841, 0
  %v886 = vsel %vm134, %v842, 0
  %v889 = vsel %vm134, %v843, 0
  %v892 = vsel %vm134, %v844, 0
  %v895 = vsel %vm134, %v845, 0
  %v898 = vsel %vm134, %v846, 0
  %v901 = vsel %vm134, %v847, 0
  %v904 = vsel %vm134, %v848, 0
  %v907 = vsel %vm134, %v849, 0
  %v910 = vsel %vm134, %v850, 0
  %v913 = vsel %vm134, %v851, 0
  %v916 = vsel %vm134, %v852, 0
  %v919 = vsel %vm134, %v853, 0
  %v922 = vsel %vm134, %v854, 0
  %v925 = vsel %vm134, %v855, 0
  %v928 = vsel %vm134, %v856, 0
  %v931 = vsel %vm134, %v857, 0
  %v934 = vsel %vm134, %v858, 0
  %v937 = vsel %vm134, %v859, 0
  %v940 = vsel %vm134, %v860, 0
  %v943 = vsel %vm134, %v861, 0
  %v946 = vsel %vm134, %v862, 0
  %v949 = vsel %vm134, %v863, 0
  %v952 = vsel %vm134, %v864, 0
  %v955 = vsel %vm134, %v865, 0
  %v958 = vsel %vm134, %v866, 0
  %v961 = vsel %vm134, %v867, 0
  %v964 = vsel %vm134, %v868, 0
  %v967 = vsel %vm134, %v869, 0
  %v970 = vsel %vm134, %v870, 0
  %v973 = vsel %vm134, %v871, 0
  %v976 = vsel %vm134, %v872, 0
  %978 = vmatprep.subr.mxu0 %v875
  %979 = vmatpush1.msra.mxu0 %v874
  %980 = vmatprep.subr.mxu0 %v877
  %981 = vmatpush1.msra.mxu0 %v876
  %982 = vmatprep.subr.mxu0 %v879
  %983 = vmatpush1.msra.mxu0 %v878
  %984 = vmatprep.subr.mxu0 %v881
  %985 = vmatpush1.msra.mxu0 %v880
  %986 = vmatprep.subr.mxu0 0.0
  %987 = vmatpush1.msra.mxu0 0.0
  %988 = vmatprep.subr.mxu0 0.0
  %989 = vmatpush1.msra.mxu0 0.0
  %990 = vmatprep.subr.mxu0 0.0
  %991 = vmatpush1.msra.mxu0 0.0
  %992 = vmatprep.subr.mxu0 0.0
  %993 = vmatpush1.msra.mxu0 0.0
  %994 = vmatprep.subr.mxu0 0.0
  %995 = vmatpush1.msra.mxu0 0.0
  %996 = vmatprep.subr.mxu0 0.0
  %997 = vmatpush1.msra.mxu0 0.0
  %998 = vmatprep.subr.mxu0 0.0
  %999 = vmatpush1.msra.mxu0 0.0
  %1000 = vmatprep.subr.mxu0 0.0
  %1001 = vmatpush1.msra.mxu0 0.0
  %1002 = vmatprep.subr.mxu0 0.0
  %1003 = vmatpush1.msra.mxu0 0.0
  %1004 = vmatprep.subr.mxu0 0.0
  %1005 = vmatpush1.msra.mxu0 0.0
  %1006 = vmatprep.subr.mxu0 0.0
  %1007 = vmatpush1.msra.mxu0 0.0
  %1008 = vmatprep.subr.mxu0 0.0
  %1009 = vmatpush1.msra.mxu0 0.0
  %1010 = vmatprep.subr.mxu0 0.0
  %1011 = vmatpush1.msra.mxu0 0.0
  %1012 = vmatprep.subr.mxu0 0.0
  %1013 = vmatpush1.msra.mxu0 0.0
  %1014 = vmatprep.subr.mxu0 0.0
  %1015 = vmatpush1.msra.mxu0 0.0
  %1016 = vmatprep.subr.mxu0 0.0
  %1017 = vmatpush1.msra.mxu0 0.0
  %1018 = vmatprep.subr.mxu0 0.0
  %1019 = vmatpush1.msra.mxu0 0.0
  %1020 = vmatprep.subr.mxu0 0.0
  %1021 = vmatpush1.msra.mxu0 0.0
  %1022 = vmatprep.subr.mxu0 0.0
  %1023 = vmatpush1.msra.mxu0 0.0
  %1024 = vmatprep.subr.mxu0 0.0
  %1025 = vmatpush1.msra.mxu0 0.0
  %1026 = vmatprep.subr.mxu0 0.0
  %1027 = vmatpush1.msra.mxu0 0.0
  %1028 = vmatprep.subr.mxu0 0.0
  %1029 = vmatpush1.msra.mxu0 0.0
  %1030 = vmatprep.subr.mxu0 0.0
  %1031 = vmatpush1.msra.mxu0 0.0
  %1032 = vmatprep.subr.mxu0 0.0
  %1033 = vmatpush1.msra.mxu0 0.0
  %1034 = vmatprep.subr.mxu0 0.0
  %1035 = vmatpush1.msra.mxu0 0.0
  %1036 = vmatprep.subr.mxu0 0.0
  %1037 = vmatpush1.msra.mxu0 0.0
  %1038 = vmatprep.subr.mxu0 0.0
  %1039 = vmatpush1.msra.mxu0 0.0
  %1040 = vmatprep.subr.mxu0 0.0
  %1041 = vmatpush1.msra.mxu0 0.0
  %1042 = vmatprep.mubr.f32.mxu0 0.0
  %1043 = vmatmul.mubr.f32.gmra.mrb[0].mxu0 %v883
  %v1044 = vpop.f32.mrb[0].mxu0
  %v1045 = vadd.f32 0.0, %v1044
  %v1046 = vpop.f32.mrb[0].mxu0
  %v1047 = vadd.f32 0.0, %v1046
  %1048 = vmatprep.mubr.f32.mxu0 0.0
  %1049 = vmatmul.mubr.f32.gmra.mrb[0].mxu0 %v886
  %v1050 = vpop.f32.mrb[0].mxu0
  %v1051 = vadd.f32 0.0, %v1050
  %v1052 = vpop.f32.mrb[0].mxu0
  %v1053 = vadd.f32 0.0, %v1052
  %1054 = vmatprep.mubr.f32.mxu0 0.0
  %1055 = vmatmul.mubr.f32.gmra.mrb[0].mxu0 %v889
  %v1056 = vpop.f32.mrb[0].mxu0
  %v1057 = vadd.f32 0.0, %v1056
  %v1058 = vpop.f32.mrb[0].mxu0
  %v1059 = vadd.f32 0.0, %v1058
  %1060 = vmatprep.mubr.f32.mxu0 0.0
  %1061 = vmatmul.mubr.f32.gmra.mrb[0].mxu0 %v892
  %v1062 = vpop.f32.mrb[0].mxu0
  %v1063 = vadd.f32 0.0, %v1062
  %v1064 = vpop.f32.mrb[0].mxu0
  %v1065 = vadd.f32 0.0, %v1064
  %1066 = vmatprep.mubr.f32.mxu0 0.0
  %1067 = vmatmul.mubr.f32.gmra.mrb[0].mxu0 %v895
  %v1068 = vpop.f32.mrb[0].mxu0
  %v1069 = vadd.f32 0.0, %v1068
  %v1070 = vpop.f32.mrb[0].mxu0
  %v1071 = vadd.f32 0.0, %v1070
  %1072 = vmatprep.mubr.f32.mxu0 0.0
  %1073 = vmatmul.mubr.f32.gmra.mrb[0].mxu0 %v898
  %v1074 = vpop.f32.mrb[0].mxu0
  %v1075 = vadd.f32 0.0, %v1074
  %v1076 = vpop.f32.mrb[0].mxu0
  %v1077 = vadd.f32 0.0, %v1076
  %1078 = vmatprep.mubr.f32.mxu0 0.0
  %1079 = vmatmul.mubr.f32.gmra.mrb[0].mxu0 %v901
  %v1080 = vpop.f32.mrb[0].mxu0
  %v1081 = vadd.f32 0.0, %v1080
  %v1082 = vpop.f32.mrb[0].mxu0
  %v1083 = vadd.f32 0.0, %v1082
  %1084 = vmatprep.mubr.f32.mxu0 0.0
  %1085 = vmatmul.mubr.f32.gmra.mrb[0].mxu0 %v904
  %v1086 = vpop.f32.mrb[0].mxu0
  %v1087 = vadd.f32 0.0, %v1086
  %v1088 = vpop.f32.mrb[0].mxu0
  %v1089 = vadd.f32 0.0, %v1088
  %1090 = vmatprep.mubr.f32.mxu0 0.0
  %1091 = vmatmul.mubr.f32.gmra.mrb[0].mxu0 %v907
  %v1092 = vpop.f32.mrb[0].mxu0
  %v1093 = vadd.f32 0.0, %v1092
  %v1094 = vpop.f32.mrb[0].mxu0
  %v1095 = vadd.f32 0.0, %v1094
  %1096 = vmatprep.mubr.f32.mxu0 0.0
  %1097 = vmatmul.mubr.f32.gmra.mrb[0].mxu0 %v910
  %v1098 = vpop.f32.mrb[0].mxu0
  %v1099 = vadd.f32 0.0, %v1098
  %v1100 = vpop.f32.mrb[0].mxu0
  %v1101 = vadd.f32 0.0, %v1100
  %1102 = vmatprep.mubr.f32.mxu0 0.0
  %1103 = vmatmul.mubr.f32.gmra.mrb[0].mxu0 %v913
  %v1104 = vpop.f32.mrb[0].mxu0
  %v1105 = vadd.f32 0.0, %v1104
  %v1106 = vpop.f32.mrb[0].mxu0
  %v1107 = vadd.f32 0.0, %v1106
  %1108 = vmatprep.mubr.f32.mxu0 0.0
  %1109 = vmatmul.mubr.f32.gmra.mrb[0].mxu0 %v916
  %v1110 = vpop.f32.mrb[0].mxu0
  %v1111 = vadd.f32 0.0, %v1110
  %v1112 = vpop.f32.mrb[0].mxu0
  %v1113 = vadd.f32 0.0, %v1112
  %1114 = vmatprep.mubr.f32.mxu0 0.0
  %1115 = vmatmul.mubr.f32.gmra.mrb[0].mxu0 %v919
  %v1116 = vpop.f32.mrb[0].mxu0
  %v1117 = vadd.f32 0.0, %v1116
  %v1118 = vpop.f32.mrb[0].mxu0
  %v1119 = vadd.f32 0.0, %v1118
  %1120 = vmatprep.mubr.f32.mxu0 0.0
  %1121 = vmatmul.mubr.f32.gmra.mrb[0].mxu0 %v922
  %v1122 = vpop.f32.mrb[0].mxu0
  %v1123 = vadd.f32 0.0, %v1122
  %v1124 = vpop.f32.mrb[0].mxu0
  %v1125 = vadd.f32 0.0, %v1124
  %1126 = vmatprep.mubr.f32.mxu0 0.0
  %1127 = vmatmul.mubr.f32.gmra.mrb[0].mxu0 %v925
  %v1128 = vpop.f32.mrb[0].mxu0
  %v1129 = vadd.f32 0.0, %v1128
  %v1130 = vpop.f32.mrb[0].mxu0
  %v1131 = vadd.f32 0.0, %v1130
  %1132 = vmatprep.mubr.f32.mxu0 0.0
  %1133 = vmatmul.mubr.f32.gmra.mrb[0].mxu0 %v928
  %v1134 = vpop.f32.mrb[0].mxu0
  %v1135 = vadd.f32 0.0, %v1134
  %v1136 = vpop.f32.mrb[0].mxu0
  %v1137 = vadd.f32 0.0, %v1136
  %1138 = vmatprep.mubr.f32.mxu0 0.0
  %1139 = vmatmul.mubr.f32.gmra.mrb[0].mxu0 %v931
  %v1140 = vpop.f32.mrb[0].mxu0
  %v1141 = vadd.f32 0.0, %v1140
  %v1142 = vpop.f32.mrb[0].mxu0
  %v1143 = vadd.f32 0.0, %v1142
  %1144 = vmatprep.mubr.f32.mxu0 0.0
  %1145 = vmatmul.mubr.f32.gmra.mrb[0].mxu0 %v934
  %v1146 = vpop.f32.mrb[0].mxu0
  %v1147 = vadd.f32 0.0, %v1146
  %v1148 = vpop.f32.mrb[0].mxu0
  %v1149 = vadd.f32 0.0, %v1148
  %1150 = vmatprep.mubr.f32.mxu0 0.0
  %1151 = vmatmul.mubr.f32.gmra.mrb[0].mxu0 %v937
  %v1152 = vpop.f32.mrb[0].mxu0
  %v1153 = vadd.f32 0.0, %v1152
  %v1154 = vpop.f32.mrb[0].mxu0
  %v1155 = vadd.f32 0.0, %v1154
  %1156 = vmatprep.mubr.f32.mxu0 0.0
  %1157 = vmatmul.mubr.f32.gmra.mrb[0].mxu0 %v940
  %v1158 = vpop.f32.mrb[0].mxu0
  %v1159 = vadd.f32 0.0, %v1158
  %v1160 = vpop.f32.mrb[0].mxu0
  %v1161 = vadd.f32 0.0, %v1160
  %1162 = vmatprep.mubr.f32.mxu0 0.0
  %1163 = vmatmul.mubr.f32.gmra.mrb[0].mxu0 %v943
  %v1164 = vpop.f32.mrb[0].mxu0
  %v1165 = vadd.f32 0.0, %v1164
  %v1166 = vpop.f32.mrb[0].mxu0
  %v1167 = vadd.f32 0.0, %v1166
  %1168 = vmatprep.mubr.f32.mxu0 0.0
  %1169 = vmatmul.mubr.f32.gmra.mrb[0].mxu0 %v946
  %v1170 = vpop.f32.mrb[0].mxu0
  %v1171 = vadd.f32 0.0, %v1170
  %v1172 = vpop.f32.mrb[0].mxu0
  %v1173 = vadd.f32 0.0, %v1172
  %1174 = vmatprep.mubr.f32.mxu0 0.0
  %1175 = vmatmul.mubr.f32.gmra.mrb[0].mxu0 %v949
  %v1176 = vpop.f32.mrb[0].mxu0
  %v1177 = vadd.f32 0.0, %v1176
  %v1178 = vpop.f32.mrb[0].mxu0
  %v1179 = vadd.f32 0.0, %v1178
  %1180 = vmatprep.mubr.f32.mxu0 0.0
  %1181 = vmatmul.mubr.f32.gmra.mrb[0].mxu0 %v952
  %v1182 = vpop.f32.mrb[0].mxu0
  %v1183 = vadd.f32 0.0, %v1182
  %v1184 = vpop.f32.mrb[0].mxu0
  %v1185 = vadd.f32 0.0, %v1184
  %1186 = vmatprep.mubr.f32.mxu0 0.0
  %1187 = vmatmul.mubr.f32.gmra.mrb[0].mxu0 %v955
  %v1188 = vpop.f32.mrb[0].mxu0
  %v1189 = vadd.f32 0.0, %v1188
  %v1190 = vpop.f32.mrb[0].mxu0
  %v1191 = vadd.f32 0.0, %v1190
  %1192 = vmatprep.mubr.f32.mxu0 0.0
  %1193 = vmatmul.mubr.f32.gmra.mrb[0].mxu0 %v958
  %v1194 = vpop.f32.mrb[0].mxu0
  %v1195 = vadd.f32 0.0, %v1194
  %v1196 = vpop.f32.mrb[0].mxu0
  %v1197 = vadd.f32 0.0, %v1196
  %1198 = vmatprep.mubr.f32.mxu0 0.0
  %1199 = vmatmul.mubr.f32.gmra.mrb[0].mxu0 %v961
  %v1200 = vpop.f32.mrb[0].mxu0
  %v1201 = vadd.f32 0.0, %v1200
  %v1202 = vpop.f32.mrb[0].mxu0
  %v1203 = vadd.f32 0.0, %v1202
  %1204 = vmatprep.mubr.f32.mxu0 0.0
  %1205 = vmatmul.mubr.f32.gmra.mrb[0].mxu0 %v964
  %v1206 = vpop.f32.mrb[0].mxu0
  %v1207 = vadd.f32 0.0, %v1206
  %v1208 = vpop.f32.mrb[0].mxu0
  %v1209 = vadd.f32 0.0, %v1208
  %1210 = vmatprep.mubr.f32.mxu0 0.0
  %1211 = vmatmul.mubr.f32.gmra.mrb[0].mxu0 %v967
  %v1212 = vpop.f32.mrb[0].mxu0
  %v1213 = vadd.f32 0.0, %v1212
  %v1214 = vpop.f32.mrb[0].mxu0
  %v1215 = vadd.f32 0.0, %v1214
  %1216 = vmatprep.mubr.f32.mxu0 0.0
  %1217 = vmatmul.mubr.f32.gmra.mrb[0].mxu0 %v970
  %v1218 = vpop.f32.mrb[0].mxu0
  %v1219 = vadd.f32 0.0, %v1218
  %v1220 = vpop.f32.mrb[0].mxu0
  %v1221 = vadd.f32 0.0, %v1220
  %1222 = vmatprep.mubr.f32.mxu0 0.0
  %1223 = vmatmul.mubr.f32.gmra.mrb[0].mxu0 %v973
  %v1224 = vpop.f32.mrb[0].mxu0
  %v1225 = vadd.f32 0.0, %v1224
  %v1226 = vpop.f32.mrb[0].mxu0
  %v1227 = vadd.f32 0.0, %v1226
  %1228 = vmatprep.mubr.f32.mxu0 0.0
  %1229 = vmatmul.mubr.f32.gmra.mrb[0].mxu0 %v976
  %v1230 = vpop.f32.mrb[0].mxu0
  %v1231 = vadd.f32 0.0, %v1230
  %v1232 = vpop.f32.mrb[0].mxu0
  %v1233 = vadd.f32 0.0, %v1232
  %1234 = vdwg.mxu0
  %v1235 = vadd.f32 %v651, %v1045
  %v1236 = vadd.f32 %v653, %v1047
  %v1237 = vadd.f32 %v657, %v1051
  %v1238 = vadd.f32 %v659, %v1053
  %v1239 = vadd.f32 %v663, %v1057
  %v1240 = vadd.f32 %v665, %v1059
  %v1241 = vadd.f32 %v669, %v1063
  %v1242 = vadd.f32 %v671, %v1065
  %v1243 = vadd.f32 %v675, %v1069
  %v1244 = vadd.f32 %v677, %v1071
  %v1245 = vadd.f32 %v681, %v1075
  %v1246 = vadd.f32 %v683, %v1077
  %v1247 = vadd.f32 %v687, %v1081
  %v1248 = vadd.f32 %v689, %v1083
  %v1249 = vadd.f32 %v693, %v1087
  %v1250 = vadd.f32 %v695, %v1089
  %v1251 = vadd.f32 %v699, %v1093
  %v1252 = vadd.f32 %v701, %v1095
  %v1253 = vadd.f32 %v705, %v1099
  %v1254 = vadd.f32 %v707, %v1101
  %v1255 = vadd.f32 %v711, %v1105
  %v1256 = vadd.f32 %v713, %v1107
  %v1257 = vadd.f32 %v717, %v1111
  %v1258 = vadd.f32 %v719, %v1113
  %v1259 = vadd.f32 %v723, %v1117
  %v1260 = vadd.f32 %v725, %v1119
  %v1261 = vadd.f32 %v729, %v1123
  %v1262 = vadd.f32 %v731, %v1125
  %v1263 = vadd.f32 %v735, %v1129
  %v1264 = vadd.f32 %v737, %v1131
  %v1265 = vadd.f32 %v741, %v1135
  %v1266 = vadd.f32 %v743, %v1137
  %v1267 = vadd.f32 %v747, %v1141
  %v1268 = vadd.f32 %v749, %v1143
  %v1269 = vadd.f32 %v753, %v1147
  %v1270 = vadd.f32 %v755, %v1149
  %v1271 = vadd.f32 %v759, %v1153
  %v1272 = vadd.f32 %v761, %v1155
  %v1273 = vadd.f32 %v765, %v1159
  %v1274 = vadd.f32 %v767, %v1161
  %v1275 = vadd.f32 %v771, %v1165
  %v1276 = vadd.f32 %v773, %v1167
  %v1277 = vadd.f32 %v777, %v1171
  %v1278 = vadd.f32 %v779, %v1173
  %v1279 = vadd.f32 %v783, %v1177
  %v1280 = vadd.f32 %v785, %v1179
  %v1281 = vadd.f32 %v789, %v1183
  %v1282 = vadd.f32 %v791, %v1185
  %v1283 = vadd.f32 %v795, %v1189
  %v1284 = vadd.f32 %v797, %v1191
  %v1285 = vadd.f32 %v801, %v1195
  %v1286 = vadd.f32 %v803, %v1197
  %v1287 = vadd.f32 %v807, %v1201
  %v1288 = vadd.f32 %v809, %v1203
  %v1289 = vadd.f32 %v813, %v1207
  %v1290 = vadd.f32 %v815, %v1209
  %v1291 = vadd.f32 %v819, %v1213
  %v1292 = vadd.f32 %v821, %v1215
  %v1293 = vadd.f32 %v825, %v1219
  %v1294 = vadd.f32 %v827, %v1221
  %v1295 = vadd.f32 %v831, %v1225
  %v1296 = vadd.f32 %v833, %v1227
  %v1297 = vadd.f32 %v837, %v1231
  %v1298 = vadd.f32 %v839, %v1233
  %v1299 = vld [vmem:[%s0 + $0x3] sm:$0xff]
  %v1300 = vld [vmem:[%s0 + $0xb] sm:$0xff]
  %v1301 = vld [vmem:[%s0 + $0x13] sm:$0xff]
  %v1302 = vld [vmem:[%s0 + $0x1b] sm:$0xff]
  %v1303 = vld [vmem:[%s0 + $0x23] sm:$0xff]
  %v1304 = vld [vmem:[%s0 + $0x2b] sm:$0xff]
  %v1305 = vld [vmem:[%s0 + $0x33] sm:$0xff]
  %v1306 = vld [vmem:[%s0 + $0x3b] sm:$0xff]
  %v1307 = vld [vmem:[%s0 + $0x43] sm:$0xff]
  %v1308 = vld [vmem:[%s0 + $0x4b] sm:$0xff]
  %v1309 = vld [vmem:[%s0 + $0x53] sm:$0xff]
  %v1310 = vld [vmem:[%s0 + $0x5b] sm:$0xff]
  %v1311 = vld [vmem:[%s0 + $0x63] sm:$0xff]
  %v1312 = vld [vmem:[%s0 + $0x6b] sm:$0xff]
  %v1313 = vld [vmem:[%s0 + $0x73] sm:$0xff]
  %v1314 = vld [vmem:[%s0 + $0x7b] sm:$0xff]
  %v1315 = vld [vmem:[%s0 + $0x83] sm:$0xff]
  %v1316 = vld [vmem:[%s0 + $0x8b] sm:$0xff]
  %v1317 = vld [vmem:[%s0 + $0x93] sm:$0xff]
  %v1318 = vld [vmem:[%s0 + $0x9b] sm:$0xff]
  %v1319 = vld [vmem:[%s0 + $0xa3] sm:$0xff]
  %v1320 = vld [vmem:[%s0 + $0xab] sm:$0xff]
  %v1321 = vld [vmem:[%s0 + $0xb3] sm:$0xff]
  %v1322 = vld [vmem:[%s0 + $0xbb] sm:$0xff]
  %v1323 = vld [vmem:[%s0 + $0xc3] sm:$0xff]
  %v1324 = vld [vmem:[%s0 + $0xcb] sm:$0xff]
  %v1325 = vld [vmem:[%s0 + $0xd3] sm:$0xff]
  %v1326 = vld [vmem:[%s0 + $0xdb] sm:$0xff]
  %v1327 = vld [vmem:[%s0 + $0xe3] sm:$0xff]
  %v1328 = vld [vmem:[%s0 + $0xeb] sm:$0xff]
  %v1329 = vld [vmem:[%s0 + $0xf3] sm:$0xff]
  %v1330 = vld [vmem:[%s0 + $0xfb] sm:$0xf]
  %s1331 = scalar_lea.vmem %s1, 192
  %v1332 = vld [vmem:[%s1331] sm:$0xff]
  %v1333 = vld [vmem:[%s1331 + $0x8] sm:$0xff]
  %v1334 = vld [vmem:[%s1331 + $0x10] sm:$0xff]
  %v1335 = vld [vmem:[%s1331 + $0x18] sm:$0xff]
  %v1336 = vld [vmem:[%s1331 + $0x20] sm:$0xff]
  %v1337 = vld [vmem:[%s1331 + $0x28] sm:$0xff]
  %v1338 = vld [vmem:[%s1331 + $0x30] sm:$0xff]
  %v1339 = vld [vmem:[%s1331 + $0x38] sm:$0xff]
  %v1341 = vsel %vm134, %v1299, 0
  %v1344 = vsel %vm134, %v1300, 0
  %v1347 = vsel %vm134, %v1301, 0
  %v1350 = vsel %vm134, %v1302, 0
  %v1353 = vsel %vm134, %v1303, 0
  %v1356 = vsel %vm134, %v1304, 0
  %v1359 = vsel %vm134, %v1305, 0
  %v1362 = vsel %vm134, %v1306, 0
  %v1365 = vsel %vm134, %v1307, 0
  %v1368 = vsel %vm134, %v1308, 0
  %v1371 = vsel %vm134, %v1309, 0
  %v1374 = vsel %vm134, %v1310, 0
  %v1377 = vsel %vm134, %v1311, 0
  %v1380 = vsel %vm134, %v1312, 0
  %v1383 = vsel %vm134, %v1313, 0
  %v1386 = vsel %vm134, %v1314, 0
  %v1389 = vsel %vm134, %v1315, 0
  %v1392 = vsel %vm134, %v1316, 0
  %v1395 = vsel %vm134, %v1317, 0
  %v1398 = vsel %vm134, %v1318, 0
  %v1401 = vsel %vm134, %v1319, 0
  %v1404 = vsel %vm134, %v1320, 0
  %v1407 = vsel %vm134, %v1321, 0
  %v1410 = vsel %vm134, %v1322, 0
  %v1413 = vsel %vm134, %v1323, 0
  %v1416 = vsel %vm134, %v1324, 0
  %v1419 = vsel %vm134, %v1325, 0
  %v1422 = vsel %vm134, %v1326, 0
  %v1425 = vsel %vm134, %v1327, 0
  %v1428 = vsel %vm134, %v1328, 0
  %v1431 = vsel %vm134, %v1329, 0
  %v1434 = vsel %vm134, %v1330, 0
  %1436 = vmatprep.subr.mxu0 %v1333
  %1437 = vmatpush1.msra.mxu0 %v1332
  %1438 = vmatprep.subr.mxu0 %v1335
  %1439 = vmatpush1.msra.mxu0 %v1334
  %1440 = vmatprep.subr.mxu0 %v1337
  %1441 = vmatpush1.msra.mxu0 %v1336
  %1442 = vmatprep.subr.mxu0 %v1339
  %1443 = vmatpush1.msra.mxu0 %v1338
  %1444 = vmatprep.subr.mxu0 0.0
  %1445 = vmatpush1.msra.mxu0 0.0
  %1446 = vmatprep.subr.mxu0 0.0
  %1447 = vmatpush1.msra.mxu0 0.0
  %1448 = vmatprep.subr.mxu0 0.0
  %1449 = vmatpush1.msra.mxu0 0.0
  %1450 = vmatprep.subr.mxu0 0.0
  %1451 = vmatpush1.msra.mxu0 0.0
  %1452 = vmatprep.subr.mxu0 0.0
  %1453 = vmatpush1.msra.mxu0 0.0
  %1454 = vmatprep.subr.mxu0 0.0
  %1455 = vmatpush1.msra.mxu0 0.0
  %1456 = vmatprep.subr.mxu0 0.0
  %1457 = vmatpush1.msra.mxu0 0.0
  %1458 = vmatprep.subr.mxu0 0.0
  %1459 = vmatpush1.msra.mxu0 0.0
  %1460 = vmatprep.subr.mxu0 0.0
  %1461 = vmatpush1.msra.mxu0 0.0
  %1462 = vmatprep.subr.mxu0 0.0
  %1463 = vmatpush1.msra.mxu0 0.0
  %1464 = vmatprep.subr.mxu0 0.0
  %1465 = vmatpush1.msra.mxu0 0.0
  %1466 = vmatprep.subr.mxu0 0.0
  %1467 = vmatpush1.msra.mxu0 0.0
  %1468 = vmatprep.subr.mxu0 0.0
  %1469 = vmatpush1.msra.mxu0 0.0
  %1470 = vmatprep.subr.mxu0 0.0
  %1471 = vmatpush1.msra.mxu0 0.0
  %1472 = vmatprep.subr.mxu0 0.0
  %1473 = vmatpush1.msra.mxu0 0.0
  %1474 = vmatprep.subr.mxu0 0.0
  %1475 = vmatpush1.msra.mxu0 0.0
  %1476 = vmatprep.subr.mxu0 0.0
  %1477 = vmatpush1.msra.mxu0 0.0
  %1478 = vmatprep.subr.mxu0 0.0
  %1479 = vmatpush1.msra.mxu0 0.0
  %1480 = vmatprep.subr.mxu0 0.0
  %1481 = vmatpush1.msra.mxu0 0.0
  %1482 = vmatprep.subr.mxu0 0.0
  %1483 = vmatpush1.msra.mxu0 0.0
  %1484 = vmatprep.subr.mxu0 0.0
  %1485 = vmatpush1.msra.mxu0 0.0
  %1486 = vmatprep.subr.mxu0 0.0
  %1487 = vmatpush1.msra.mxu0 0.0
  %1488 = vmatprep.subr.mxu0 0.0
  %1489 = vmatpush1.msra.mxu0 0.0
  %1490 = vmatprep.subr.mxu0 0.0
  %1491 = vmatpush1.msra.mxu0 0.0
  %1492 = vmatprep.subr.mxu0 0.0
  %1493 = vmatpush1.msra.mxu0 0.0
  %1494 = vmatprep.subr.mxu0 0.0
  %1495 = vmatpush1.msra.mxu0 0.0
  %1496 = vmatprep.subr.mxu0 0.0
  %1497 = vmatpush1.msra.mxu0 0.0
  %1498 = vmatprep.subr.mxu0 0.0
  %1499 = vmatpush1.msra.mxu0 0.0
  %1500 = vmatprep.mubr.f32.mxu0 0.0
  %1501 = vmatmul.mubr.f32.gmra.mrb[0].mxu0 %v1341
  %v1502 = vpop.f32.mrb[0].mxu0
  %v1503 = vadd.f32 0.0, %v1502
  %v1504 = vpop.f32.mrb[0].mxu0
  %v1505 = vadd.f32 0.0, %v1504
  %1506 = vmatprep.mubr.f32.mxu0 0.0
  %1507 = vmatmul.mubr.f32.gmra.mrb[0].mxu0 %v1344
  %v1508 = vpop.f32.mrb[0].mxu0
  %v1509 = vadd.f32 0.0, %v1508
  %v1510 = vpop.f32.mrb[0].mxu0
  %v1511 = vadd.f32 0.0, %v1510
  %1512 = vmatprep.mubr.f32.mxu0 0.0
  %1513 = vmatmul.mubr.f32.gmra.mrb[0].mxu0 %v1347
  %v1514 = vpop.f32.mrb[0].mxu0
  %v1515 = vadd.f32 0.0, %v1514
  %v1516 = vpop.f32.mrb[0].mxu0
  %v1517 = vadd.f32 0.0, %v1516
  %1518 = vmatprep.mubr.f32.mxu0 0.0
  %1519 = vmatmul.mubr.f32.gmra.mrb[0].mxu0 %v1350
  %v1520 = vpop.f32.mrb[0].mxu0
  %v1521 = vadd.f32 0.0, %v1520
  %v1522 = vpop.f32.mrb[0].mxu0
  %v1523 = vadd.f32 0.0, %v1522
  %1524 = vmatprep.mubr.f32.mxu0 0.0
  %1525 = vmatmul.mubr.f32.gmra.mrb[0].mxu0 %v1353
  %v1526 = vpop.f32.mrb[0].mxu0
  %v1527 = vadd.f32 0.0, %v1526
  %v1528 = vpop.f32.mrb[0].mxu0
  %v1529 = vadd.f32 0.0, %v1528
  %1530 = vmatprep.mubr.f32.mxu0 0.0
  %1531 = vmatmul.mubr.f32.gmra.mrb[0].mxu0 %v1356
  %v1532 = vpop.f32.mrb[0].mxu0
  %v1533 = vadd.f32 0.0, %v1532
  %v1534 = vpop.f32.mrb[0].mxu0
  %v1535 = vadd.f32 0.0, %v1534
  %1536 = vmatprep.mubr.f32.mxu0 0.0
  %1537 = vmatmul.mubr.f32.gmra.mrb[0].mxu0 %v1359
  %v1538 = vpop.f32.mrb[0].mxu0
  %v1539 = vadd.f32 0.0, %v1538
  %v1540 = vpop.f32.mrb[0].mxu0
  %v1541 = vadd.f32 0.0, %v1540
  %1542 = vmatprep.mubr.f32.mxu0 0.0
  %1543 = vmatmul.mubr.f32.gmra.mrb[0].mxu0 %v1362
  %v1544 = vpop.f32.mrb[0].mxu0
  %v1545 = vadd.f32 0.0, %v1544
  %v1546 = vpop.f32.mrb[0].mxu0
  %v1547 = vadd.f32 0.0, %v1546
  %1548 = vmatprep.mubr.f32.mxu0 0.0
  %1549 = vmatmul.mubr.f32.gmra.mrb[0].mxu0 %v1365
  %v1550 = vpop.f32.mrb[0].mxu0
  %v1551 = vadd.f32 0.0, %v1550
  %v1552 = vpop.f32.mrb[0].mxu0
  %v1553 = vadd.f32 0.0, %v1552
  %1554 = vmatprep.mubr.f32.mxu0 0.0
  %1555 = vmatmul.mubr.f32.gmra.mrb[0].mxu0 %v1368
  %v1556 = vpop.f32.mrb[0].mxu0
  %v1557 = vadd.f32 0.0, %v1556
  %v1558 = vpop.f32.mrb[0].mxu0
  %v1559 = vadd.f32 0.0, %v1558
  %1560 = vmatprep.mubr.f32.mxu0 0.0
  %1561 = vmatmul.mubr.f32.gmra.mrb[0].mxu0 %v1371
  %v1562 = vpop.f32.mrb[0].mxu0
  %v1563 = vadd.f32 0.0, %v1562
  %v1564 = vpop.f32.mrb[0].mxu0
  %v1565 = vadd.f32 0.0, %v1564
  %1566 = vmatprep.mubr.f32.mxu0 0.0
  %1567 = vmatmul.mubr.f32.gmra.mrb[0].mxu0 %v1374
  %v1568 = vpop.f32.mrb[0].mxu0
  %v1569 = vadd.f32 0.0, %v1568
  %v1570 = vpop.f32.mrb[0].mxu0
  %v1571 = vadd.f32 0.0, %v1570
  %1572 = vmatprep.mubr.f32.mxu0 0.0
  %1573 = vmatmul.mubr.f32.gmra.mrb[0].mxu0 %v1377
  %v1574 = vpop.f32.mrb[0].mxu0
  %v1575 = vadd.f32 0.0, %v1574
  %v1576 = vpop.f32.mrb[0].mxu0
  %v1577 = vadd.f32 0.0, %v1576
  %1578 = vmatprep.mubr.f32.mxu0 0.0
  %1579 = vmatmul.mubr.f32.gmra.mrb[0].mxu0 %v1380
  %v1580 = vpop.f32.mrb[0].mxu0
  %v1581 = vadd.f32 0.0, %v1580
  %v1582 = vpop.f32.mrb[0].mxu0
  %v1583 = vadd.f32 0.0, %v1582
  %1584 = vmatprep.mubr.f32.mxu0 0.0
  %1585 = vmatmul.mubr.f32.gmra.mrb[0].mxu0 %v1383
  %v1586 = vpop.f32.mrb[0].mxu0
  %v1587 = vadd.f32 0.0, %v1586
  %v1588 = vpop.f32.mrb[0].mxu0
  %v1589 = vadd.f32 0.0, %v1588
  %1590 = vmatprep.mubr.f32.mxu0 0.0
  %1591 = vmatmul.mubr.f32.gmra.mrb[0].mxu0 %v1386
  %v1592 = vpop.f32.mrb[0].mxu0
  %v1593 = vadd.f32 0.0, %v1592
  %v1594 = vpop.f32.mrb[0].mxu0
  %v1595 = vadd.f32 0.0, %v1594
  %1596 = vmatprep.mubr.f32.mxu0 0.0
  %1597 = vmatmul.mubr.f32.gmra.mrb[0].mxu0 %v1389
  %v1598 = vpop.f32.mrb[0].mxu0
  %v1599 = vadd.f32 0.0, %v1598
  %v1600 = vpop.f32.mrb[0].mxu0
  %v1601 = vadd.f32 0.0, %v1600
  %1602 = vmatprep.mubr.f32.mxu0 0.0
  %1603 = vmatmul.mubr.f32.gmra.mrb[0].mxu0 %v1392
  %v1604 = vpop.f32.mrb[0].mxu0
  %v1605 = vadd.f32 0.0, %v1604
  %v1606 = vpop.f32.mrb[0].mxu0
  %v1607 = vadd.f32 0.0, %v1606
  %1608 = vmatprep.mubr.f32.mxu0 0.0
  %1609 = vmatmul.mubr.f32.gmra.mrb[0].mxu0 %v1395
  %v1610 = vpop.f32.mrb[0].mxu0
  %v1611 = vadd.f32 0.0, %v1610
  %v1612 = vpop.f32.mrb[0].mxu0
  %v1613 = vadd.f32 0.0, %v1612
  %1614 = vmatprep.mubr.f32.mxu0 0.0
  %1615 = vmatmul.mubr.f32.gmra.mrb[0].mxu0 %v1398
  %v1616 = vpop.f32.mrb[0].mxu0
  %v1617 = vadd.f32 0.0, %v1616
  %v1618 = vpop.f32.mrb[0].mxu0
  %v1619 = vadd.f32 0.0, %v1618
  %1620 = vmatprep.mubr.f32.mxu0 0.0
  %1621 = vmatmul.mubr.f32.gmra.mrb[0].mxu0 %v1401
  %v1622 = vpop.f32.mrb[0].mxu0
  %v1623 = vadd.f32 0.0, %v1622
  %v1624 = vpop.f32.mrb[0].mxu0
  %v1625 = vadd.f32 0.0, %v1624
  %1626 = vmatprep.mubr.f32.mxu0 0.0
  %1627 = vmatmul.mubr.f32.gmra.mrb[0].mxu0 %v1404
  %v1628 = vpop.f32.mrb[0].mxu0
  %v1629 = vadd.f32 0.0, %v1628
  %v1630 = vpop.f32.mrb[0].mxu0
  %v1631 = vadd.f32 0.0, %v1630
  %1632 = vmatprep.mubr.f32.mxu0 0.0
  %1633 = vmatmul.mubr.f32.gmra.mrb[0].mxu0 %v1407
  %v1634 = vpop.f32.mrb[0].mxu0
  %v1635 = vadd.f32 0.0, %v1634
  %v1636 = vpop.f32.mrb[0].mxu0
  %v1637 = vadd.f32 0.0, %v1636
  %1638 = vmatprep.mubr.f32.mxu0 0.0
  %1639 = vmatmul.mubr.f32.gmra.mrb[0].mxu0 %v1410
  %v1640 = vpop.f32.mrb[0].mxu0
  %v1641 = vadd.f32 0.0, %v1640
  %v1642 = vpop.f32.mrb[0].mxu0
  %v1643 = vadd.f32 0.0, %v1642
  %1644 = vmatprep.mubr.f32.mxu0 0.0
  %1645 = vmatmul.mubr.f32.gmra.mrb[0].mxu0 %v1413
  %v1646 = vpop.f32.mrb[0].mxu0
  %v1647 = vadd.f32 0.0, %v1646
  %v1648 = vpop.f32.mrb[0].mxu0
  %v1649 = vadd.f32 0.0, %v1648
  %1650 = vmatprep.mubr.f32.mxu0 0.0
  %1651 = vmatmul.mubr.f32.gmra.mrb[0].mxu0 %v1416
  %v1652 = vpop.f32.mrb[0].mxu0
  %v1653 = vadd.f32 0.0, %v1652
  %v1654 = vpop.f32.mrb[0].mxu0
  %v1655 = vadd.f32 0.0, %v1654
  %1656 = vmatprep.mubr.f32.mxu0 0.0
  %1657 = vmatmul.mubr.f32.gmra.mrb[0].mxu0 %v1419
  %v1658 = vpop.f32.mrb[0].mxu0
  %v1659 = vadd.f32 0.0, %v1658
  %v1660 = vpop.f32.mrb[0].mxu0
  %v1661 = vadd.f32 0.0, %v1660
  %1662 = vmatprep.mubr.f32.mxu0 0.0
  %1663 = vmatmul.mubr.f32.gmra.mrb[0].mxu0 %v1422
  %v1664 = vpop.f32.mrb[0].mxu0
  %v1665 = vadd.f32 0.0, %v1664
  %v1666 = vpop.f32.mrb[0].mxu0
  %v1667 = vadd.f32 0.0, %v1666
  %1668 = vmatprep.mubr.f32.mxu0 0.0
  %1669 = vmatmul.mubr.f32.gmra.mrb[0].mxu0 %v1425
  %v1670 = vpop.f32.mrb[0].mxu0
  %v1671 = vadd.f32 0.0, %v1670
  %v1672 = vpop.f32.mrb[0].mxu0
  %v1673 = vadd.f32 0.0, %v1672
  %1674 = vmatprep.mubr.f32.mxu0 0.0
  %1675 = vmatmul.mubr.f32.gmra.mrb[0].mxu0 %v1428
  %v1676 = vpop.f32.mrb[0].mxu0
  %v1677 = vadd.f32 0.0, %v1676
  %v1678 = vpop.f32.mrb[0].mxu0
  %v1679 = vadd.f32 0.0, %v1678
  %1680 = vmatprep.mubr.f32.mxu0 0.0
  %1681 = vmatmul.mubr.f32.gmra.mrb[0].mxu0 %v1431
  %v1682 = vpop.f32.mrb[0].mxu0
  %v1683 = vadd.f32 0.0, %v1682
  %v1684 = vpop.f32.mrb[0].mxu0
  %v1685 = vadd.f32 0.0, %v1684
  %1686 = vmatprep.mubr.f32.mxu0 0.0
  %1687 = vmatmul.mubr.f32.gmra.mrb[0].mxu0 %v1434
  %v1688 = vpop.f32.mrb[0].mxu0
  %v1689 = vadd.f32 0.0, %v1688
  %v1690 = vpop.f32.mrb[0].mxu0
  %v1691 = vadd.f32 0.0, %v1690
  %1692 = vdwg.mxu0
  %v1693 = vadd.f32 %v1235, %v1503
  %v1694 = vadd.f32 %v1236, %v1505
  %v1695 = vadd.f32 %v1237, %v1509
  %v1696 = vadd.f32 %v1238, %v1511
  %v1697 = vadd.f32 %v1239, %v1515
  %v1698 = vadd.f32 %v1240, %v1517
  %v1699 = vadd.f32 %v1241, %v1521
  %v1700 = vadd.f32 %v1242, %v1523
  %v1701 = vadd.f32 %v1243, %v1527
  %v1702 = vadd.f32 %v1244, %v1529
  %v1703 = vadd.f32 %v1245, %v1533
  %v1704 = vadd.f32 %v1246, %v1535
  %v1705 = vadd.f32 %v1247, %v1539
  %v1706 = vadd.f32 %v1248, %v1541
  %v1707 = vadd.f32 %v1249, %v1545
  %v1708 = vadd.f32 %v1250, %v1547
  %v1709 = vadd.f32 %v1251, %v1551
  %v1710 = vadd.f32 %v1252, %v1553
  %v1711 = vadd.f32 %v1253, %v1557
  %v1712 = vadd.f32 %v1254, %v1559
  %v1713 = vadd.f32 %v1255, %v1563
  %v1714 = vadd.f32 %v1256, %v1565
  %v1715 = vadd.f32 %v1257, %v1569
  %v1716 = vadd.f32 %v1258, %v1571
  %v1717 = vadd.f32 %v1259, %v1575
  %v1718 = vadd.f32 %v1260, %v1577
  %v1719 = vadd.f32 %v1261, %v1581
  %v1720 = vadd.f32 %v1262, %v1583
  %v1721 = vadd.f32 %v1263, %v1587
  %v1722 = vadd.f32 %v1264, %v1589
  %v1723 = vadd.f32 %v1265, %v1593
  %v1724 = vadd.f32 %v1266, %v1595
  %v1725 = vadd.f32 %v1267, %v1599
  %v1726 = vadd.f32 %v1268, %v1601
  %v1727 = vadd.f32 %v1269, %v1605
  %v1728 = vadd.f32 %v1270, %v1607
  %v1729 = vadd.f32 %v1271, %v1611
  %v1730 = vadd.f32 %v1272, %v1613
  %v1731 = vadd.f32 %v1273, %v1617
  %v1732 = vadd.f32 %v1274, %v1619
  %v1733 = vadd.f32 %v1275, %v1623
  %v1734 = vadd.f32 %v1276, %v1625
  %v1735 = vadd.f32 %v1277, %v1629
  %v1736 = vadd.f32 %v1278, %v1631
  %v1737 = vadd.f32 %v1279, %v1635
  %v1738 = vadd.f32 %v1280, %v1637
  %v1739 = vadd.f32 %v1281, %v1641
  %v1740 = vadd.f32 %v1282, %v1643
  %v1741 = vadd.f32 %v1283, %v1647
  %v1742 = vadd.f32 %v1284, %v1649
  %v1743 = vadd.f32 %v1285, %v1653
  %v1744 = vadd.f32 %v1286, %v1655
  %v1745 = vadd.f32 %v1287, %v1659
  %v1746 = vadd.f32 %v1288, %v1661
  %v1747 = vadd.f32 %v1289, %v1665
  %v1748 = vadd.f32 %v1290, %v1667
  %v1749 = vadd.f32 %v1291, %v1671
  %v1750 = vadd.f32 %v1292, %v1673
  %v1751 = vadd.f32 %v1293, %v1677
  %v1752 = vadd.f32 %v1294, %v1679
  %v1753 = vadd.f32 %v1295, %v1683
  %v1754 = vadd.f32 %v1296, %v1685
  %v1755 = vadd.f32 %v1297, %v1689
  %v1756 = vadd.f32 %v1298, %v1691
  %v1757 = vld [vmem:[%s0 + $0x4] sm:$0xff]
  %v1758 = vld [vmem:[%s0 + $0xc] sm:$0xff]
  %v1759 = vld [vmem:[%s0 + $0x14] sm:$0xff]
  %v1760 = vld [vmem:[%s0 + $0x1c] sm:$0xff]
  %v1761 = vld [vmem:[%s0 + $0x24] sm:$0xff]
  %v1762 = vld [vmem:[%s0 + $0x2c] sm:$0xff]
  %v1763 = vld [vmem:[%s0 + $0x34] sm:$0xff]
  %v1764 = vld [vmem:[%s0 + $0x3c] sm:$0xff]
  %v1765 = vld [vmem:[%s0 + $0x44] sm:$0xff]
  %v1766 = vld [vmem:[%s0 + $0x4c] sm:$0xff]
  %v1767 = vld [vmem:[%s0 + $0x54] sm:$0xff]
  %v1768 = vld [vmem:[%s0 + $0x5c] sm:$0xff]
  %v1769 = vld [vmem:[%s0 + $0x64] sm:$0xff]
  %v1770 = vld [vmem:[%s0 + $0x6c] sm:$0xff]
  %v1771 = vld [vmem:[%s0 + $0x74] sm:$0xff]
  %v1772 = vld [vmem:[%s0 + $0x7c] sm:$0xff]
  %v1773 = vld [vmem:[%s0 + $0x84] sm:$0xff]
  %v1774 = vld [vmem:[%s0 + $0x8c] sm:$0xff]
  %v1775 = vld [vmem:[%s0 + $0x94] sm:$0xff]
  %v1776 = vld [vmem:[%s0 + $0x9c] sm:$0xff]
  %v1777 = vld [vmem:[%s0 + $0xa4] sm:$0xff]
  %v1778 = vld [vmem:[%s0 + $0xac] sm:$0xff]
  %v1779 = vld [vmem:[%s0 + $0xb4] sm:$0xff]
  %v1780 = vld [vmem:[%s0 + $0xbc] sm:$0xff]
  %v1781 = vld [vmem:[%s0 + $0xc4] sm:$0xff]
  %v1782 = vld [vmem:[%s0 + $0xcc] sm:$0xff]
  %v1783 = vld [vmem:[%s0 + $0xd4] sm:$0xff]
  %v1784 = vld [vmem:[%s0 + $0xdc] sm:$0xff]
  %v1785 = vld [vmem:[%s0 + $0xe4] sm:$0xff]
  %v1786 = vld [vmem:[%s0 + $0xec] sm:$0xff]
  %v1787 = vld [vmem:[%s0 + $0xf4] sm:$0xff]
  %v1788 = vld [vmem:[%s0 + $0xfc] sm:$0xf]
  %s1789 = scalar_lea.vmem %s1, 256
  %v1790 = vld [vmem:[%s1789] sm:$0xff]
  %v1791 = vld [vmem:[%s1789 + $0x8] sm:$0xff]
  %v1792 = vld [vmem:[%s1789 + $0x10] sm:$0xff]
  %v1793 = vld [vmem:[%s1789 + $0x18] sm:$0xff]
  %v1794 = vld [vmem:[%s1789 + $0x20] sm:$0xff]
  %v1795 = vld [vmem:[%s1789 + $0x28] sm:$0xff]
  %v1796 = vld [vmem:[%s1789 + $0x30] sm:$0xff]
  %v1797 = vld [vmem:[%s1789 + $0x38] sm:$0xff]
  %v1799 = vsel %vm134, %v1757, 0
  %v1802 = vsel %vm134, %v1758, 0
  %v1805 = vsel %vm134, %v1759, 0
  %v1808 = vsel %vm134, %v1760, 0
  %v1811 = vsel %vm134, %v1761, 0
  %v1814 = vsel %vm134, %v1762, 0
  %v1817 = vsel %vm134, %v1763, 0
  %v1820 = vsel %vm134, %v1764, 0
  %v1823 = vsel %vm134, %v1765, 0
  %v1826 = vsel %vm134, %v1766, 0
  %v1829 = vsel %vm134, %v1767, 0
  %v1832 = vsel %vm134, %v1768, 0
  %v1835 = vsel %vm134, %v1769, 0
  %v1838 = vsel %vm134, %v1770, 0
  %v1841 = vsel %vm134, %v1771, 0
  %v1844 = vsel %vm134, %v1772, 0
  %v1847 = vsel %vm134, %v1773, 0
  %v1850 = vsel %vm134, %v1774, 0
  %v1853 = vsel %vm134, %v1775, 0
  %v1856 = vsel %vm134, %v1776, 0
  %v1859 = vsel %vm134, %v1777, 0
  %v1862 = vsel %vm134, %v1778, 0
  %v1865 = vsel %vm134, %v1779, 0
  %v1868 = vsel %vm134, %v1780, 0
  %v1871 = vsel %vm134, %v1781, 0
  %v1874 = vsel %vm134, %v1782, 0
  %v1877 = vsel %vm134, %v1783, 0
  %v1880 = vsel %vm134, %v1784, 0
  %v1883 = vsel %vm134, %v1785, 0
  %v1886 = vsel %vm134, %v1786, 0
  %v1889 = vsel %vm134, %v1787, 0
  %v1892 = vsel %vm134, %v1788, 0
  %1894 = vmatprep.subr.mxu0 %v1791
  %1895 = vmatpush1.msra.mxu0 %v1790
  %1896 = vmatprep.subr.mxu0 %v1793
  %1897 = vmatpush1.msra.mxu0 %v1792
  %1898 = vmatprep.subr.mxu0 %v1795
  %1899 = vmatpush1.msra.mxu0 %v1794
  %1900 = vmatprep.subr.mxu0 %v1797
  %1901 = vmatpush1.msra.mxu0 %v1796
  %1902 = vmatprep.subr.mxu0 0.0
  %1903 = vmatpush1.msra.mxu0 0.0
  %1904 = vmatprep.subr.mxu0 0.0
  %1905 = vmatpush1.msra.mxu0 0.0
  %1906 = vmatprep.subr.mxu0 0.0
  %1907 = vmatpush1.msra.mxu0 0.0
  %1908 = vmatprep.subr.mxu0 0.0
  %1909 = vmatpush1.msra.mxu0 0.0
  %1910 = vmatprep.subr.mxu0 0.0
  %1911 = vmatpush1.msra.mxu0 0.0
  %1912 = vmatprep.subr.mxu0 0.0
  %1913 = vmatpush1.msra.mxu0 0.0
  %1914 = vmatprep.subr.mxu0 0.0
  %1915 = vmatpush1.msra.mxu0 0.0
  %1916 = vmatprep.subr.mxu0 0.0
  %1917 = vmatpush1.msra.mxu0 0.0
  %1918 = vmatprep.subr.mxu0 0.0
  %1919 = vmatpush1.msra.mxu0 0.0
  %1920 = vmatprep.subr.mxu0 0.0
  %1921 = vmatpush1.msra.mxu0 0.0
  %1922 = vmatprep.subr.mxu0 0.0
  %1923 = vmatpush1.msra.mxu0 0.0
  %1924 = vmatprep.subr.mxu0 0.0
  %1925 = vmatpush1.msra.mxu0 0.0
  %1926 = vmatprep.subr.mxu0 0.0
  %1927 = vmatpush1.msra.mxu0 0.0
  %1928 = vmatprep.subr.mxu0 0.0
  %1929 = vmatpush1.msra.mxu0 0.0
  %1930 = vmatprep.subr.mxu0 0.0
  %1931 = vmatpush1.msra.mxu0 0.0
  %1932 = vmatprep.subr.mxu0 0.0
  %1933 = vmatpush1.msra.mxu0 0.0
  %1934 = vmatprep.subr.mxu0 0.0
  %1935 = vmatpush1.msra.mxu0 0.0
  %1936 = vmatprep.subr.mxu0 0.0
  %1937 = vmatpush1.msra.mxu0 0.0
  %1938 = vmatprep.subr.mxu0 0.0
  %1939 = vmatpush1.msra.mxu0 0.0
  %1940 = vmatprep.subr.mxu0 0.0
  %1941 = vmatpush1.msra.mxu0 0.0
  %1942 = vmatprep.subr.mxu0 0.0
  %1943 = vmatpush1.msra.mxu0 0.0
  %1944 = vmatprep.subr.mxu0 0.0
  %1945 = vmatpush1.msra.mxu0 0.0
  %1946 = vmatprep.subr.mxu0 0.0
  %1947 = vmatpush1.msra.mxu0 0.0
  %1948 = vmatprep.subr.mxu0 0.0
  %1949 = vmatpush1.msra.mxu0 0.0
  %1950 = vmatprep.subr.mxu0 0.0
  %1951 = vmatpush1.msra.mxu0 0.0
  %1952 = vmatprep.subr.mxu0 0.0
  %1953 = vmatpush1.msra.mxu0 0.0
  %1954 = vmatprep.subr.mxu0 0.0
  %1955 = vmatpush1.msra.mxu0 0.0
  %1956 = vmatprep.subr.mxu0 0.0
  %1957 = vmatpush1.msra.mxu0 0.0
  %1958 = vmatprep.mubr.f32.mxu0 0.0
  %1959 = vmatmul.mubr.f32.gmra.mrb[0].mxu0 %v1799
  %v1960 = vpop.f32.mrb[0].mxu0
  %v1961 = vadd.f32 0.0, %v1960
  %v1962 = vpop.f32.mrb[0].mxu0
  %v1963 = vadd.f32 0.0, %v1962
  %1964 = vmatprep.mubr.f32.mxu0 0.0
  %1965 = vmatmul.mubr.f32.gmra.mrb[0].mxu0 %v1802
  %v1966 = vpop.f32.mrb[0].mxu0
  %v1967 = vadd.f32 0.0, %v1966
  %v1968 = vpop.f32.mrb[0].mxu0
  %v1969 = vadd.f32 0.0, %v1968
  %1970 = vmatprep.mubr.f32.mxu0 0.0
  %1971 = vmatmul.mubr.f32.gmra.mrb[0].mxu0 %v1805
  %v1972 = vpop.f32.mrb[0].mxu0
  %v1973 = vadd.f32 0.0, %v1972
  %v1974 = vpop.f32.mrb[0].mxu0
  %v1975 = vadd.f32 0.0, %v1974
  %1976 = vmatprep.mubr.f32.mxu0 0.0
  %1977 = vmatmul.mubr.f32.gmra.mrb[0].mxu0 %v1808
  %v1978 = vpop.f32.mrb[0].mxu0
  %v1979 = vadd.f32 0.0, %v1978
  %v1980 = vpop.f32.mrb[0].mxu0
  %v1981 = vadd.f32 0.0, %v1980
  %1982 = vmatprep.mubr.f32.mxu0 0.0
  %1983 = vmatmul.mubr.f32.gmra.mrb[0].mxu0 %v1811
  %v1984 = vpop.f32.mrb[0].mxu0
  %v1985 = vadd.f32 0.0, %v1984
  %v1986 = vpop.f32.mrb[0].mxu0
  %v1987 = vadd.f32 0.0, %v1986
  %1988 = vmatprep.mubr.f32.mxu0 0.0
  %1989 = vmatmul.mubr.f32.gmra.mrb[0].mxu0 %v1814
  %v1990 = vpop.f32.mrb[0].mxu0
  %v1991 = vadd.f32 0.0, %v1990
  %v1992 = vpop.f32.mrb[0].mxu0
  %v1993 = vadd.f32 0.0, %v1992
  %1994 = vmatprep.mubr.f32.mxu0 0.0
  %1995 = vmatmul.mubr.f32.gmra.mrb[0].mxu0 %v1817
  %v1996 = vpop.f32.mrb[0].mxu0
  %v1997 = vadd.f32 0.0, %v1996
  %v1998 = vpop.f32.mrb[0].mxu0
  %v1999 = vadd.f32 0.0, %v1998
  %2000 = vmatprep.mubr.f32.mxu0 0.0
  %2001 = vmatmul.mubr.f32.gmra.mrb[0].mxu0 %v1820
  %v2002 = vpop.f32.mrb[0].mxu0
  %v2003 = vadd.f32 0.0, %v2002
  %v2004 = vpop.f32.mrb[0].mxu0
  %v2005 = vadd.f32 0.0, %v2004
  %2006 = vmatprep.mubr.f32.mxu0 0.0
  %2007 = vmatmul.mubr.f32.gmra.mrb[0].mxu0 %v1823
  %v2008 = vpop.f32.mrb[0].mxu0
  %v2009 = vadd.f32 0.0, %v2008
  %v2010 = vpop.f32.mrb[0].mxu0
  %v2011 = vadd.f32 0.0, %v2010
  %2012 = vmatprep.mubr.f32.mxu0 0.0
  %2013 = vmatmul.mubr.f32.gmra.mrb[0].mxu0 %v1826
  %v2014 = vpop.f32.mrb[0].mxu0
  %v2015 = vadd.f32 0.0, %v2014
  %v2016 = vpop.f32.mrb[0].mxu0
  %v2017 = vadd.f32 0.0, %v2016
  %2018 = vmatprep.mubr.f32.mxu0 0.0
  %2019 = vmatmul.mubr.f32.gmra.mrb[0].mxu0 %v1829
  %v2020 = vpop.f32.mrb[0].mxu0
  %v2021 = vadd.f32 0.0, %v2020
  %v2022 = vpop.f32.mrb[0].mxu0
  %v2023 = vadd.f32 0.0, %v2022
  %2024 = vmatprep.mubr.f32.mxu0 0.0
  %2025 = vmatmul.mubr.f32.gmra.mrb[0].mxu0 %v1832
  %v2026 = vpop.f32.mrb[0].mxu0
  %v2027 = vadd.f32 0.0, %v2026
  %v2028 = vpop.f32.mrb[0].mxu0
  %v2029 = vadd.f32 0.0, %v2028
  %2030 = vmatprep.mubr.f32.mxu0 0.0
  %2031 = vmatmul.mubr.f32.gmra.mrb[0].mxu0 %v1835
  %v2032 = vpop.f32.mrb[0].mxu0
  %v2033 = vadd.f32 0.0, %v2032
  %v2034 = vpop.f32.mrb[0].mxu0
  %v2035 = vadd.f32 0.0, %v2034
  %2036 = vmatprep.mubr.f32.mxu0 0.0
  %2037 = vmatmul.mubr.f32.gmra.mrb[0].mxu0 %v1838
  %v2038 = vpop.f32.mrb[0].mxu0
  %v2039 = vadd.f32 0.0, %v2038
  %v2040 = vpop.f32.mrb[0].mxu0
  %v2041 = vadd.f32 0.0, %v2040
  %2042 = vmatprep.mubr.f32.mxu0 0.0
  %2043 = vmatmul.mubr.f32.gmra.mrb[0].mxu0 %v1841
  %v2044 = vpop.f32.mrb[0].mxu0
  %v2045 = vadd.f32 0.0, %v2044
  %v2046 = vpop.f32.mrb[0].mxu0
  %v2047 = vadd.f32 0.0, %v2046
  %2048 = vmatprep.mubr.f32.mxu0 0.0
  %2049 = vmatmul.mubr.f32.gmra.mrb[0].mxu0 %v1844
  %v2050 = vpop.f32.mrb[0].mxu0
  %v2051 = vadd.f32 0.0, %v2050
  %v2052 = vpop.f32.mrb[0].mxu0
  %v2053 = vadd.f32 0.0, %v2052
  %2054 = vmatprep.mubr.f32.mxu0 0.0
  %2055 = vmatmul.mubr.f32.gmra.mrb[0].mxu0 %v1847
  %v2056 = vpop.f32.mrb[0].mxu0
  %v2057 = vadd.f32 0.0, %v2056
  %v2058 = vpop.f32.mrb[0].mxu0
  %v2059 = vadd.f32 0.0, %v2058
  %2060 = vmatprep.mubr.f32.mxu0 0.0
  %2061 = vmatmul.mubr.f32.gmra.mrb[0].mxu0 %v1850
  %v2062 = vpop.f32.mrb[0].mxu0
  %v2063 = vadd.f32 0.0, %v2062
  %v2064 = vpop.f32.mrb[0].mxu0
  %v2065 = vadd.f32 0.0, %v2064
  %2066 = vmatprep.mubr.f32.mxu0 0.0
  %2067 = vmatmul.mubr.f32.gmra.mrb[0].mxu0 %v1853
  %v2068 = vpop.f32.mrb[0].mxu0
  %v2069 = vadd.f32 0.0, %v2068
  %v2070 = vpop.f32.mrb[0].mxu0
  %v2071 = vadd.f32 0.0, %v2070
  %2072 = vmatprep.mubr.f32.mxu0 0.0
  %2073 = vmatmul.mubr.f32.gmra.mrb[0].mxu0 %v1856
  %v2074 = vpop.f32.mrb[0].mxu0
  %v2075 = vadd.f32 0.0, %v2074
  %v2076 = vpop.f32.mrb[0].mxu0
  %v2077 = vadd.f32 0.0, %v2076
  %2078 = vmatprep.mubr.f32.mxu0 0.0
  %2079 = vmatmul.mubr.f32.gmra.mrb[0].mxu0 %v1859
  %v2080 = vpop.f32.mrb[0].mxu0
  %v2081 = vadd.f32 0.0, %v2080
  %v2082 = vpop.f32.mrb[0].mxu0
  %v2083 = vadd.f32 0.0, %v2082
  %2084 = vmatprep.mubr.f32.mxu0 0.0
  %2085 = vmatmul.mubr.f32.gmra.mrb[0].mxu0 %v1862
  %v2086 = vpop.f32.mrb[0].mxu0
  %v2087 = vadd.f32 0.0, %v2086
  %v2088 = vpop.f32.mrb[0].mxu0
  %v2089 = vadd.f32 0.0, %v2088
  %2090 = vmatprep.mubr.f32.mxu0 0.0
  %2091 = vmatmul.mubr.f32.gmra.mrb[0].mxu0 %v1865
  %v2092 = vpop.f32.mrb[0].mxu0
  %v2093 = vadd.f32 0.0, %v2092
  %v2094 = vpop.f32.mrb[0].mxu0
  %v2095 = vadd.f32 0.0, %v2094
  %2096 = vmatprep.mubr.f32.mxu0 0.0
  %2097 = vmatmul.mubr.f32.gmra.mrb[0].mxu0 %v1868
  %v2098 = vpop.f32.mrb[0].mxu0
  %v2099 = vadd.f32 0.0, %v2098
  %v2100 = vpop.f32.mrb[0].mxu0
  %v2101 = vadd.f32 0.0, %v2100
  %2102 = vmatprep.mubr.f32.mxu0 0.0
  %2103 = vmatmul.mubr.f32.gmra.mrb[0].mxu0 %v1871
  %v2104 = vpop.f32.mrb[0].mxu0
  %v2105 = vadd.f32 0.0, %v2104
  %v2106 = vpop.f32.mrb[0].mxu0
  %v2107 = vadd.f32 0.0, %v2106
  %2108 = vmatprep.mubr.f32.mxu0 0.0
  %2109 = vmatmul.mubr.f32.gmra.mrb[0].mxu0 %v1874
  %v2110 = vpop.f32.mrb[0].mxu0
  %v2111 = vadd.f32 0.0, %v2110
  %v2112 = vpop.f32.mrb[0].mxu0
  %v2113 = vadd.f32 0.0, %v2112
  %2114 = vmatprep.mubr.f32.mxu0 0.0
  %2115 = vmatmul.mubr.f32.gmra.mrb[0].mxu0 %v1877
  %v2116 = vpop.f32.mrb[0].mxu0
  %v2117 = vadd.f32 0.0, %v2116
  %v2118 = vpop.f32.mrb[0].mxu0
  %v2119 = vadd.f32 0.0, %v2118
  %2120 = vmatprep.mubr.f32.mxu0 0.0
  %2121 = vmatmul.mubr.f32.gmra.mrb[0].mxu0 %v1880
  %v2122 = vpop.f32.mrb[0].mxu0
  %v2123 = vadd.f32 0.0, %v2122
  %v2124 = vpop.f32.mrb[0].mxu0
  %v2125 = vadd.f32 0.0, %v2124
  %2126 = vmatprep.mubr.f32.mxu0 0.0
  %2127 = vmatmul.mubr.f32.gmra.mrb[0].mxu0 %v1883
  %v2128 = vpop.f32.mrb[0].mxu0
  %v2129 = vadd.f32 0.0, %v2128
  %v2130 = vpop.f32.mrb[0].mxu0
  %v2131 = vadd.f32 0.0, %v2130
  %2132 = vmatprep.mubr.f32.mxu0 0.0
  %2133 = vmatmul.mubr.f32.gmra.mrb[0].mxu0 %v1886
  %v2134 = vpop.f32.mrb[0].mxu0
  %v2135 = vadd.f32 0.0, %v2134
  %v2136 = vpop.f32.mrb[0].mxu0
  %v2137 = vadd.f32 0.0, %v2136
  %2138 = vmatprep.mubr.f32.mxu0 0.0
  %2139 = vmatmul.mubr.f32.gmra.mrb[0].mxu0 %v1889
  %v2140 = vpop.f32.mrb[0].mxu0
  %v2141 = vadd.f32 0.0, %v2140
  %v2142 = vpop.f32.mrb[0].mxu0
  %v2143 = vadd.f32 0.0, %v2142
  %2144 = vmatprep.mubr.f32.mxu0 0.0
  %2145 = vmatmul.mubr.f32.gmra.mrb[0].mxu0 %v1892
  %v2146 = vpop.f32.mrb[0].mxu0
  %v2147 = vadd.f32 0.0, %v2146
  %v2148 = vpop.f32.mrb[0].mxu0
  %v2149 = vadd.f32 0.0, %v2148
  %2150 = vdwg.mxu0
  %v2151 = vadd.f32 %v1693, %v1961
  %v2152 = vadd.f32 %v1694, %v1963
  %v2153 = vadd.f32 %v1695, %v1967
  %v2154 = vadd.f32 %v1696, %v1969
  %v2155 = vadd.f32 %v1697, %v1973
  %v2156 = vadd.f32 %v1698, %v1975
  %v2157 = vadd.f32 %v1699, %v1979
  %v2158 = vadd.f32 %v1700, %v1981
  %v2159 = vadd.f32 %v1701, %v1985
  %v2160 = vadd.f32 %v1702, %v1987
  %v2161 = vadd.f32 %v1703, %v1991
  %v2162 = vadd.f32 %v1704, %v1993
  %v2163 = vadd.f32 %v1705, %v1997
  %v2164 = vadd.f32 %v1706, %v1999
  %v2165 = vadd.f32 %v1707, %v2003
  %v2166 = vadd.f32 %v1708, %v2005
  %v2167 = vadd.f32 %v1709, %v2009
  %v2168 = vadd.f32 %v1710, %v2011
  %v2169 = vadd.f32 %v1711, %v2015
  %v2170 = vadd.f32 %v1712, %v2017
  %v2171 = vadd.f32 %v1713, %v2021
  %v2172 = vadd.f32 %v1714, %v2023
  %v2173 = vadd.f32 %v1715, %v2027
  %v2174 = vadd.f32 %v1716, %v2029
  %v2175 = vadd.f32 %v1717, %v2033
  %v2176 = vadd.f32 %v1718, %v2035
  %v2177 = vadd.f32 %v1719, %v2039
  %v2178 = vadd.f32 %v1720, %v2041
  %v2179 = vadd.f32 %v1721, %v2045
  %v2180 = vadd.f32 %v1722, %v2047
  %v2181 = vadd.f32 %v1723, %v2051
  %v2182 = vadd.f32 %v1724, %v2053
  %v2183 = vadd.f32 %v1725, %v2057
  %v2184 = vadd.f32 %v1726, %v2059
  %v2185 = vadd.f32 %v1727, %v2063
  %v2186 = vadd.f32 %v1728, %v2065
  %v2187 = vadd.f32 %v1729, %v2069
  %v2188 = vadd.f32 %v1730, %v2071
  %v2189 = vadd.f32 %v1731, %v2075
  %v2190 = vadd.f32 %v1732, %v2077
  %v2191 = vadd.f32 %v1733, %v2081
  %v2192 = vadd.f32 %v1734, %v2083
  %v2193 = vadd.f32 %v1735, %v2087
  %v2194 = vadd.f32 %v1736, %v2089
  %v2195 = vadd.f32 %v1737, %v2093
  %v2196 = vadd.f32 %v1738, %v2095
  %v2197 = vadd.f32 %v1739, %v2099
  %v2198 = vadd.f32 %v1740, %v2101
  %v2199 = vadd.f32 %v1741, %v2105
  %v2200 = vadd.f32 %v1742, %v2107
  %v2201 = vadd.f32 %v1743, %v2111
  %v2202 = vadd.f32 %v1744, %v2113
  %v2203 = vadd.f32 %v1745, %v2117
  %v2204 = vadd.f32 %v1746, %v2119
  %v2205 = vadd.f32 %v1747, %v2123
  %v2206 = vadd.f32 %v1748, %v2125
  %v2207 = vadd.f32 %v1749, %v2129
  %v2208 = vadd.f32 %v1750, %v2131
  %v2209 = vadd.f32 %v1751, %v2135
  %v2210 = vadd.f32 %v1752, %v2137
  %v2211 = vadd.f32 %v1753, %v2141
  %v2212 = vadd.f32 %v1754, %v2143
  %v2213 = vadd.f32 %v1755, %v2147
  %v2214 = vadd.f32 %v1756, %v2149
  %v2215 = vld [vmem:[%s2] sm:$0x3]
  %v2217 = vlaneseq
  %v2218 = vshrl.u32 %v2217, 7
  %v2219 = vsub.s32 0, %v2218
  %v2220 = vrot.slane %v2215, %v2219
  %v2221 = vlaneseq
  %v2222 = vshrl.u32 %v2221, 7
  %v2223 = vsub.s32 1, %v2222
  %v2224 = vrot.slane %v2215, %v2223
  %v2227 = vadd.f32 %v2151, %v2220
  %v2228 = vadd.f32 %v2152, %v2224
  %v2229 = vadd.f32 %v2153, %v2220
  %v2230 = vadd.f32 %v2154, %v2224
  %v2231 = vadd.f32 %v2155, %v2220
  %v2232 = vadd.f32 %v2156, %v2224
  %v2233 = vadd.f32 %v2157, %v2220
  %v2234 = vadd.f32 %v2158, %v2224
  %v2235 = vadd.f32 %v2159, %v2220
  %v2236 = vadd.f32 %v2160, %v2224
  %v2237 = vadd.f32 %v2161, %v2220
  %v2238 = vadd.f32 %v2162, %v2224
  %v2239 = vadd.f32 %v2163, %v2220
  %v2240 = vadd.f32 %v2164, %v2224
  %v2241 = vadd.f32 %v2165, %v2220
  %v2242 = vadd.f32 %v2166, %v2224
  %v2243 = vadd.f32 %v2167, %v2220
  %v2244 = vadd.f32 %v2168, %v2224
  %v2245 = vadd.f32 %v2169, %v2220
  %v2246 = vadd.f32 %v2170, %v2224
  %v2247 = vadd.f32 %v2171, %v2220
  %v2248 = vadd.f32 %v2172, %v2224
  %v2249 = vadd.f32 %v2173, %v2220
  %v2250 = vadd.f32 %v2174, %v2224
  %v2251 = vadd.f32 %v2175, %v2220
  %v2252 = vadd.f32 %v2176, %v2224
  %v2253 = vadd.f32 %v2177, %v2220
  %v2254 = vadd.f32 %v2178, %v2224
  %v2255 = vadd.f32 %v2179, %v2220
  %v2256 = vadd.f32 %v2180, %v2224
  %v2257 = vadd.f32 %v2181, %v2220
  %v2258 = vadd.f32 %v2182, %v2224
  %v2259 = vadd.f32 %v2183, %v2220
  %v2260 = vadd.f32 %v2184, %v2224
  %v2261 = vadd.f32 %v2185, %v2220
  %v2262 = vadd.f32 %v2186, %v2224
  %v2263 = vadd.f32 %v2187, %v2220
  %v2264 = vadd.f32 %v2188, %v2224
  %v2265 = vadd.f32 %v2189, %v2220
  %v2266 = vadd.f32 %v2190, %v2224
  %v2267 = vadd.f32 %v2191, %v2220
  %v2268 = vadd.f32 %v2192, %v2224
  %v2269 = vadd.f32 %v2193, %v2220
  %v2270 = vadd.f32 %v2194, %v2224
  %v2271 = vadd.f32 %v2195, %v2220
  %v2272 = vadd.f32 %v2196, %v2224
  %v2273 = vadd.f32 %v2197, %v2220
  %v2274 = vadd.f32 %v2198, %v2224
  %v2275 = vadd.f32 %v2199, %v2220
  %v2276 = vadd.f32 %v2200, %v2224
  %v2277 = vadd.f32 %v2201, %v2220
  %v2278 = vadd.f32 %v2202, %v2224
  %v2279 = vadd.f32 %v2203, %v2220
  %v2280 = vadd.f32 %v2204, %v2224
  %v2281 = vadd.f32 %v2205, %v2220
  %v2282 = vadd.f32 %v2206, %v2224
  %v2283 = vadd.f32 %v2207, %v2220
  %v2284 = vadd.f32 %v2208, %v2224
  %v2285 = vadd.f32 %v2209, %v2220
  %v2286 = vadd.f32 %v2210, %v2224
  %v2287 = vadd.f32 %v2211, %v2220
  %v2288 = vadd.f32 %v2212, %v2224
  %v2289 = vadd.f32 %v2213, %v2220
  %v2290 = vadd.f32 %v2214, %v2224
  %v2291 = vxor.u32 %v2227, 2147483648
  %v2292 = vxor.u32 %v2228, 2147483648
  %v2293 = vxor.u32 %v2229, 2147483648
  %v2294 = vxor.u32 %v2230, 2147483648
  %v2295 = vxor.u32 %v2231, 2147483648
  %v2296 = vxor.u32 %v2232, 2147483648
  %v2297 = vxor.u32 %v2233, 2147483648
  %v2298 = vxor.u32 %v2234, 2147483648
  %v2299 = vxor.u32 %v2235, 2147483648
  %v2300 = vxor.u32 %v2236, 2147483648
  %v2301 = vxor.u32 %v2237, 2147483648
  %v2302 = vxor.u32 %v2238, 2147483648
  %v2303 = vxor.u32 %v2239, 2147483648
  %v2304 = vxor.u32 %v2240, 2147483648
  %v2305 = vxor.u32 %v2241, 2147483648
  %v2306 = vxor.u32 %v2242, 2147483648
  %v2307 = vxor.u32 %v2243, 2147483648
  %v2308 = vxor.u32 %v2244, 2147483648
  %v2309 = vxor.u32 %v2245, 2147483648
  %v2310 = vxor.u32 %v2246, 2147483648
  %v2311 = vxor.u32 %v2247, 2147483648
  %v2312 = vxor.u32 %v2248, 2147483648
  %v2313 = vxor.u32 %v2249, 2147483648
  %v2314 = vxor.u32 %v2250, 2147483648
  %v2315 = vxor.u32 %v2251, 2147483648
  %v2316 = vxor.u32 %v2252, 2147483648
  %v2317 = vxor.u32 %v2253, 2147483648
  %v2318 = vxor.u32 %v2254, 2147483648
  %v2319 = vxor.u32 %v2255, 2147483648
  %v2320 = vxor.u32 %v2256, 2147483648
  %v2321 = vxor.u32 %v2257, 2147483648
  %v2322 = vxor.u32 %v2258, 2147483648
  %v2323 = vxor.u32 %v2259, 2147483648
  %v2324 = vxor.u32 %v2260, 2147483648
  %v2325 = vxor.u32 %v2261, 2147483648
  %v2326 = vxor.u32 %v2262, 2147483648
  %v2327 = vxor.u32 %v2263, 2147483648
  %v2328 = vxor.u32 %v2264, 2147483648
  %v2329 = vxor.u32 %v2265, 2147483648
  %v2330 = vxor.u32 %v2266, 2147483648
  %v2331 = vxor.u32 %v2267, 2147483648
  %v2332 = vxor.u32 %v2268, 2147483648
  %v2333 = vxor.u32 %v2269, 2147483648
  %v2334 = vxor.u32 %v2270, 2147483648
  %v2335 = vxor.u32 %v2271, 2147483648
  %v2336 = vxor.u32 %v2272, 2147483648
  %v2337 = vxor.u32 %v2273, 2147483648
  %v2338 = vxor.u32 %v2274, 2147483648
  %v2339 = vxor.u32 %v2275, 2147483648
  %v2340 = vxor.u32 %v2276, 2147483648
  %v2341 = vxor.u32 %v2277, 2147483648
  %v2342 = vxor.u32 %v2278, 2147483648
  %v2343 = vxor.u32 %v2279, 2147483648
  %v2344 = vxor.u32 %v2280, 2147483648
  %v2345 = vxor.u32 %v2281, 2147483648
  %v2346 = vxor.u32 %v2282, 2147483648
  %v2347 = vxor.u32 %v2283, 2147483648
  %v2348 = vxor.u32 %v2284, 2147483648
  %v2349 = vxor.u32 %v2285, 2147483648
  %v2350 = vxor.u32 %v2286, 2147483648
  %v2351 = vxor.u32 %v2287, 2147483648
  %v2352 = vxor.u32 %v2288, 2147483648
  %v2353 = vxor.u32 %v2289, 2147483648
  %v2354 = vxor.u32 %v2290, 2147483648
  %v2355 = vmul.f32 %v2291, 1.442695
  %v2356 = vpow.pop %v2355
  %v2357 = vmul.f32 %v2292, 1.442695
  %v2358 = vpow.pop %v2357
  %v2359 = vmul.f32 %v2293, 1.442695
  %v2360 = vpow.pop %v2359
  %v2361 = vmul.f32 %v2294, 1.442695
  %v2362 = vpow.pop %v2361
  %v2363 = vmul.f32 %v2295, 1.442695
  %v2364 = vpow.pop %v2363
  %v2365 = vmul.f32 %v2296, 1.442695
  %v2366 = vpow.pop %v2365
  %v2367 = vmul.f32 %v2297, 1.442695
  %v2368 = vpow.pop %v2367
  %v2369 = vmul.f32 %v2298, 1.442695
  %v2370 = vpow.pop %v2369
  %v2371 = vmul.f32 %v2299, 1.442695
  %v2372 = vpow.pop %v2371
  %v2373 = vmul.f32 %v2300, 1.442695
  %v2374 = vpow.pop %v2373
  %v2375 = vmul.f32 %v2301, 1.442695
  %v2376 = vpow.pop %v2375
  %v2377 = vmul.f32 %v2302, 1.442695
  %v2378 = vpow.pop %v2377
  %v2379 = vmul.f32 %v2303, 1.442695
  %v2380 = vpow.pop %v2379
  %v2381 = vmul.f32 %v2304, 1.442695
  %v2382 = vpow.pop %v2381
  %v2383 = vmul.f32 %v2305, 1.442695
  %v2384 = vpow.pop %v2383
  %v2385 = vmul.f32 %v2306, 1.442695
  %v2386 = vpow.pop %v2385
  %v2387 = vmul.f32 %v2307, 1.442695
  %v2388 = vpow.pop %v2387
  %v2389 = vmul.f32 %v2308, 1.442695
  %v2390 = vpow.pop %v2389
  %v2391 = vmul.f32 %v2309, 1.442695
  %v2392 = vpow.pop %v2391
  %v2393 = vmul.f32 %v2310, 1.442695
  %v2394 = vpow.pop %v2393
  %v2395 = vmul.f32 %v2311, 1.442695
  %v2396 = vpow.pop %v2395
  %v2397 = vmul.f32 %v2312, 1.442695
  %v2398 = vpow.pop %v2397
  %v2399 = vmul.f32 %v2313, 1.442695
  %v2400 = vpow.pop %v2399
  %v2401 = vmul.f32 %v2314, 1.442695
  %v2402 = vpow.pop %v2401
  %v2403 = vmul.f32 %v2315, 1.442695
  %v2404 = vpow.pop %v2403
  %v2405 = vmul.f32 %v2316, 1.442695
  %v2406 = vpow.pop %v2405
  %v2407 = vmul.f32 %v2317, 1.442695
  %v2408 = vpow.pop %v2407
  %v2409 = vmul.f32 %v2318, 1.442695
  %v2410 = vpow.pop %v2409
  %v2411 = vmul.f32 %v2319, 1.442695
  %v2412 = vpow.pop %v2411
  %v2413 = vmul.f32 %v2320, 1.442695
  %v2414 = vpow.pop %v2413
  %v2415 = vmul.f32 %v2321, 1.442695
  %v2416 = vpow.pop %v2415
  %v2417 = vmul.f32 %v2322, 1.442695
  %v2418 = vpow.pop %v2417
  %v2419 = vmul.f32 %v2323, 1.442695
  %v2420 = vpow.pop %v2419
  %v2421 = vmul.f32 %v2324, 1.442695
  %v2422 = vpow.pop %v2421
  %v2423 = vmul.f32 %v2325, 1.442695
  %v2424 = vpow.pop %v2423
  %v2425 = vmul.f32 %v2326, 1.442695
  %v2426 = vpow.pop %v2425
  %v2427 = vmul.f32 %v2327, 1.442695
  %v2428 = vpow.pop %v2427
  %v2429 = vmul.f32 %v2328, 1.442695
  %v2430 = vpow.pop %v2429
  %v2431 = vmul.f32 %v2329, 1.442695
  %v2432 = vpow.pop %v2431
  %v2433 = vmul.f32 %v2330, 1.442695
  %v2434 = vpow.pop %v2433
  %v2435 = vmul.f32 %v2331, 1.442695
  %v2436 = vpow.pop %v2435
  %v2437 = vmul.f32 %v2332, 1.442695
  %v2438 = vpow.pop %v2437
  %v2439 = vmul.f32 %v2333, 1.442695
  %v2440 = vpow.pop %v2439
  %v2441 = vmul.f32 %v2334, 1.442695
  %v2442 = vpow.pop %v2441
  %v2443 = vmul.f32 %v2335, 1.442695
  %v2444 = vpow.pop %v2443
  %v2445 = vmul.f32 %v2336, 1.442695
  %v2446 = vpow.pop %v2445
  %v2447 = vmul.f32 %v2337, 1.442695
  %v2448 = vpow.pop %v2447
  %v2449 = vmul.f32 %v2338, 1.442695
  %v2450 = vpow.pop %v2449
  %v2451 = vmul.f32 %v2339, 1.442695
  %v2452 = vpow.pop %v2451
  %v2453 = vmul.f32 %v2340, 1.442695
  %v2454 = vpow.pop %v2453
  %v2455 = vmul.f32 %v2341, 1.442695
  %v2456 = vpow.pop %v2455
  %v2457 = vmul.f32 %v2342, 1.442695
  %v2458 = vpow.pop %v2457
  %v2459 = vmul.f32 %v2343, 1.442695
  %v2460 = vpow.pop %v2459
  %v2461 = vmul.f32 %v2344, 1.442695
  %v2462 = vpow.pop %v2461
  %v2463 = vmul.f32 %v2345, 1.442695
  %v2464 = vpow.pop %v2463
  %v2465 = vmul.f32 %v2346, 1.442695
  %v2466 = vpow.pop %v2465
  %v2467 = vmul.f32 %v2347, 1.442695
  %v2468 = vpow.pop %v2467
  %v2469 = vmul.f32 %v2348, 1.442695
  %v2470 = vpow.pop %v2469
  %v2471 = vmul.f32 %v2349, 1.442695
  %v2472 = vpow.pop %v2471
  %v2473 = vmul.f32 %v2350, 1.442695
  %v2474 = vpow.pop %v2473
  %v2475 = vmul.f32 %v2351, 1.442695
  %v2476 = vpow.pop %v2475
  %v2477 = vmul.f32 %v2352, 1.442695
  %v2478 = vpow.pop %v2477
  %v2479 = vmul.f32 %v2353, 1.442695
  %v2480 = vpow.pop %v2479
  %v2481 = vmul.f32 %v2354, 1.442695
  %v2482 = vpow.pop %v2481
  %v2483 = vadd.f32 %v2356, 1.0
  %v2484 = vadd.f32 %v2358, 1.0
  %v2485 = vadd.f32 %v2360, 1.0
  %v2486 = vadd.f32 %v2362, 1.0
  %v2487 = vadd.f32 %v2364, 1.0
  %v2488 = vadd.f32 %v2366, 1.0
  %v2489 = vadd.f32 %v2368, 1.0
  %v2490 = vadd.f32 %v2370, 1.0
  %v2491 = vadd.f32 %v2372, 1.0
  %v2492 = vadd.f32 %v2374, 1.0
  %v2493 = vadd.f32 %v2376, 1.0
  %v2494 = vadd.f32 %v2378, 1.0
  %v2495 = vadd.f32 %v2380, 1.0
  %v2496 = vadd.f32 %v2382, 1.0
  %v2497 = vadd.f32 %v2384, 1.0
  %v2498 = vadd.f32 %v2386, 1.0
  %v2499 = vadd.f32 %v2388, 1.0
  %v2500 = vadd.f32 %v2390, 1.0
  %v2501 = vadd.f32 %v2392, 1.0
  %v2502 = vadd.f32 %v2394, 1.0
  %v2503 = vadd.f32 %v2396, 1.0
  %v2504 = vadd.f32 %v2398, 1.0
  %v2505 = vadd.f32 %v2400, 1.0
  %v2506 = vadd.f32 %v2402, 1.0
  %v2507 = vadd.f32 %v2404, 1.0
  %v2508 = vadd.f32 %v2406, 1.0
  %v2509 = vadd.f32 %v2408, 1.0
  %v2510 = vadd.f32 %v2410, 1.0
  %v2511 = vadd.f32 %v2412, 1.0
  %v2512 = vadd.f32 %v2414, 1.0
  %v2513 = vadd.f32 %v2416, 1.0
  %v2514 = vadd.f32 %v2418, 1.0
  %v2515 = vadd.f32 %v2420, 1.0
  %v2516 = vadd.f32 %v2422, 1.0
  %v2517 = vadd.f32 %v2424, 1.0
  %v2518 = vadd.f32 %v2426, 1.0
  %v2519 = vadd.f32 %v2428, 1.0
  %v2520 = vadd.f32 %v2430, 1.0
  %v2521 = vadd.f32 %v2432, 1.0
  %v2522 = vadd.f32 %v2434, 1.0
  %v2523 = vadd.f32 %v2436, 1.0
  %v2524 = vadd.f32 %v2438, 1.0
  %v2525 = vadd.f32 %v2440, 1.0
  %v2526 = vadd.f32 %v2442, 1.0
  %v2527 = vadd.f32 %v2444, 1.0
  %v2528 = vadd.f32 %v2446, 1.0
  %v2529 = vadd.f32 %v2448, 1.0
  %v2530 = vadd.f32 %v2450, 1.0
  %v2531 = vadd.f32 %v2452, 1.0
  %v2532 = vadd.f32 %v2454, 1.0
  %v2533 = vadd.f32 %v2456, 1.0
  %v2534 = vadd.f32 %v2458, 1.0
  %v2535 = vadd.f32 %v2460, 1.0
  %v2536 = vadd.f32 %v2462, 1.0
  %v2537 = vadd.f32 %v2464, 1.0
  %v2538 = vadd.f32 %v2466, 1.0
  %v2539 = vadd.f32 %v2468, 1.0
  %v2540 = vadd.f32 %v2470, 1.0
  %v2541 = vadd.f32 %v2472, 1.0
  %v2542 = vadd.f32 %v2474, 1.0
  %v2543 = vadd.f32 %v2476, 1.0
  %v2544 = vadd.f32 %v2478, 1.0
  %v2545 = vadd.f32 %v2480, 1.0
  %v2546 = vadd.f32 %v2482, 1.0
  %v2547 = vrcp.pop %v2483
  %v2548 = vmul.f32 1.0, %v2547
  %v2549 = vrcp.pop %v2484
  %v2550 = vmul.f32 1.0, %v2549
  %v2551 = vrcp.pop %v2485
  %v2552 = vmul.f32 1.0, %v2551
  %v2553 = vrcp.pop %v2486
  %v2554 = vmul.f32 1.0, %v2553
  %v2555 = vrcp.pop %v2487
  %v2556 = vmul.f32 1.0, %v2555
  %v2557 = vrcp.pop %v2488
  %v2558 = vmul.f32 1.0, %v2557
  %v2559 = vrcp.pop %v2489
  %v2560 = vmul.f32 1.0, %v2559
  %v2561 = vrcp.pop %v2490
  %v2562 = vmul.f32 1.0, %v2561
  %v2563 = vrcp.pop %v2491
  %v2564 = vmul.f32 1.0, %v2563
  %v2565 = vrcp.pop %v2492
  %v2566 = vmul.f32 1.0, %v2565
  %v2567 = vrcp.pop %v2493
  %v2568 = vmul.f32 1.0, %v2567
  %v2569 = vrcp.pop %v2494
  %v2570 = vmul.f32 1.0, %v2569
  %v2571 = vrcp.pop %v2495
  %v2572 = vmul.f32 1.0, %v2571
  %v2573 = vrcp.pop %v2496
  %v2574 = vmul.f32 1.0, %v2573
  %v2575 = vrcp.pop %v2497
  %v2576 = vmul.f32 1.0, %v2575
  %v2577 = vrcp.pop %v2498
  %v2578 = vmul.f32 1.0, %v2577
  %v2579 = vrcp.pop %v2499
  %v2580 = vmul.f32 1.0, %v2579
  %v2581 = vrcp.pop %v2500
  %v2582 = vmul.f32 1.0, %v2581
  %v2583 = vrcp.pop %v2501
  %v2584 = vmul.f32 1.0, %v2583
  %v2585 = vrcp.pop %v2502
  %v2586 = vmul.f32 1.0, %v2585
  %v2587 = vrcp.pop %v2503
  %v2588 = vmul.f32 1.0, %v2587
  %v2589 = vrcp.pop %v2504
  %v2590 = vmul.f32 1.0, %v2589
  %v2591 = vrcp.pop %v2505
  %v2592 = vmul.f32 1.0, %v2591
  %v2593 = vrcp.pop %v2506
  %v2594 = vmul.f32 1.0, %v2593
  %v2595 = vrcp.pop %v2507
  %v2596 = vmul.f32 1.0, %v2595
  %v2597 = vrcp.pop %v2508
  %v2598 = vmul.f32 1.0, %v2597
  %v2599 = vrcp.pop %v2509
  %v2600 = vmul.f32 1.0, %v2599
  %v2601 = vrcp.pop %v2510
  %v2602 = vmul.f32 1.0, %v2601
  %v2603 = vrcp.pop %v2511
  %v2604 = vmul.f32 1.0, %v2603
  %v2605 = vrcp.pop %v2512
  %v2606 = vmul.f32 1.0, %v2605
  %v2607 = vrcp.pop %v2513
  %v2608 = vmul.f32 1.0, %v2607
  %v2609 = vrcp.pop %v2514
  %v2610 = vmul.f32 1.0, %v2609
  %v2611 = vrcp.pop %v2515
  %v2612 = vmul.f32 1.0, %v2611
  %v2613 = vrcp.pop %v2516
  %v2614 = vmul.f32 1.0, %v2613
  %v2615 = vrcp.pop %v2517
  %v2616 = vmul.f32 1.0, %v2615
  %v2617 = vrcp.pop %v2518
  %v2618 = vmul.f32 1.0, %v2617
  %v2619 = vrcp.pop %v2519
  %v2620 = vmul.f32 1.0, %v2619
  %v2621 = vrcp.pop %v2520
  %v2622 = vmul.f32 1.0, %v2621
  %v2623 = vrcp.pop %v2521
  %v2624 = vmul.f32 1.0, %v2623
  %v2625 = vrcp.pop %v2522
  %v2626 = vmul.f32 1.0, %v2625
  %v2627 = vrcp.pop %v2523
  %v2628 = vmul.f32 1.0, %v2627
  %v2629 = vrcp.pop %v2524
  %v2630 = vmul.f32 1.0, %v2629
  %v2631 = vrcp.pop %v2525
  %v2632 = vmul.f32 1.0, %v2631
  %v2633 = vrcp.pop %v2526
  %v2634 = vmul.f32 1.0, %v2633
  %v2635 = vrcp.pop %v2527
  %v2636 = vmul.f32 1.0, %v2635
  %v2637 = vrcp.pop %v2528
  %v2638 = vmul.f32 1.0, %v2637
  %v2639 = vrcp.pop %v2529
  %v2640 = vmul.f32 1.0, %v2639
  %v2641 = vrcp.pop %v2530
  %v2642 = vmul.f32 1.0, %v2641
  %v2643 = vrcp.pop %v2531
  %v2644 = vmul.f32 1.0, %v2643
  %v2645 = vrcp.pop %v2532
  %v2646 = vmul.f32 1.0, %v2645
  %v2647 = vrcp.pop %v2533
  %v2648 = vmul.f32 1.0, %v2647
  %v2649 = vrcp.pop %v2534
  %v2650 = vmul.f32 1.0, %v2649
  %v2651 = vrcp.pop %v2535
  %v2652 = vmul.f32 1.0, %v2651
  %v2653 = vrcp.pop %v2536
  %v2654 = vmul.f32 1.0, %v2653
  %v2655 = vrcp.pop %v2537
  %v2656 = vmul.f32 1.0, %v2655
  %v2657 = vrcp.pop %v2538
  %v2658 = vmul.f32 1.0, %v2657
  %v2659 = vrcp.pop %v2539
  %v2660 = vmul.f32 1.0, %v2659
  %v2661 = vrcp.pop %v2540
  %v2662 = vmul.f32 1.0, %v2661
  %v2663 = vrcp.pop %v2541
  %v2664 = vmul.f32 1.0, %v2663
  %v2665 = vrcp.pop %v2542
  %v2666 = vmul.f32 1.0, %v2665
  %v2667 = vrcp.pop %v2543
  %v2668 = vmul.f32 1.0, %v2667
  %v2669 = vrcp.pop %v2544
  %v2670 = vmul.f32 1.0, %v2669
  %v2671 = vrcp.pop %v2545
  %v2672 = vmul.f32 1.0, %v2671
  %v2673 = vrcp.pop %v2546
  %v2674 = vmul.f32 1.0, %v2673
  %v2675 = vld [vmem:[%s4] sm:$0xff]
  %v2676 = vld [vmem:[%s4 + $0x8] sm:$0xff]
  %v2677 = vld [vmem:[%s4 + $0x10] sm:$0xff]
  %v2678 = vld [vmem:[%s4 + $0x18] sm:$0xff]
  %v2679 = vld [vmem:[%s4 + $0x20] sm:$0xff]
  %v2680 = vld [vmem:[%s4 + $0x28] sm:$0xff]
  %v2681 = vld [vmem:[%s4 + $0x30] sm:$0xff]
  %v2682 = vld [vmem:[%s4 + $0x38] sm:$0xff]
  %v2683 = vld [vmem:[%s4 + $0x40] sm:$0xff]
  %v2684 = vld [vmem:[%s4 + $0x48] sm:$0xff]
  %v2685 = vld [vmem:[%s4 + $0x50] sm:$0xff]
  %v2686 = vld [vmem:[%s4 + $0x58] sm:$0xff]
  %v2687 = vld [vmem:[%s4 + $0x60] sm:$0xff]
  %v2688 = vld [vmem:[%s4 + $0x68] sm:$0xff]
  %v2689 = vld [vmem:[%s4 + $0x70] sm:$0xff]
  %v2690 = vld [vmem:[%s4 + $0x78] sm:$0xff]
  %v2691 = vld [vmem:[%s4 + $0x80] sm:$0xff]
  %v2692 = vld [vmem:[%s4 + $0x88] sm:$0xff]
  %v2693 = vld [vmem:[%s4 + $0x90] sm:$0xff]
  %v2694 = vld [vmem:[%s4 + $0x98] sm:$0xff]
  %v2695 = vld [vmem:[%s4 + $0xa0] sm:$0xff]
  %v2696 = vld [vmem:[%s4 + $0xa8] sm:$0xff]
  %v2697 = vld [vmem:[%s4 + $0xb0] sm:$0xff]
  %v2698 = vld [vmem:[%s4 + $0xb8] sm:$0xff]
  %v2699 = vld [vmem:[%s4 + $0xc0] sm:$0xff]
  %v2700 = vld [vmem:[%s4 + $0xc8] sm:$0xff]
  %v2701 = vld [vmem:[%s4 + $0xd0] sm:$0xff]
  %v2702 = vld [vmem:[%s4 + $0xd8] sm:$0xff]
  %v2703 = vld [vmem:[%s3] sm:$0xff]
  %v2704 = vld [vmem:[%s3 + $0x8] sm:$0xff]
  %v2705 = vld [vmem:[%s3 + $0x10] sm:$0xff]
  %v2706 = vld [vmem:[%s3 + $0x18] sm:$0xff]
  %v2707 = vld [vmem:[%s3 + $0x20] sm:$0xff]
  %v2708 = vld [vmem:[%s3 + $0x28] sm:$0xff]
  %v2709 = vld [vmem:[%s3 + $0x30] sm:$0xff]
  %v2710 = vld [vmem:[%s3 + $0x38] sm:$0xff]
  %v2711 = vld [vmem:[%s3 + $0x40] sm:$0xff]
  %v2712 = vld [vmem:[%s3 + $0x48] sm:$0xff]
  %v2713 = vld [vmem:[%s3 + $0x50] sm:$0xff]
  %v2714 = vld [vmem:[%s3 + $0x58] sm:$0xff]
  %v2715 = vld [vmem:[%s3 + $0x60] sm:$0xff]
  %v2716 = vld [vmem:[%s3 + $0x68] sm:$0xff]
  %v2717 = vld [vmem:[%s3 + $0x70] sm:$0xff]
  %v2718 = vld [vmem:[%s3 + $0x78] sm:$0xff]
  %v2719 = vld [vmem:[%s3 + $0x80] sm:$0xff]
  %v2720 = vld [vmem:[%s3 + $0x88] sm:$0xff]
  %v2721 = vld [vmem:[%s3 + $0x90] sm:$0xff]
  %v2722 = vld [vmem:[%s3 + $0x98] sm:$0xff]
  %v2723 = vld [vmem:[%s3 + $0xa0] sm:$0xff]
  %vm2724 = vcmask 326656
  %v2726 = vsel %vm2724, %v2550, 0
  %v2729 = vsel %vm2724, %v2554, 0
  %v2732 = vsel %vm2724, %v2558, 0
  %v2735 = vsel %vm2724, %v2562, 0
  %v2738 = vsel %vm2724, %v2566, 0
  %v2741 = vsel %vm2724, %v2570, 0
  %v2744 = vsel %vm2724, %v2574, 0
  %v2747 = vsel %vm2724, %v2578, 0
  %v2750 = vsel %vm2724, %v2582, 0
  %v2753 = vsel %vm2724, %v2586, 0
  %v2756 = vsel %vm2724, %v2590, 0
  %v2759 = vsel %vm2724, %v2594, 0
  %v2762 = vsel %vm2724, %v2598, 0
  %v2765 = vsel %vm2724, %v2602, 0
  %v2768 = vsel %vm2724, %v2606, 0
  %v2771 = vsel %vm2724, %v2610, 0
  %v2774 = vsel %vm2724, %v2614, 0
  %v2777 = vsel %vm2724, %v2618, 0
  %v2780 = vsel %vm2724, %v2622, 0
  %v2783 = vsel %vm2724, %v2626, 0
  %v2786 = vsel %vm2724, %v2630, 0
  %v2789 = vsel %vm2724, %v2634, 0
  %v2792 = vsel %vm2724, %v2638, 0
  %v2795 = vsel %vm2724, %v2642, 0
  %v2798 = vsel %vm2724, %v2646, 0
  %v2801 = vsel %vm2724, %v2650, 0
  %v2804 = vsel %vm2724, %v2654, 0
  %v2807 = vsel %vm2724, %v2658, 0
  %v2810 = vsel %vm2724, %v2662, 0
  %v2813 = vsel %vm2724, %v2666, 0
  %v2816 = vsel %vm2724, %v2670, 0
  %v2819 = vsel %vm2724, %v2674, 0
  %2821 = vmatprep.subr.mxu0 0.0
  %2822 = vmatpush1.msra.mxu0 %v2703
  %2823 = vmatprep.subr.mxu0 0.0
  %2824 = vmatpush1.msra.mxu0 %v2704
  %2825 = vmatprep.subr.mxu0 0.0
  %2826 = vmatpush1.msra.mxu0 %v2705
  %2827 = vmatprep.subr.mxu0 0.0
  %2828 = vmatpush1.msra.mxu0 %v2706
  %2829 = vmatprep.subr.mxu0 0.0
  %2830 = vmatpush1.msra.mxu0 %v2707
  %2831 = vmatprep.subr.mxu0 0.0
  %2832 = vmatpush1.msra.mxu0 %v2708
  %2833 = vmatprep.subr.mxu0 0.0
  %2834 = vmatpush1.msra.mxu0 %v2709
  %2835 = vmatprep.subr.mxu0 0.0
  %2836 = vmatpush1.msra.mxu0 %v2710
  %2837 = vmatprep.subr.mxu0 0.0
  %2838 = vmatpush1.msra.mxu0 %v2711
  %2839 = vmatprep.subr.mxu0 0.0
  %2840 = vmatpush1.msra.mxu0 %v2712
  %2841 = vmatprep.subr.mxu0 0.0
  %2842 = vmatpush1.msra.mxu0 %v2713
  %2843 = vmatprep.subr.mxu0 0.0
  %2844 = vmatpush1.msra.mxu0 %v2714
  %2845 = vmatprep.subr.mxu0 0.0
  %2846 = vmatpush1.msra.mxu0 %v2715
  %2847 = vmatprep.subr.mxu0 0.0
  %2848 = vmatpush1.msra.mxu0 %v2716
  %2849 = vmatprep.subr.mxu0 0.0
  %2850 = vmatpush1.msra.mxu0 %v2717
  %2851 = vmatprep.subr.mxu0 0.0
  %2852 = vmatpush1.msra.mxu0 %v2718
  %2853 = vmatprep.subr.mxu0 0.0
  %2854 = vmatpush1.msra.mxu0 %v2719
  %2855 = vmatprep.subr.mxu0 0.0
  %2856 = vmatpush1.msra.mxu0 %v2720
  %2857 = vmatprep.subr.mxu0 0.0
  %2858 = vmatpush1.msra.mxu0 %v2721
  %2859 = vmatprep.subr.mxu0 0.0
  %2860 = vmatpush1.msra.mxu0 %v2722
  %2861 = vmatprep.subr.mxu0 0.0
  %2862 = vmatpush1.msra.mxu0 %v2723
  %2863 = vmatprep.subr.mxu0 0.0
  %2864 = vmatpush1.msra.mxu0 0.0
  %2865 = vmatprep.subr.mxu0 0.0
  %2866 = vmatpush1.msra.mxu0 0.0
  %2867 = vmatprep.subr.mxu0 0.0
  %2868 = vmatpush1.msra.mxu0 0.0
  %2869 = vmatprep.subr.mxu0 0.0
  %2870 = vmatpush1.msra.mxu0 0.0
  %2871 = vmatprep.subr.mxu0 0.0
  %2872 = vmatpush1.msra.mxu0 0.0
  %2873 = vmatprep.subr.mxu0 0.0
  %2874 = vmatpush1.msra.mxu0 0.0
  %2875 = vmatprep.subr.mxu0 0.0
  %2876 = vmatpush1.msra.mxu0 0.0
  %2877 = vmatprep.subr.mxu0 0.0
  %2878 = vmatpush1.msra.mxu0 0.0
  %2879 = vmatprep.subr.mxu0 0.0
  %2880 = vmatpush1.msra.mxu0 0.0
  %2881 = vmatprep.subr.mxu0 0.0
  %2882 = vmatpush1.msra.mxu0 0.0
  %2883 = vmatprep.subr.mxu0 0.0
  %2884 = vmatpush1.msra.mxu0 0.0
  %2885 = vmatprep.mubr.f32.mxu0 %v2726
  %2886 = vmatmul.mubr.f32.gmra.mrb[0].mxu0 %v2548
  %v2887 = vpop.f32.mrb[0].mxu0
  %v2888 = vadd.f32 0.0, %v2887
  %v2889 = vpop.f32.mrb[0].mxu0
  %2890 = vmatprep.mubr.f32.mxu0 %v2729
  %2891 = vmatmul.mubr.f32.gmra.mrb[0].mxu0 %v2552
  %v2892 = vpop.f32.mrb[0].mxu0
  %v2893 = vadd.f32 0.0, %v2892
  %v2894 = vpop.f32.mrb[0].mxu0
  %2895 = vmatprep.mubr.f32.mxu0 %v2732
  %2896 = vmatmul.mubr.f32.gmra.mrb[0].mxu0 %v2556
  %v2897 = vpop.f32.mrb[0].mxu0
  %v2898 = vadd.f32 0.0, %v2897
  %v2899 = vpop.f32.mrb[0].mxu0
  %2900 = vmatprep.mubr.f32.mxu0 %v2735
  %2901 = vmatmul.mubr.f32.gmra.mrb[0].mxu0 %v2560
  %v2902 = vpop.f32.mrb[0].mxu0
  %v2903 = vadd.f32 0.0, %v2902
  %v2904 = vpop.f32.mrb[0].mxu0
  %2905 = vmatprep.mubr.f32.mxu0 %v2738
  %2906 = vmatmul.mubr.f32.gmra.mrb[0].mxu0 %v2564
  %v2907 = vpop.f32.mrb[0].mxu0
  %v2908 = vadd.f32 0.0, %v2907
  %v2909 = vpop.f32.mrb[0].mxu0
  %2910 = vmatprep.mubr.f32.mxu0 %v2741
  %2911 = vmatmul.mubr.f32.gmra.mrb[0].mxu0 %v2568
  %v2912 = vpop.f32.mrb[0].mxu0
  %v2913 = vadd.f32 0.0, %v2912
  %v2914 = vpop.f32.mrb[0].mxu0
  %2915 = vmatprep.mubr.f32.mxu0 %v2744
  %2916 = vmatmul.mubr.f32.gmra.mrb[0].mxu0 %v2572
  %v2917 = vpop.f32.mrb[0].mxu0
  %v2918 = vadd.f32 0.0, %v2917
  %v2919 = vpop.f32.mrb[0].mxu0
  %2920 = vmatprep.mubr.f32.mxu0 %v2747
  %2921 = vmatmul.mubr.f32.gmra.mrb[0].mxu0 %v2576
  %v2922 = vpop.f32.mrb[0].mxu0
  %v2923 = vadd.f32 0.0, %v2922
  %v2924 = vpop.f32.mrb[0].mxu0
  %2925 = vmatprep.mubr.f32.mxu0 %v2750
  %2926 = vmatmul.mubr.f32.gmra.mrb[0].mxu0 %v2580
  %v2927 = vpop.f32.mrb[0].mxu0
  %v2928 = vadd.f32 0.0, %v2927
  %v2929 = vpop.f32.mrb[0].mxu0
  %2930 = vmatprep.mubr.f32.mxu0 %v2753
  %2931 = vmatmul.mubr.f32.gmra.mrb[0].mxu0 %v2584
  %v2932 = vpop.f32.mrb[0].mxu0
  %v2933 = vadd.f32 0.0, %v2932
  %v2934 = vpop.f32.mrb[0].mxu0
  %2935 = vmatprep.mubr.f32.mxu0 %v2756
  %2936 = vmatmul.mubr.f32.gmra.mrb[0].mxu0 %v2588
  %v2937 = vpop.f32.mrb[0].mxu0
  %v2938 = vadd.f32 0.0, %v2937
  %v2939 = vpop.f32.mrb[0].mxu0
  %2940 = vmatprep.mubr.f32.mxu0 %v2759
  %2941 = vmatmul.mubr.f32.gmra.mrb[0].mxu0 %v2592
  %v2942 = vpop.f32.mrb[0].mxu0
  %v2943 = vadd.f32 0.0, %v2942
  %v2944 = vpop.f32.mrb[0].mxu0
  %2945 = vmatprep.mubr.f32.mxu0 %v2762
  %2946 = vmatmul.mubr.f32.gmra.mrb[0].mxu0 %v2596
  %v2947 = vpop.f32.mrb[0].mxu0
  %v2948 = vadd.f32 0.0, %v2947
  %v2949 = vpop.f32.mrb[0].mxu0
  %2950 = vmatprep.mubr.f32.mxu0 %v2765
  %2951 = vmatmul.mubr.f32.gmra.mrb[0].mxu0 %v2600
  %v2952 = vpop.f32.mrb[0].mxu0
  %v2953 = vadd.f32 0.0, %v2952
  %v2954 = vpop.f32.mrb[0].mxu0
  %2955 = vmatprep.mubr.f32.mxu0 %v2768
  %2956 = vmatmul.mubr.f32.gmra.mrb[0].mxu0 %v2604
  %v2957 = vpop.f32.mrb[0].mxu0
  %v2958 = vadd.f32 0.0, %v2957
  %v2959 = vpop.f32.mrb[0].mxu0
  %2960 = vmatprep.mubr.f32.mxu0 %v2771
  %2961 = vmatmul.mubr.f32.gmra.mrb[0].mxu0 %v2608
  %v2962 = vpop.f32.mrb[0].mxu0
  %v2963 = vadd.f32 0.0, %v2962
  %v2964 = vpop.f32.mrb[0].mxu0
  %2965 = vmatprep.mubr.f32.mxu0 %v2774
  %2966 = vmatmul.mubr.f32.gmra.mrb[0].mxu0 %v2612
  %v2967 = vpop.f32.mrb[0].mxu0
  %v2968 = vadd.f32 0.0, %v2967
  %v2969 = vpop.f32.mrb[0].mxu0
  %2970 = vmatprep.mubr.f32.mxu0 %v2777
  %2971 = vmatmul.mubr.f32.gmra.mrb[0].mxu0 %v2616
  %v2972 = vpop.f32.mrb[0].mxu0
  %v2973 = vadd.f32 0.0, %v2972
  %v2974 = vpop.f32.mrb[0].mxu0
  %2975 = vmatprep.mubr.f32.mxu0 %v2780
  %2976 = vmatmul.mubr.f32.gmra.mrb[0].mxu0 %v2620
  %v2977 = vpop.f32.mrb[0].mxu0
  %v2978 = vadd.f32 0.0, %v2977
  %v2979 = vpop.f32.mrb[0].mxu0
  %2980 = vmatprep.mubr.f32.mxu0 %v2783
  %2981 = vmatmul.mubr.f32.gmra.mrb[0].mxu0 %v2624
  %v2982 = vpop.f32.mrb[0].mxu0
  %v2983 = vadd.f32 0.0, %v2982
  %v2984 = vpop.f32.mrb[0].mxu0
  %2985 = vmatprep.mubr.f32.mxu0 %v2786
  %2986 = vmatmul.mubr.f32.gmra.mrb[0].mxu0 %v2628
  %v2987 = vpop.f32.mrb[0].mxu0
  %v2988 = vadd.f32 0.0, %v2987
  %v2989 = vpop.f32.mrb[0].mxu0
  %2990 = vmatprep.mubr.f32.mxu0 %v2789
  %2991 = vmatmul.mubr.f32.gmra.mrb[0].mxu0 %v2632
  %v2992 = vpop.f32.mrb[0].mxu0
  %v2993 = vadd.f32 0.0, %v2992
  %v2994 = vpop.f32.mrb[0].mxu0
  %2995 = vmatprep.mubr.f32.mxu0 %v2792
  %2996 = vmatmul.mubr.f32.gmra.mrb[0].mxu0 %v2636
  %v2997 = vpop.f32.mrb[0].mxu0
  %v2998 = vadd.f32 0.0, %v2997
  %v2999 = vpop.f32.mrb[0].mxu0
  %3000 = vmatprep.mubr.f32.mxu0 %v2795
  %3001 = vmatmul.mubr.f32.gmra.mrb[0].mxu0 %v2640
  %v3002 = vpop.f32.mrb[0].mxu0
  %v3003 = vadd.f32 0.0, %v3002
  %v3004 = vpop.f32.mrb[0].mxu0
  %3005 = vmatprep.mubr.f32.mxu0 %v2798
  %3006 = vmatmul.mubr.f32.gmra.mrb[0].mxu0 %v2644
  %v3007 = vpop.f32.mrb[0].mxu0
  %v3008 = vadd.f32 0.0, %v3007
  %v3009 = vpop.f32.mrb[0].mxu0
  %3010 = vmatprep.mubr.f32.mxu0 %v2801
  %3011 = vmatmul.mubr.f32.gmra.mrb[0].mxu0 %v2648
  %v3012 = vpop.f32.mrb[0].mxu0
  %v3013 = vadd.f32 0.0, %v3012
  %v3014 = vpop.f32.mrb[0].mxu0
  %3015 = vmatprep.mubr.f32.mxu0 %v2804
  %3016 = vmatmul.mubr.f32.gmra.mrb[0].mxu0 %v2652
  %v3017 = vpop.f32.mrb[0].mxu0
  %v3018 = vadd.f32 0.0, %v3017
  %v3019 = vpop.f32.mrb[0].mxu0
  %3020 = vmatprep.mubr.f32.mxu0 %v2807
  %3021 = vmatmul.mubr.f32.gmra.mrb[0].mxu0 %v2656
  %v3022 = vpop.f32.mrb[0].mxu0
  %v3023 = vadd.f32 0.0, %v3022
  %v3024 = vpop.f32.mrb[0].mxu0
  %3025 = vmatprep.mubr.f32.mxu0 %v2810
  %3026 = vmatmul.mubr.f32.gmra.mrb[0].mxu0 %v2660
  %v3027 = vpop.f32.mrb[0].mxu0
  %v3028 = vadd.f32 0.0, %v3027
  %v3029 = vpop.f32.mrb[0].mxu0
  %3030 = vmatprep.mubr.f32.mxu0 %v2813
  %3031 = vmatmul.mubr.f32.gmra.mrb[0].mxu0 %v2664
  %v3032 = vpop.f32.mrb[0].mxu0
  %v3033 = vadd.f32 0.0, %v3032
  %v3034 = vpop.f32.mrb[0].mxu0
  %3035 = vmatprep.mubr.f32.mxu0 %v2816
  %3036 = vmatmul.mubr.f32.gmra.mrb[0].mxu0 %v2668
  %v3037 = vpop.f32.mrb[0].mxu0
  %v3038 = vadd.f32 0.0, %v3037
  %v3039 = vpop.f32.mrb[0].mxu0
  %3040 = vmatprep.mubr.f32.mxu0 %v2819
  %3041 = vmatmul.mubr.f32.gmra.mrb[0].mxu0 %v2672
  %v3042 = vpop.f32.mrb[0].mxu0
  %v3043 = vadd.f32 0.0, %v3042
  %v3044 = vpop.f32.mrb[0].mxu0
  %3045 = vdwg.mxu0
  %vm3046 = vcmask 1014784
  %v3048 = vsel %vm3046, %v2676, 0
  %v3051 = vsel %vm3046, %v2678, 0
  %v3054 = vsel %vm3046, %v2680, 0
  %v3057 = vsel %vm3046, %v2682, 0
  %v3060 = vsel %vm3046, %v2684, 0
  %v3063 = vsel %vm3046, %v2686, 0
  %v3066 = vsel %vm3046, %v2688, 0
  %v3069 = vsel %vm3046, %v2690, 0
  %v3072 = vsel %vm3046, %v2692, 0
  %v3075 = vsel %vm3046, %v2694, 0
  %v3078 = vsel %vm3046, %v2696, 0
  %v3081 = vsel %vm3046, %v2698, 0
  %v3084 = vsel %vm3046, %v2700, 0
  %v3087 = vsel %vm3046, %v2702, 0
  %vm3089 = vcmask 1043456
  %v3091 = vsel %vm3089, %v3043, 0
  %3093 = vmatprep.subr.mxu0 0.0
  %3094 = vmatpush1.msra.mxu0 %v2888
  %3095 = vmatprep.subr.mxu0 0.0
  %3096 = vmatpush1.msra.mxu0 %v2893
  %3097 = vmatprep.subr.mxu0 0.0
  %3098 = vmatpush1.msra.mxu0 %v2898
  %3099 = vmatprep.subr.mxu0 0.0
  %3100 = vmatpush1.msra.mxu0 %v2903
  %3101 = vmatprep.subr.mxu0 0.0
  %3102 = vmatpush1.msra.mxu0 %v2908
  %3103 = vmatprep.subr.mxu0 0.0
  %3104 = vmatpush1.msra.mxu0 %v2913
  %3105 = vmatprep.subr.mxu0 0.0
  %3106 = vmatpush1.msra.mxu0 %v2918
  %3107 = vmatprep.subr.mxu0 0.0
  %3108 = vmatpush1.msra.mxu0 %v2923
  %3109 = vmatprep.subr.mxu0 0.0
  %3110 = vmatpush1.msra.mxu0 %v2928
  %3111 = vmatprep.subr.mxu0 0.0
  %3112 = vmatpush1.msra.mxu0 %v2933
  %3113 = vmatprep.subr.mxu0 0.0
  %3114 = vmatpush1.msra.mxu0 %v2938
  %3115 = vmatprep.subr.mxu0 0.0
  %3116 = vmatpush1.msra.mxu0 %v2943
  %3117 = vmatprep.subr.mxu0 0.0
  %3118 = vmatpush1.msra.mxu0 %v2948
  %3119 = vmatprep.subr.mxu0 0.0
  %3120 = vmatpush1.msra.mxu0 %v2953
  %3121 = vmatprep.subr.mxu0 0.0
  %3122 = vmatpush1.msra.mxu0 %v2958
  %3123 = vmatprep.subr.mxu0 0.0
  %3124 = vmatpush1.msra.mxu0 %v2963
  %3125 = vmatprep.subr.mxu0 0.0
  %3126 = vmatpush1.msra.mxu0 %v2968
  %3127 = vmatprep.subr.mxu0 0.0
  %3128 = vmatpush1.msra.mxu0 %v2973
  %3129 = vmatprep.subr.mxu0 0.0
  %3130 = vmatpush1.msra.mxu0 %v2978
  %3131 = vmatprep.subr.mxu0 0.0
  %3132 = vmatpush1.msra.mxu0 %v2983
  %3133 = vmatprep.subr.mxu0 0.0
  %3134 = vmatpush1.msra.mxu0 %v2988
  %3135 = vmatprep.subr.mxu0 0.0
  %3136 = vmatpush1.msra.mxu0 %v2993
  %3137 = vmatprep.subr.mxu0 0.0
  %3138 = vmatpush1.msra.mxu0 %v2998
  %3139 = vmatprep.subr.mxu0 0.0
  %3140 = vmatpush1.msra.mxu0 %v3003
  %3141 = vmatprep.subr.mxu0 0.0
  %3142 = vmatpush1.msra.mxu0 %v3008
  %3143 = vmatprep.subr.mxu0 0.0
  %3144 = vmatpush1.msra.mxu0 %v3013
  %3145 = vmatprep.subr.mxu0 0.0
  %3146 = vmatpush1.msra.mxu0 %v3018
  %3147 = vmatprep.subr.mxu0 0.0
  %3148 = vmatpush1.msra.mxu0 %v3023
  %3149 = vmatprep.subr.mxu0 0.0
  %3150 = vmatpush1.msra.mxu0 %v3028
  %3151 = vmatprep.subr.mxu0 0.0
  %3152 = vmatpush1.msra.mxu0 %v3033
  %3153 = vmatprep.subr.mxu0 0.0
  %3154 = vmatpush1.msra.mxu0 %v3038
  %3155 = vmatprep.subr.mxu0 0.0
  %3156 = vmatpush1.msra.mxu0 %v3091
  %3157 = vmatprep.mubr.f32.mxu0 %v3048
  %3158 = vmatmul.mubr.f32.gmra.mrb[0].mxu0 %v2675
  %v3159 = vpop.f32.mrb[0].mxu0
  %v3160 = vadd.f32 0.0, %v3159
  %v3161 = vpop.f32.mrb[0].mxu0
  %3162 = vmatprep.mubr.f32.mxu0 %v3051
  %3163 = vmatmul.mubr.f32.gmra.mrb[0].mxu0 %v2677
  %v3164 = vpop.f32.mrb[0].mxu0
  %v3165 = vadd.f32 0.0, %v3164
  %v3166 = vpop.f32.mrb[0].mxu0
  %3167 = vmatprep.mubr.f32.mxu0 %v3054
  %3168 = vmatmul.mubr.f32.gmra.mrb[0].mxu0 %v2679
  %v3169 = vpop.f32.mrb[0].mxu0
  %v3170 = vadd.f32 0.0, %v3169
  %v3171 = vpop.f32.mrb[0].mxu0
  %3172 = vmatprep.mubr.f32.mxu0 %v3057
  %3173 = vmatmul.mubr.f32.gmra.mrb[0].mxu0 %v2681
  %v3174 = vpop.f32.mrb[0].mxu0
  %v3175 = vadd.f32 0.0, %v3174
  %v3176 = vpop.f32.mrb[0].mxu0
  %3177 = vmatprep.mubr.f32.mxu0 %v3060
  %3178 = vmatmul.mubr.f32.gmra.mrb[0].mxu0 %v2683
  %v3179 = vpop.f32.mrb[0].mxu0
  %v3180 = vadd.f32 0.0, %v3179
  %v3181 = vpop.f32.mrb[0].mxu0
  %3182 = vmatprep.mubr.f32.mxu0 %v3063
  %3183 = vmatmul.mubr.f32.gmra.mrb[0].mxu0 %v2685
  %v3184 = vpop.f32.mrb[0].mxu0
  %v3185 = vadd.f32 0.0, %v3184
  %v3186 = vpop.f32.mrb[0].mxu0
  %3187 = vmatprep.mubr.f32.mxu0 %v3066
  %3188 = vmatmul.mubr.f32.gmra.mrb[0].mxu0 %v2687
  %v3189 = vpop.f32.mrb[0].mxu0
  %v3190 = vadd.f32 0.0, %v3189
  %v3191 = vpop.f32.mrb[0].mxu0
  %3192 = vmatprep.mubr.f32.mxu0 %v3069
  %3193 = vmatmul.mubr.f32.gmra.mrb[0].mxu0 %v2689
  %v3194 = vpop.f32.mrb[0].mxu0
  %v3195 = vadd.f32 0.0, %v3194
  %v3196 = vpop.f32.mrb[0].mxu0
  %3197 = vmatprep.mubr.f32.mxu0 %v3072
  %3198 = vmatmul.mubr.f32.gmra.mrb[0].mxu0 %v2691
  %v3199 = vpop.f32.mrb[0].mxu0
  %v3200 = vadd.f32 0.0, %v3199
  %v3201 = vpop.f32.mrb[0].mxu0
  %3202 = vmatprep.mubr.f32.mxu0 %v3075
  %3203 = vmatmul.mubr.f32.gmra.mrb[0].mxu0 %v2693
  %v3204 = vpop.f32.mrb[0].mxu0
  %v3205 = vadd.f32 0.0, %v3204
  %v3206 = vpop.f32.mrb[0].mxu0
  %3207 = vmatprep.mubr.f32.mxu0 %v3078
  %3208 = vmatmul.mubr.f32.gmra.mrb[0].mxu0 %v2695
  %v3209 = vpop.f32.mrb[0].mxu0
  %v3210 = vadd.f32 0.0, %v3209
  %v3211 = vpop.f32.mrb[0].mxu0
  %3212 = vmatprep.mubr.f32.mxu0 %v3081
  %3213 = vmatmul.mubr.f32.gmra.mrb[0].mxu0 %v2697
  %v3214 = vpop.f32.mrb[0].mxu0
  %v3215 = vadd.f32 0.0, %v3214
  %v3216 = vpop.f32.mrb[0].mxu0
  %3217 = vmatprep.mubr.f32.mxu0 %v3084
  %3218 = vmatmul.mubr.f32.gmra.mrb[0].mxu0 %v2699
  %v3219 = vpop.f32.mrb[0].mxu0
  %v3220 = vadd.f32 0.0, %v3219
  %v3221 = vpop.f32.mrb[0].mxu0
  %3222 = vmatprep.mubr.f32.mxu0 %v3087
  %3223 = vmatmul.mubr.f32.gmra.mrb[0].mxu0 %v2701
  %v3224 = vpop.f32.mrb[0].mxu0
  %v3225 = vadd.f32 0.0, %v3224
  %v3226 = vpop.f32.mrb[0].mxu0
  %3227 = vdwg.mxu0
  %vm3228 = vcmask 687104
  %3229 = vst.msk [vmem:[#allocation2] sm:$0xff] %vm3228, %v3160
  %3230 = vst.msk [vmem:[#allocation2 + $0x8] sm:$0xff] %vm3228, %v3165
  %3231 = vst.msk [vmem:[#allocation2 + $0x10] sm:$0xff] %vm3228, %v3170
  %3232 = vst.msk [vmem:[#allocation2 + $0x18] sm:$0xff] %vm3228, %v3175
  %3233 = vst.msk [vmem:[#allocation2 + $0x20] sm:$0xff] %vm3228, %v3180
  %3234 = vst.msk [vmem:[#allocation2 + $0x28] sm:$0xff] %vm3228, %v3185
  %3235 = vst.msk [vmem:[#allocation2 + $0x30] sm:$0xff] %vm3228, %v3190
  %3236 = vst.msk [vmem:[#allocation2 + $0x38] sm:$0xff] %vm3228, %v3195
  %3237 = vst.msk [vmem:[#allocation2 + $0x40] sm:$0xff] %vm3228, %v3200
  %3238 = vst.msk [vmem:[#allocation2 + $0x48] sm:$0xff] %vm3228, %v3205
  %3239 = vst.msk [vmem:[#allocation2 + $0x50] sm:$0xff] %vm3228, %v3210
  %3240 = vst.msk [vmem:[#allocation2 + $0x58] sm:$0xff] %vm3228, %v3215
  %3241 = vst.msk [vmem:[#allocation2 + $0x60] sm:$0xff] %vm3228, %v3220
  %3242 = vst.msk [vmem:[#allocation2 + $0x68] sm:$0xff] %vm3228, %v3225
  %v3243 = vld [vmem:[#allocation2] sm:$0xff]
  %v3244 = vld [vmem:[#allocation2 + $0x8] sm:$0xff]
  %v3245 = vld [vmem:[#allocation2 + $0x10] sm:$0xff]
  %v3246 = vld [vmem:[#allocation2 + $0x18] sm:$0xff]
  %v3247 = vld [vmem:[#allocation2 + $0x20] sm:$0xff]
  %v3248 = vld [vmem:[#allocation2 + $0x28] sm:$0xff]
  %v3249 = vld [vmem:[#allocation2 + $0x30] sm:$0xff]
  %v3250 = vld [vmem:[#allocation2 + $0x38] sm:$0xff]
  %v3251 = vld [vmem:[#allocation2 + $0x40] sm:$0xff]
  %v3252 = vld [vmem:[#allocation2 + $0x48] sm:$0xff]
  %v3253 = vld [vmem:[#allocation2 + $0x50] sm:$0xff]
  %v3254 = vld [vmem:[#allocation2 + $0x58] sm:$0xff]
  %v3255 = vld [vmem:[#allocation2 + $0x60] sm:$0xff]
  %v3256 = vld [vmem:[#allocation2 + $0x68] sm:$0xf]
  %v3257 = vld [vmem:[%s5] sm:$0xff]
  %v3258 = vld [vmem:[%s5 + $0x8] sm:$0xff]
  %v3259 = vld [vmem:[%s5 + $0x10] sm:$0xff]
  %v3260 = vld [vmem:[%s5 + $0x18] sm:$0xff]
  %v3261 = vld [vmem:[%s5 + $0x20] sm:$0xff]
  %v3262 = vld [vmem:[%s5 + $0x28] sm:$0xff]
  %v3263 = vld [vmem:[%s5 + $0x30] sm:$0xff]
  %v3264 = vld [vmem:[%s5 + $0x38] sm:$0xff]
  %v3265 = vld [vmem:[%s5 + $0x40] sm:$0xff]
  %v3266 = vld [vmem:[%s5 + $0x48] sm:$0xff]
  %v3267 = vld [vmem:[%s5 + $0x50] sm:$0xff]
  %v3268 = vld [vmem:[%s5 + $0x58] sm:$0xff]
  %v3269 = vld [vmem:[%s5 + $0x60] sm:$0xff]
  %v3270 = vld [vmem:[%s5 + $0x68] sm:$0xff]
  %v3271 = vld [vmem:[%s5 + $0x70] sm:$0xff]
  %v3272 = vld [vmem:[%s5 + $0x78] sm:$0xff]
  %v3273 = vld [vmem:[%s5 + $0x80] sm:$0xff]
  %v3274 = vld [vmem:[%s5 + $0x88] sm:$0xff]
  %v3275 = vld [vmem:[%s5 + $0x90] sm:$0xff]
  %v3276 = vld [vmem:[%s5 + $0x98] sm:$0xff]
  %v3277 = vld [vmem:[%s5 + $0xa0] sm:$0xf]
  %v3278 = vld [vmem:[%s5 + $0xa8] sm:$0xf]
  %v3279 = vld [vmem:[#allocation2 + $0x1] sm:$0xff]
  %v3280 = vld [vmem:[#allocation2 + $0x9] sm:$0xff]
  %v3281 = vld [vmem:[#allocation2 + $0x11] sm:$0xff]
  %v3282 = vld [vmem:[#allocation2 + $0x19] sm:$0xff]
  %v3283 = vld [vmem:[#allocation2 + $0x21] sm:$0xff]
  %v3284 = vld [vmem:[#allocation2 + $0x29] sm:$0xff]
  %v3285 = vld [vmem:[#allocation2 + $0x31] sm:$0xff]
  %v3286 = vld [vmem:[#allocation2 + $0x39] sm:$0xff]
  %v3287 = vld [vmem:[#allocation2 + $0x41] sm:$0xff]
  %v3288 = vld [vmem:[#allocation2 + $0x49] sm:$0xff]
  %v3289 = vld [vmem:[#allocation2 + $0x51] sm:$0xff]
  %v3290 = vld [vmem:[#allocation2 + $0x59] sm:$0xff]
  %v3291 = vld [vmem:[#allocation2 + $0x61] sm:$0xff]
  %v3292 = vld [vmem:[#allocation2 + $0x69] sm:$0xf]
  %s3293 = scalar_lea.vmem %s5, 176
  %v3294 = vld [vmem:[%s3293] sm:$0xff]
  %v3295 = vld [vmem:[%s3293 + $0x8] sm:$0xff]
  %v3296 = vld [vmem:[%s3293 + $0x10] sm:$0xff]
  %v3297 = vld [vmem:[%s3293 + $0x18] sm:$0xff]
  %v3298 = vld [vmem:[%s3293 + $0x20] sm:$0xff]
  %v3299 = vld [vmem:[%s3293 + $0x28] sm:$0xff]
  %v3300 = vld [vmem:[%s3293 + $0x30] sm:$0xff]
  %v3301 = vld [vmem:[%s3293 + $0x38] sm:$0xff]
  %v3302 = vld [vmem:[%s3293 + $0x40] sm:$0xff]
  %v3303 = vld [vmem:[%s3293 + $0x48] sm:$0xff]
  %v3304 = vld [vmem:[%s3293 + $0x50] sm:$0xff]
  %v3305 = vld [vmem:[%s3293 + $0x58] sm:$0xff]
  %v3306 = vld [vmem:[%s3293 + $0x60] sm:$0xff]
  %v3307 = vld [vmem:[%s3293 + $0x68] sm:$0xff]
  %v3308 = vld [vmem:[%s3293 + $0x70] sm:$0xff]
  %v3309 = vld [vmem:[%s3293 + $0x78] sm:$0xff]
  %v3310 = vld [vmem:[%s3293 + $0x80] sm:$0xff]
  %v3311 = vld [vmem:[%s3293 + $0x88] sm:$0xff]
  %v3312 = vld [vmem:[%s3293 + $0x90] sm:$0xff]
  %v3313 = vld [vmem:[%s3293 + $0x98] sm:$0xff]
  %v3314 = vld [vmem:[%s3293 + $0xa0] sm:$0xf]
  %v3315 = vld [vmem:[%s3293 + $0xa8] sm:$0xf]
  %v3317 = vsel %vm3228, %v3279, 0
  %v3320 = vsel %vm3228, %v3280, 0
  %v3323 = vsel %vm3228, %v3281, 0
  %v3326 = vsel %vm3228, %v3282, 0
  %v3329 = vsel %vm3228, %v3283, 0
  %v3332 = vsel %vm3228, %v3284, 0
  %v3335 = vsel %vm3228, %v3285, 0
  %v3338 = vsel %vm3228, %v3286, 0
  %v3341 = vsel %vm3228, %v3287, 0
  %v3344 = vsel %vm3228, %v3288, 0
  %v3347 = vsel %vm3228, %v3289, 0
  %v3350 = vsel %vm3228, %v3290, 0
  %v3353 = vsel %vm3228, %v3291, 0
  %v3356 = vsel %vm3228, %v3292, 0
  %v3359 = vsel %vm3089, %v3314, 0
  %v3362 = vsel %vm3089, %v3315, 0
  %3364 = vmatprep.subr.mxu0 %v3295
  %3365 = vmatpush1.msra.mxu0 %v3294
  %3366 = vmatprep.subr.mxu0 %v3297
  %3367 = vmatpush1.msra.mxu0 %v3296
  %3368 = vmatprep.subr.mxu0 %v3299
  %3369 = vmatpush1.msra.mxu0 %v3298
  %3370 = vmatprep.subr.mxu0 %v3301
  %3371 = vmatpush1.msra.mxu0 %v3300
  %3372 = vmatprep.subr.mxu0 %v3303
  %3373 = vmatpush1.msra.mxu0 %v3302
  %3374 = vmatprep.subr.mxu0 %v3305
  %3375 = vmatpush1.msra.mxu0 %v3304
  %3376 = vmatprep.subr.mxu0 %v3307
  %3377 = vmatpush1.msra.mxu0 %v3306
  %3378 = vmatprep.subr.mxu0 %v3309
  %3379 = vmatpush1.msra.mxu0 %v3308
  %3380 = vmatprep.subr.mxu0 %v3311
  %3381 = vmatpush1.msra.mxu0 %v3310
  %3382 = vmatprep.subr.mxu0 %v3313
  %3383 = vmatpush1.msra.mxu0 %v3312
  %3384 = vmatprep.subr.mxu0 %v3362
  %3385 = vmatpush1.msra.mxu0 %v3359
  %3386 = vmatprep.subr.mxu0 0.0
  %3387 = vmatpush1.msra.mxu0 0.0
  %3388 = vmatprep.subr.mxu0 0.0
  %3389 = vmatpush1.msra.mxu0 0.0
  %3390 = vmatprep.subr.mxu0 0.0
  %3391 = vmatpush1.msra.mxu0 0.0
  %3392 = vmatprep.subr.mxu0 0.0
  %3393 = vmatpush1.msra.mxu0 0.0
  %3394 = vmatprep.subr.mxu0 0.0
  %3395 = vmatpush1.msra.mxu0 0.0
  %3396 = vmatprep.subr.mxu0 0.0
  %3397 = vmatpush1.msra.mxu0 0.0
  %3398 = vmatprep.subr.mxu0 0.0
  %3399 = vmatpush1.msra.mxu0 0.0
  %3400 = vmatprep.subr.mxu0 0.0
  %3401 = vmatpush1.msra.mxu0 0.0
  %3402 = vmatprep.subr.mxu0 0.0
  %3403 = vmatpush1.msra.mxu0 0.0
  %3404 = vmatprep.subr.mxu0 0.0
  %3405 = vmatpush1.msra.mxu0 0.0
  %3406 = vmatprep.subr.mxu0 0.0
  %3407 = vmatpush1.msra.mxu0 0.0
  %3408 = vmatprep.subr.mxu0 0.0
  %3409 = vmatpush1.msra.mxu0 0.0
  %3410 = vmatprep.subr.mxu0 0.0
  %3411 = vmatpush1.msra.mxu0 0.0
  %3412 = vmatprep.subr.mxu0 0.0
  %3413 = vmatpush1.msra.mxu0 0.0
  %3414 = vmatprep.subr.mxu0 0.0
  %3415 = vmatpush1.msra.mxu0 0.0
  %3416 = vmatprep.subr.mxu0 0.0
  %3417 = vmatpush1.msra.mxu0 0.0
  %3418 = vmatprep.subr.mxu0 0.0
  %3419 = vmatpush1.msra.mxu0 0.0
  %3420 = vmatprep.subr.mxu0 0.0
  %3421 = vmatpush1.msra.mxu0 0.0
  %3422 = vmatprep.subr.mxu0 0.0
  %3423 = vmatpush1.msra.mxu0 0.0
  %3424 = vmatprep.subr.mxu0 0.0
  %3425 = vmatpush1.msra.mxu0 0.0
  %3426 = vmatprep.subr.mxu0 0.0
  %3427 = vmatpush1.msra.mxu0 0.0
  %3428 = vmatprep.mubr.f32.mxu0 0.0
  %3429 = vmatmul.mubr.f32.gmra.mrb[0].mxu0 %v3317
  %v3430 = vpop.f32.mrb[0].mxu0
  %v3431 = vadd.f32 0.0, %v3430
  %v3432 = vpop.f32.mrb[0].mxu0
  %v3433 = vadd.f32 0.0, %v3432
  %3434 = vmatprep.mubr.f32.mxu0 0.0
  %3435 = vmatmul.mubr.f32.gmra.mrb[0].mxu0 %v3320
  %v3436 = vpop.f32.mrb[0].mxu0
  %v3437 = vadd.f32 0.0, %v3436
  %v3438 = vpop.f32.mrb[0].mxu0
  %v3439 = vadd.f32 0.0, %v3438
  %3440 = vmatprep.mubr.f32.mxu0 0.0
  %3441 = vmatmul.mubr.f32.gmra.mrb[0].mxu0 %v3323
  %v3442 = vpop.f32.mrb[0].mxu0
  %v3443 = vadd.f32 0.0, %v3442
  %v3444 = vpop.f32.mrb[0].mxu0
  %v3445 = vadd.f32 0.0, %v3444
  %3446 = vmatprep.mubr.f32.mxu0 0.0
  %3447 = vmatmul.mubr.f32.gmra.mrb[0].mxu0 %v3326
  %v3448 = vpop.f32.mrb[0].mxu0
  %v3449 = vadd.f32 0.0, %v3448
  %v3450 = vpop.f32.mrb[0].mxu0
  %v3451 = vadd.f32 0.0, %v3450
  %3452 = vmatprep.mubr.f32.mxu0 0.0
  %3453 = vmatmul.mubr.f32.gmra.mrb[0].mxu0 %v3329
  %v3454 = vpop.f32.mrb[0].mxu0
  %v3455 = vadd.f32 0.0, %v3454
  %v3456 = vpop.f32.mrb[0].mxu0
  %v3457 = vadd.f32 0.0, %v3456
  %3458 = vmatprep.mubr.f32.mxu0 0.0
  %3459 = vmatmul.mubr.f32.gmra.mrb[0].mxu0 %v3332
  %v3460 = vpop.f32.mrb[0].mxu0
  %v3461 = vadd.f32 0.0, %v3460
  %v3462 = vpop.f32.mrb[0].mxu0
  %v3463 = vadd.f32 0.0, %v3462
  %3464 = vmatprep.mubr.f32.mxu0 0.0
  %3465 = vmatmul.mubr.f32.gmra.mrb[0].mxu0 %v3335
  %v3466 = vpop.f32.mrb[0].mxu0
  %v3467 = vadd.f32 0.0, %v3466
  %v3468 = vpop.f32.mrb[0].mxu0
  %v3469 = vadd.f32 0.0, %v3468
  %3470 = vmatprep.mubr.f32.mxu0 0.0
  %3471 = vmatmul.mubr.f32.gmra.mrb[0].mxu0 %v3338
  %v3472 = vpop.f32.mrb[0].mxu0
  %v3473 = vadd.f32 0.0, %v3472
  %v3474 = vpop.f32.mrb[0].mxu0
  %v3475 = vadd.f32 0.0, %v3474
  %3476 = vmatprep.mubr.f32.mxu0 0.0
  %3477 = vmatmul.mubr.f32.gmra.mrb[0].mxu0 %v3341
  %v3478 = vpop.f32.mrb[0].mxu0
  %v3479 = vadd.f32 0.0, %v3478
  %v3480 = vpop.f32.mrb[0].mxu0
  %v3481 = vadd.f32 0.0, %v3480
  %3482 = vmatprep.mubr.f32.mxu0 0.0
  %3483 = vmatmul.mubr.f32.gmra.mrb[0].mxu0 %v3344
  %v3484 = vpop.f32.mrb[0].mxu0
  %v3485 = vadd.f32 0.0, %v3484
  %v3486 = vpop.f32.mrb[0].mxu0
  %v3487 = vadd.f32 0.0, %v3486
  %3488 = vmatprep.mubr.f32.mxu0 0.0
  %3489 = vmatmul.mubr.f32.gmra.mrb[0].mxu0 %v3347
  %v3490 = vpop.f32.mrb[0].mxu0
  %v3491 = vadd.f32 0.0, %v3490
  %v3492 = vpop.f32.mrb[0].mxu0
  %v3493 = vadd.f32 0.0, %v3492
  %3494 = vmatprep.mubr.f32.mxu0 0.0
  %3495 = vmatmul.mubr.f32.gmra.mrb[0].mxu0 %v3350
  %v3496 = vpop.f32.mrb[0].mxu0
  %v3497 = vadd.f32 0.0, %v3496
  %v3498 = vpop.f32.mrb[0].mxu0
  %v3499 = vadd.f32 0.0, %v3498
  %3500 = vmatprep.mubr.f32.mxu0 0.0
  %3501 = vmatmul.mubr.f32.gmra.mrb[0].mxu0 %v3353
  %v3502 = vpop.f32.mrb[0].mxu0
  %v3503 = vadd.f32 0.0, %v3502
  %v3504 = vpop.f32.mrb[0].mxu0
  %v3505 = vadd.f32 0.0, %v3504
  %3506 = vmatprep.mubr.f32.mxu0 0.0
  %3507 = vmatmul.mubr.f32.gmra.mrb[0].mxu0 %v3356
  %v3508 = vpop.f32.mrb[0].mxu0
  %v3509 = vadd.f32 0.0, %v3508
  %v3510 = vpop.f32.mrb[0].mxu0
  %v3511 = vadd.f32 0.0, %v3510
  %3512 = vdwg.mxu0
  %v3514 = vsel %vm3228, %v3243, 0
  %v3517 = vsel %vm3228, %v3244, 0
  %v3520 = vsel %vm3228, %v3245, 0
  %v3523 = vsel %vm3228, %v3246, 0
  %v3526 = vsel %vm3228, %v3247, 0
  %v3529 = vsel %vm3228, %v3248, 0
  %v3532 = vsel %vm3228, %v3249, 0
  %v3535 = vsel %vm3228, %v3250, 0
  %v3538 = vsel %vm3228, %v3251, 0
  %v3541 = vsel %vm3228, %v3252, 0
  %v3544 = vsel %vm3228, %v3253, 0
  %v3547 = vsel %vm3228, %v3254, 0
  %v3550 = vsel %vm3228, %v3255, 0
  %v3553 = vsel %vm3228, %v3256, 0
  %v3556 = vsel %vm3089, %v3277, 0
  %v3559 = vsel %vm3089, %v3278, 0
  %3561 = vmatprep.subr.mxu0 %v3258
  %3562 = vmatpush1.msra.mxu0 %v3257
  %3563 = vmatprep.subr.mxu0 %v3260
  %3564 = vmatpush1.msra.mxu0 %v3259
  %3565 = vmatprep.subr.mxu0 %v3262
  %3566 = vmatpush1.msra.mxu0 %v3261
  %3567 = vmatprep.subr.mxu0 %v3264
  %3568 = vmatpush1.msra.mxu0 %v3263
  %3569 = vmatprep.subr.mxu0 %v3266
  %3570 = vmatpush1.msra.mxu0 %v3265
  %3571 = vmatprep.subr.mxu0 %v3268
  %3572 = vmatpush1.msra.mxu0 %v3267
  %3573 = vmatprep.subr.mxu0 %v3270
  %3574 = vmatpush1.msra.mxu0 %v3269
  %3575 = vmatprep.subr.mxu0 %v3272
  %3576 = vmatpush1.msra.mxu0 %v3271
  %3577 = vmatprep.subr.mxu0 %v3274
  %3578 = vmatpush1.msra.mxu0 %v3273
  %3579 = vmatprep.subr.mxu0 %v3276
  %3580 = vmatpush1.msra.mxu0 %v3275
  %3581 = vmatprep.subr.mxu0 %v3559
  %3582 = vmatpush1.msra.mxu0 %v3556
  %3583 = vmatprep.subr.mxu0 0.0
  %3584 = vmatpush1.msra.mxu0 0.0
  %3585 = vmatprep.subr.mxu0 0.0
  %3586 = vmatpush1.msra.mxu0 0.0
  %3587 = vmatprep.subr.mxu0 0.0
  %3588 = vmatpush1.msra.mxu0 0.0
  %3589 = vmatprep.subr.mxu0 0.0
  %3590 = vmatpush1.msra.mxu0 0.0
  %3591 = vmatprep.subr.mxu0 0.0
  %3592 = vmatpush1.msra.mxu0 0.0
  %3593 = vmatprep.subr.mxu0 0.0
  %3594 = vmatpush1.msra.mxu0 0.0
  %3595 = vmatprep.subr.mxu0 0.0
  %3596 = vmatpush1.msra.mxu0 0.0
  %3597 = vmatprep.subr.mxu0 0.0
  %3598 = vmatpush1.msra.mxu0 0.0
  %3599 = vmatprep.subr.mxu0 0.0
  %3600 = vmatpush1.msra.mxu0 0.0
  %3601 = vmatprep.subr.mxu0 0.0
  %3602 = vmatpush1.msra.mxu0 0.0
  %3603 = vmatprep.subr.mxu0 0.0
  %3604 = vmatpush1.msra.mxu0 0.0
  %3605 = vmatprep.subr.mxu0 0.0
  %3606 = vmatpush1.msra.mxu0 0.0
  %3607 = vmatprep.subr.mxu0 0.0
  %3608 = vmatpush1.msra.mxu0 0.0
  %3609 = vmatprep.subr.mxu0 0.0
  %3610 = vmatpush1.msra.mxu0 0.0
  %3611 = vmatprep.subr.mxu0 0.0
  %3612 = vmatpush1.msra.mxu0 0.0
  %3613 = vmatprep.subr.mxu0 0.0
  %3614 = vmatpush1.msra.mxu0 0.0
  %3615 = vmatprep.subr.mxu0 0.0
  %3616 = vmatpush1.msra.mxu0 0.0
  %3617 = vmatprep.subr.mxu0 0.0
  %3618 = vmatpush1.msra.mxu0 0.0
  %3619 = vmatprep.subr.mxu0 0.0
  %3620 = vmatpush1.msra.mxu0 0.0
  %3621 = vmatprep.subr.mxu0 0.0
  %3622 = vmatpush1.msra.mxu0 0.0
  %3623 = vmatprep.subr.mxu0 0.0
  %3624 = vmatpush1.msra.mxu0 0.0
  %3625 = vmatprep.mubr.f32.mxu0 0.0
  %3626 = vmatmul.mubr.f32.gmra.mrb[0].mxu0 %v3514
  %v3627 = vpop.f32.mrb[0].mxu0
  %v3628 = vadd.f32 %v3431, %v3627
  %v3629 = vpop.f32.mrb[0].mxu0
  %v3630 = vadd.f32 %v3433, %v3629
  %3631 = vmatprep.mubr.f32.mxu0 0.0
  %3632 = vmatmul.mubr.f32.gmra.mrb[0].mxu0 %v3517
  %v3633 = vpop.f32.mrb[0].mxu0
  %v3634 = vadd.f32 %v3437, %v3633
  %v3635 = vpop.f32.mrb[0].mxu0
  %v3636 = vadd.f32 %v3439, %v3635
  %3637 = vmatprep.mubr.f32.mxu0 0.0
  %3638 = vmatmul.mubr.f32.gmra.mrb[0].mxu0 %v3520
  %v3639 = vpop.f32.mrb[0].mxu0
  %v3640 = vadd.f32 %v3443, %v3639
  %v3641 = vpop.f32.mrb[0].mxu0
  %v3642 = vadd.f32 %v3445, %v3641
  %3643 = vmatprep.mubr.f32.mxu0 0.0
  %3644 = vmatmul.mubr.f32.gmra.mrb[0].mxu0 %v3523
  %v3645 = vpop.f32.mrb[0].mxu0
  %v3646 = vadd.f32 %v3449, %v3645
  %v3647 = vpop.f32.mrb[0].mxu0
  %v3648 = vadd.f32 %v3451, %v3647
  %3649 = vmatprep.mubr.f32.mxu0 0.0
  %3650 = vmatmul.mubr.f32.gmra.mrb[0].mxu0 %v3526
  %v3651 = vpop.f32.mrb[0].mxu0
  %v3652 = vadd.f32 %v3455, %v3651
  %v3653 = vpop.f32.mrb[0].mxu0
  %v3654 = vadd.f32 %v3457, %v3653
  %3655 = vmatprep.mubr.f32.mxu0 0.0
  %3656 = vmatmul.mubr.f32.gmra.mrb[0].mxu0 %v3529
  %v3657 = vpop.f32.mrb[0].mxu0
  %v3658 = vadd.f32 %v3461, %v3657
  %v3659 = vpop.f32.mrb[0].mxu0
  %v3660 = vadd.f32 %v3463, %v3659
  %3661 = vmatprep.mubr.f32.mxu0 0.0
  %3662 = vmatmul.mubr.f32.gmra.mrb[0].mxu0 %v3532
  %v3663 = vpop.f32.mrb[0].mxu0
  %v3664 = vadd.f32 %v3467, %v3663
  %v3665 = vpop.f32.mrb[0].mxu0
  %v3666 = vadd.f32 %v3469, %v3665
  %3667 = vmatprep.mubr.f32.mxu0 0.0
  %3668 = vmatmul.mubr.f32.gmra.mrb[0].mxu0 %v3535
  %v3669 = vpop.f32.mrb[0].mxu0
  %v3670 = vadd.f32 %v3473, %v3669
  %v3671 = vpop.f32.mrb[0].mxu0
  %v3672 = vadd.f32 %v3475, %v3671
  %3673 = vmatprep.mubr.f32.mxu0 0.0
  %3674 = vmatmul.mubr.f32.gmra.mrb[0].mxu0 %v3538
  %v3675 = vpop.f32.mrb[0].mxu0
  %v3676 = vadd.f32 %v3479, %v3675
  %v3677 = vpop.f32.mrb[0].mxu0
  %v3678 = vadd.f32 %v3481, %v3677
  %3679 = vmatprep.mubr.f32.mxu0 0.0
  %3680 = vmatmul.mubr.f32.gmra.mrb[0].mxu0 %v3541
  %v3681 = vpop.f32.mrb[0].mxu0
  %v3682 = vadd.f32 %v3485, %v3681
  %v3683 = vpop.f32.mrb[0].mxu0
  %v3684 = vadd.f32 %v3487, %v3683
  %3685 = vmatprep.mubr.f32.mxu0 0.0
  %3686 = vmatmul.mubr.f32.gmra.mrb[0].mxu0 %v3544
  %v3687 = vpop.f32.mrb[0].mxu0
  %v3688 = vadd.f32 %v3491, %v3687
  %v3689 = vpop.f32.mrb[0].mxu0
  %v3690 = vadd.f32 %v3493, %v3689
  %3691 = vmatprep.mubr.f32.mxu0 0.0
  %3692 = vmatmul.mubr.f32.gmra.mrb[0].mxu0 %v3547
  %v3693 = vpop.f32.mrb[0].mxu0
  %v3694 = vadd.f32 %v3497, %v3693
  %v3695 = vpop.f32.mrb[0].mxu0
  %v3696 = vadd.f32 %v3499, %v3695
  %3697 = vmatprep.mubr.f32.mxu0 0.0
  %3698 = vmatmul.mubr.f32.gmra.mrb[0].mxu0 %v3550
  %v3699 = vpop.f32.mrb[0].mxu0
  %v3700 = vadd.f32 %v3503, %v3699
  %v3701 = vpop.f32.mrb[0].mxu0
  %v3702 = vadd.f32 %v3505, %v3701
  %3703 = vmatprep.mubr.f32.mxu0 0.0
  %3704 = vmatmul.mubr.f32.gmra.mrb[0].mxu0 %v3553
  %v3705 = vpop.f32.mrb[0].mxu0
  %v3706 = vadd.f32 %v3509, %v3705
  %v3707 = vpop.f32.mrb[0].mxu0
  %v3708 = vadd.f32 %v3511, %v3707
  %3709 = vdwg.mxu0
  %v3710 = vld [vmem:[#allocation2 + $0x2] sm:$0xff]
  %v3711 = vld [vmem:[#allocation2 + $0xa] sm:$0xff]
  %v3712 = vld [vmem:[#allocation2 + $0x12] sm:$0xff]
  %v3713 = vld [vmem:[#allocation2 + $0x1a] sm:$0xff]
  %v3714 = vld [vmem:[#allocation2 + $0x22] sm:$0xff]
  %v3715 = vld [vmem:[#allocation2 + $0x2a] sm:$0xff]
  %v3716 = vld [vmem:[#allocation2 + $0x32] sm:$0xff]
  %v3717 = vld [vmem:[#allocation2 + $0x3a] sm:$0xff]
  %v3718 = vld [vmem:[#allocation2 + $0x42] sm:$0xff]
  %v3719 = vld [vmem:[#allocation2 + $0x4a] sm:$0xff]
  %v3720 = vld [vmem:[#allocation2 + $0x52] sm:$0xff]
  %v3721 = vld [vmem:[#allocation2 + $0x5a] sm:$0xff]
  %v3722 = vld [vmem:[#allocation2 + $0x62] sm:$0xff]
  %v3723 = vld [vmem:[#allocation2 + $0x6a] sm:$0xf]
  %s3724 = scalar_lea.vmem %s5, 352
  %v3725 = vld [vmem:[%s3724] sm:$0xff]
  %v3726 = vld [vmem:[%s3724 + $0x8] sm:$0xff]
  %v3727 = vld [vmem:[%s3724 + $0x10] sm:$0xff]
  %v3728 = vld [vmem:[%s3724 + $0x18] sm:$0xff]
  %v3729 = vld [vmem:[%s3724 + $0x20] sm:$0xff]
  %v3730 = vld [vmem:[%s3724 + $0x28] sm:$0xff]
  %v3731 = vld [vmem:[%s3724 + $0x30] sm:$0xff]
  %v3732 = vld [vmem:[%s3724 + $0x38] sm:$0xff]
  %v3733 = vld [vmem:[%s3724 + $0x40] sm:$0xff]
  %v3734 = vld [vmem:[%s3724 + $0x48] sm:$0xff]
  %v3735 = vld [vmem:[%s3724 + $0x50] sm:$0xff]
  %v3736 = vld [vmem:[%s3724 + $0x58] sm:$0xff]
  %v3737 = vld [vmem:[%s3724 + $0x60] sm:$0xff]
  %v3738 = vld [vmem:[%s3724 + $0x68] sm:$0xff]
  %v3739 = vld [vmem:[%s3724 + $0x70] sm:$0xff]
  %v3740 = vld [vmem:[%s3724 + $0x78] sm:$0xff]
  %v3741 = vld [vmem:[%s3724 + $0x80] sm:$0xff]
  %v3742 = vld [vmem:[%s3724 + $0x88] sm:$0xff]
  %v3743 = vld [vmem:[%s3724 + $0x90] sm:$0xff]
  %v3744 = vld [vmem:[%s3724 + $0x98] sm:$0xff]
  %v3745 = vld [vmem:[%s3724 + $0xa0] sm:$0xf]
  %v3746 = vld [vmem:[%s3724 + $0xa8] sm:$0xf]
  %v3748 = vsel %vm3228, %v3710, 0
  %v3751 = vsel %vm3228, %v3711, 0
  %v3754 = vsel %vm3228, %v3712, 0
  %v3757 = vsel %vm3228, %v3713, 0
  %v3760 = vsel %vm3228, %v3714, 0
  %v3763 = vsel %vm3228, %v3715, 0
  %v3766 = vsel %vm3228, %v3716, 0
  %v3769 = vsel %vm3228, %v3717, 0
  %v3772 = vsel %vm3228, %v3718, 0
  %v3775 = vsel %vm3228, %v3719, 0
  %v3778 = vsel %vm3228, %v3720, 0
  %v3781 = vsel %vm3228, %v3721, 0
  %v3784 = vsel %vm3228, %v3722, 0
  %v3787 = vsel %vm3228, %v3723, 0
  %v3790 = vsel %vm3089, %v3745, 0
  %v3793 = vsel %vm3089, %v3746, 0
  %3795 = vmatprep.subr.mxu0 %v3726
  %3796 = vmatpush1.msra.mxu0 %v3725
  %3797 = vmatprep.subr.mxu0 %v3728
  %3798 = vmatpush1.msra.mxu0 %v3727
  %3799 = vmatprep.subr.mxu0 %v3730
  %3800 = vmatpush1.msra.mxu0 %v3729
  %3801 = vmatprep.subr.mxu0 %v3732
  %3802 = vmatpush1.msra.mxu0 %v3731
  %3803 = vmatprep.subr.mxu0 %v3734
  %3804 = vmatpush1.msra.mxu0 %v3733
  %3805 = vmatprep.subr.mxu0 %v3736
  %3806 = vmatpush1.msra.mxu0 %v3735
  %3807 = vmatprep.subr.mxu0 %v3738
  %3808 = vmatpush1.msra.mxu0 %v3737
  %3809 = vmatprep.subr.mxu0 %v3740
  %3810 = vmatpush1.msra.mxu0 %v3739
  %3811 = vmatprep.subr.mxu0 %v3742
  %3812 = vmatpush1.msra.mxu0 %v3741
  %3813 = vmatprep.subr.mxu0 %v3744
  %3814 = vmatpush1.msra.mxu0 %v3743
  %3815 = vmatprep.subr.mxu0 %v3793
  %3816 = vmatpush1.msra.mxu0 %v3790
  %3817 = vmatprep.subr.mxu0 0.0
  %3818 = vmatpush1.msra.mxu0 0.0
  %3819 = vmatprep.subr.mxu0 0.0
  %3820 = vmatpush1.msra.mxu0 0.0
  %3821 = vmatprep.subr.mxu0 0.0
  %3822 = vmatpush1.msra.mxu0 0.0
  %3823 = vmatprep.subr.mxu0 0.0
  %3824 = vmatpush1.msra.mxu0 0.0
  %3825 = vmatprep.subr.mxu0 0.0
  %3826 = vmatpush1.msra.mxu0 0.0
  %3827 = vmatprep.subr.mxu0 0.0
  %3828 = vmatpush1.msra.mxu0 0.0
  %3829 = vmatprep.subr.mxu0 0.0
  %3830 = vmatpush1.msra.mxu0 0.0
  %3831 = vmatprep.subr.mxu0 0.0
  %3832 = vmatpush1.msra.mxu0 0.0
  %3833 = vmatprep.subr.mxu0 0.0
  %3834 = vmatpush1.msra.mxu0 0.0
  %3835 = vmatprep.subr.mxu0 0.0
  %3836 = vmatpush1.msra.mxu0 0.0
  %3837 = vmatprep.subr.mxu0 0.0
  %3838 = vmatpush1.msra.mxu0 0.0
  %3839 = vmatprep.subr.mxu0 0.0
  %3840 = vmatpush1.msra.mxu0 0.0
  %3841 = vmatprep.subr.mxu0 0.0
  %3842 = vmatpush1.msra.mxu0 0.0
  %3843 = vmatprep.subr.mxu0 0.0
  %3844 = vmatpush1.msra.mxu0 0.0
  %3845 = vmatprep.subr.mxu0 0.0
  %3846 = vmatpush1.msra.mxu0 0.0
  %3847 = vmatprep.subr.mxu0 0.0
  %3848 = vmatpush1.msra.mxu0 0.0
  %3849 = vmatprep.subr.mxu0 0.0
  %3850 = vmatpush1.msra.mxu0 0.0
  %3851 = vmatprep.subr.mxu0 0.0
  %3852 = vmatpush1.msra.mxu0 0.0
  %3853 = vmatprep.subr.mxu0 0.0
  %3854 = vmatpush1.msra.mxu0 0.0
  %3855 = vmatprep.subr.mxu0 0.0
  %3856 = vmatpush1.msra.mxu0 0.0
  %3857 = vmatprep.subr.mxu0 0.0
  %3858 = vmatpush1.msra.mxu0 0.0
  %3859 = vmatprep.mubr.f32.mxu0 0.0
  %3860 = vmatmul.mubr.f32.gmra.mrb[0].mxu0 %v3748
  %v3861 = vpop.f32.mrb[0].mxu0
  %v3862 = vadd.f32 0.0, %v3861
  %v3863 = vpop.f32.mrb[0].mxu0
  %v3864 = vadd.f32 0.0, %v3863
  %3865 = vmatprep.mubr.f32.mxu0 0.0
  %3866 = vmatmul.mubr.f32.gmra.mrb[0].mxu0 %v3751
  %v3867 = vpop.f32.mrb[0].mxu0
  %v3868 = vadd.f32 0.0, %v3867
  %v3869 = vpop.f32.mrb[0].mxu0
  %v3870 = vadd.f32 0.0, %v3869
  %3871 = vmatprep.mubr.f32.mxu0 0.0
  %3872 = vmatmul.mubr.f32.gmra.mrb[0].mxu0 %v3754
  %v3873 = vpop.f32.mrb[0].mxu0
  %v3874 = vadd.f32 0.0, %v3873
  %v3875 = vpop.f32.mrb[0].mxu0
  %v3876 = vadd.f32 0.0, %v3875
  %3877 = vmatprep.mubr.f32.mxu0 0.0
  %3878 = vmatmul.mubr.f32.gmra.mrb[0].mxu0 %v3757
  %v3879 = vpop.f32.mrb[0].mxu0
  %v3880 = vadd.f32 0.0, %v3879
  %v3881 = vpop.f32.mrb[0].mxu0
  %v3882 = vadd.f32 0.0, %v3881
  %3883 = vmatprep.mubr.f32.mxu0 0.0
  %3884 = vmatmul.mubr.f32.gmra.mrb[0].mxu0 %v3760
  %v3885 = vpop.f32.mrb[0].mxu0
  %v3886 = vadd.f32 0.0, %v3885
  %v3887 = vpop.f32.mrb[0].mxu0
  %v3888 = vadd.f32 0.0, %v3887
  %3889 = vmatprep.mubr.f32.mxu0 0.0
  %3890 = vmatmul.mubr.f32.gmra.mrb[0].mxu0 %v3763
  %v3891 = vpop.f32.mrb[0].mxu0
  %v3892 = vadd.f32 0.0, %v3891
  %v3893 = vpop.f32.mrb[0].mxu0
  %v3894 = vadd.f32 0.0, %v3893
  %3895 = vmatprep.mubr.f32.mxu0 0.0
  %3896 = vmatmul.mubr.f32.gmra.mrb[0].mxu0 %v3766
  %v3897 = vpop.f32.mrb[0].mxu0
  %v3898 = vadd.f32 0.0, %v3897
  %v3899 = vpop.f32.mrb[0].mxu0
  %v3900 = vadd.f32 0.0, %v3899
  %3901 = vmatprep.mubr.f32.mxu0 0.0
  %3902 = vmatmul.mubr.f32.gmra.mrb[0].mxu0 %v3769
  %v3903 = vpop.f32.mrb[0].mxu0
  %v3904 = vadd.f32 0.0, %v3903
  %v3905 = vpop.f32.mrb[0].mxu0
  %v3906 = vadd.f32 0.0, %v3905
  %3907 = vmatprep.mubr.f32.mxu0 0.0
  %3908 = vmatmul.mubr.f32.gmra.mrb[0].mxu0 %v3772
  %v3909 = vpop.f32.mrb[0].mxu0
  %v3910 = vadd.f32 0.0, %v3909
  %v3911 = vpop.f32.mrb[0].mxu0
  %v3912 = vadd.f32 0.0, %v3911
  %3913 = vmatprep.mubr.f32.mxu0 0.0
  %3914 = vmatmul.mubr.f32.gmra.mrb[0].mxu0 %v3775
  %v3915 = vpop.f32.mrb[0].mxu0
  %v3916 = vadd.f32 0.0, %v3915
  %v3917 = vpop.f32.mrb[0].mxu0
  %v3918 = vadd.f32 0.0, %v3917
  %3919 = vmatprep.mubr.f32.mxu0 0.0
  %3920 = vmatmul.mubr.f32.gmra.mrb[0].mxu0 %v3778
  %v3921 = vpop.f32.mrb[0].mxu0
  %v3922 = vadd.f32 0.0, %v3921
  %v3923 = vpop.f32.mrb[0].mxu0
  %v3924 = vadd.f32 0.0, %v3923
  %3925 = vmatprep.mubr.f32.mxu0 0.0
  %3926 = vmatmul.mubr.f32.gmra.mrb[0].mxu0 %v3781
  %v3927 = vpop.f32.mrb[0].mxu0
  %v3928 = vadd.f32 0.0, %v3927
  %v3929 = vpop.f32.mrb[0].mxu0
  %v3930 = vadd.f32 0.0, %v3929
  %3931 = vmatprep.mubr.f32.mxu0 0.0
  %3932 = vmatmul.mubr.f32.gmra.mrb[0].mxu0 %v3784
  %v3933 = vpop.f32.mrb[0].mxu0
  %v3934 = vadd.f32 0.0, %v3933
  %v3935 = vpop.f32.mrb[0].mxu0
  %v3936 = vadd.f32 0.0, %v3935
  %3937 = vmatprep.mubr.f32.mxu0 0.0
  %3938 = vmatmul.mubr.f32.gmra.mrb[0].mxu0 %v3787
  %v3939 = vpop.f32.mrb[0].mxu0
  %v3940 = vadd.f32 0.0, %v3939
  %v3941 = vpop.f32.mrb[0].mxu0
  %v3942 = vadd.f32 0.0, %v3941
  %3943 = vdwg.mxu0
  %v3944 = vadd.f32 %v3628, %v3862
  %v3945 = vadd.f32 %v3630, %v3864
  %v3946 = vadd.f32 %v3634, %v3868
  %v3947 = vadd.f32 %v3636, %v3870
  %v3948 = vadd.f32 %v3640, %v3874
  %v3949 = vadd.f32 %v3642, %v3876
  %v3950 = vadd.f32 %v3646, %v3880
  %v3951 = vadd.f32 %v3648, %v3882
  %v3952 = vadd.f32 %v3652, %v3886
  %v3953 = vadd.f32 %v3654, %v3888
  %v3954 = vadd.f32 %v3658, %v3892
  %v3955 = vadd.f32 %v3660, %v3894
  %v3956 = vadd.f32 %v3664, %v3898
  %v3957 = vadd.f32 %v3666, %v3900
  %v3958 = vadd.f32 %v3670, %v3904
  %v3959 = vadd.f32 %v3672, %v3906
  %v3960 = vadd.f32 %v3676, %v3910
  %v3961 = vadd.f32 %v3678, %v3912
  %v3962 = vadd.f32 %v3682, %v3916
  %v3963 = vadd.f32 %v3684, %v3918
  %v3964 = vadd.f32 %v3688, %v3922
  %v3965 = vadd.f32 %v3690, %v3924
  %v3966 = vadd.f32 %v3694, %v3928
  %v3967 = vadd.f32 %v3696, %v3930
  %v3968 = vadd.f32 %v3700, %v3934
  %v3969 = vadd.f32 %v3702, %v3936
  %v3970 = vadd.f32 %v3706, %v3940
  %v3971 = vadd.f32 %v3708, %v3942
  %v3972 = vld [vmem:[#allocation2 + $0x3] sm:$0xff]
  %v3973 = vld [vmem:[#allocation2 + $0xb] sm:$0xff]
  %v3974 = vld [vmem:[#allocation2 + $0x13] sm:$0xff]
  %v3975 = vld [vmem:[#allocation2 + $0x1b] sm:$0xff]
  %v3976 = vld [vmem:[#allocation2 + $0x23] sm:$0xff]
  %v3977 = vld [vmem:[#allocation2 + $0x2b] sm:$0xff]
  %v3978 = vld [vmem:[#allocation2 + $0x33] sm:$0xff]
  %v3979 = vld [vmem:[#allocation2 + $0x3b] sm:$0xff]
  %v3980 = vld [vmem:[#allocation2 + $0x43] sm:$0xff]
  %v3981 = vld [vmem:[#allocation2 + $0x4b] sm:$0xff]
  %v3982 = vld [vmem:[#allocation2 + $0x53] sm:$0xff]
  %v3983 = vld [vmem:[#allocation2 + $0x5b] sm:$0xff]
  %v3984 = vld [vmem:[#allocation2 + $0x63] sm:$0xff]
  %v3985 = vld [vmem:[#allocation2 + $0x6b] sm:$0xf]
  %s3986 = scalar_lea.vmem %s5, 528
  %v3987 = vld [vmem:[%s3986] sm:$0xff]
  %v3988 = vld [vmem:[%s3986 + $0x8] sm:$0xff]
  %v3989 = vld [vmem:[%s3986 + $0x10] sm:$0xff]
  %v3990 = vld [vmem:[%s3986 + $0x18] sm:$0xff]
  %v3991 = vld [vmem:[%s3986 + $0x20] sm:$0xff]
  %v3992 = vld [vmem:[%s3986 + $0x28] sm:$0xff]
  %v3993 = vld [vmem:[%s3986 + $0x30] sm:$0xff]
  %v3994 = vld [vmem:[%s3986 + $0x38] sm:$0xff]
  %v3995 = vld [vmem:[%s3986 + $0x40] sm:$0xff]
  %v3996 = vld [vmem:[%s3986 + $0x48] sm:$0xff]
  %v3997 = vld [vmem:[%s3986 + $0x50] sm:$0xff]
  %v3998 = vld [vmem:[%s3986 + $0x58] sm:$0xff]
  %v3999 = vld [vmem:[%s3986 + $0x60] sm:$0xff]
  %v4000 = vld [vmem:[%s3986 + $0x68] sm:$0xff]
  %v4001 = vld [vmem:[%s3986 + $0x70] sm:$0xff]
  %v4002 = vld [vmem:[%s3986 + $0x78] sm:$0xff]
  %v4003 = vld [vmem:[%s3986 + $0x80] sm:$0xff]
  %v4004 = vld [vmem:[%s3986 + $0x88] sm:$0xff]
  %v4005 = vld [vmem:[%s3986 + $0x90] sm:$0xff]
  %v4006 = vld [vmem:[%s3986 + $0x98] sm:$0xff]
  %v4007 = vld [vmem:[%s3986 + $0xa0] sm:$0xf]
  %v4008 = vld [vmem:[%s3986 + $0xa8] sm:$0xf]
  %v4010 = vsel %vm3228, %v3972, 0
  %v4013 = vsel %vm3228, %v3973, 0
  %v4016 = vsel %vm3228, %v3974, 0
  %v4019 = vsel %vm3228, %v3975, 0
  %v4022 = vsel %vm3228, %v3976, 0
  %v4025 = vsel %vm3228, %v3977, 0
  %v4028 = vsel %vm3228, %v3978, 0
  %v4031 = vsel %vm3228, %v3979, 0
  %v4034 = vsel %vm3228, %v3980, 0
  %v4037 = vsel %vm3228, %v3981, 0
  %v4040 = vsel %vm3228, %v3982, 0
  %v4043 = vsel %vm3228, %v3983, 0
  %v4046 = vsel %vm3228, %v3984, 0
  %v4049 = vsel %vm3228, %v3985, 0
  %v4052 = vsel %vm3089, %v4007, 0
  %v4055 = vsel %vm3089, %v4008, 0
  %4057 = vmatprep.subr.mxu0 %v3988
  %4058 = vmatpush1.msra.mxu0 %v3987
  %4059 = vmatprep.subr.mxu0 %v3990
  %4060 = vmatpush1.msra.mxu0 %v3989
  %4061 = vmatprep.subr.mxu0 %v3992
  %4062 = vmatpush1.msra.mxu0 %v3991
  %4063 = vmatprep.subr.mxu0 %v3994
  %4064 = vmatpush1.msra.mxu0 %v3993
  %4065 = vmatprep.subr.mxu0 %v3996
  %4066 = vmatpush1.msra.mxu0 %v3995
  %4067 = vmatprep.subr.mxu0 %v3998
  %4068 = vmatpush1.msra.mxu0 %v3997
  %4069 = vmatprep.subr.mxu0 %v4000
  %4070 = vmatpush1.msra.mxu0 %v3999
  %4071 = vmatprep.subr.mxu0 %v4002
  %4072 = vmatpush1.msra.mxu0 %v4001
  %4073 = vmatprep.subr.mxu0 %v4004
  %4074 = vmatpush1.msra.mxu0 %v4003
  %4075 = vmatprep.subr.mxu0 %v4006
  %4076 = vmatpush1.msra.mxu0 %v4005
  %4077 = vmatprep.subr.mxu0 %v4055
  %4078 = vmatpush1.msra.mxu0 %v4052
  %4079 = vmatprep.subr.mxu0 0.0
  %4080 = vmatpush1.msra.mxu0 0.0
  %4081 = vmatprep.subr.mxu0 0.0
  %4082 = vmatpush1.msra.mxu0 0.0
  %4083 = vmatprep.subr.mxu0 0.0
  %4084 = vmatpush1.msra.mxu0 0.0
  %4085 = vmatprep.subr.mxu0 0.0
  %4086 = vmatpush1.msra.mxu0 0.0
  %4087 = vmatprep.subr.mxu0 0.0
  %4088 = vmatpush1.msra.mxu0 0.0
  %4089 = vmatprep.subr.mxu0 0.0
  %4090 = vmatpush1.msra.mxu0 0.0
  %4091 = vmatprep.subr.mxu0 0.0
  %4092 = vmatpush1.msra.mxu0 0.0
  %4093 = vmatprep.subr.mxu0 0.0
  %4094 = vmatpush1.msra.mxu0 0.0
  %4095 = vmatprep.subr.mxu0 0.0
  %4096 = vmatpush1.msra.mxu0 0.0
  %4097 = vmatprep.subr.mxu0 0.0
  %4098 = vmatpush1.msra.mxu0 0.0
  %4099 = vmatprep.subr.mxu0 0.0
  %4100 = vmatpush1.msra.mxu0 0.0
  %4101 = vmatprep.subr.mxu0 0.0
  %4102 = vmatpush1.msra.mxu0 0.0
  %4103 = vmatprep.subr.mxu0 0.0
  %4104 = vmatpush1.msra.mxu0 0.0
  %4105 = vmatprep.subr.mxu0 0.0
  %4106 = vmatpush1.msra.mxu0 0.0
  %4107 = vmatprep.subr.mxu0 0.0
  %4108 = vmatpush1.msra.mxu0 0.0
  %4109 = vmatprep.subr.mxu0 0.0
  %4110 = vmatpush1.msra.mxu0 0.0
  %4111 = vmatprep.subr.mxu0 0.0
  %4112 = vmatpush1.msra.mxu0 0.0
  %4113 = vmatprep.subr.mxu0 0.0
  %4114 = vmatpush1.msra.mxu0 0.0
  %4115 = vmatprep.subr.mxu0 0.0
  %4116 = vmatpush1.msra.mxu0 0.0
  %4117 = vmatprep.subr.mxu0 0.0
  %4118 = vmatpush1.msra.mxu0 0.0
  %4119 = vmatprep.subr.mxu0 0.0
  %4120 = vmatpush1.msra.mxu0 0.0
  %4121 = vmatprep.mubr.f32.mxu0 0.0
  %4122 = vmatmul.mubr.f32.gmra.mrb[0].mxu0 %v4010
  %v4123 = vpop.f32.mrb[0].mxu0
  %v4124 = vadd.f32 0.0, %v4123
  %v4125 = vpop.f32.mrb[0].mxu0
  %v4126 = vadd.f32 0.0, %v4125
  %4127 = vmatprep.mubr.f32.mxu0 0.0
  %4128 = vmatmul.mubr.f32.gmra.mrb[0].mxu0 %v4013
  %v4129 = vpop.f32.mrb[0].mxu0
  %v4130 = vadd.f32 0.0, %v4129
  %v4131 = vpop.f32.mrb[0].mxu0
  %v4132 = vadd.f32 0.0, %v4131
  %4133 = vmatprep.mubr.f32.mxu0 0.0
  %4134 = vmatmul.mubr.f32.gmra.mrb[0].mxu0 %v4016
  %v4135 = vpop.f32.mrb[0].mxu0
  %v4136 = vadd.f32 0.0, %v4135
  %v4137 = vpop.f32.mrb[0].mxu0
  %v4138 = vadd.f32 0.0, %v4137
  %4139 = vmatprep.mubr.f32.mxu0 0.0
  %4140 = vmatmul.mubr.f32.gmra.mrb[0].mxu0 %v4019
  %v4141 = vpop.f32.mrb[0].mxu0
  %v4142 = vadd.f32 0.0, %v4141
  %v4143 = vpop.f32.mrb[0].mxu0
  %v4144 = vadd.f32 0.0, %v4143
  %4145 = vmatprep.mubr.f32.mxu0 0.0
  %4146 = vmatmul.mubr.f32.gmra.mrb[0].mxu0 %v4022
  %v4147 = vpop.f32.mrb[0].mxu0
  %v4148 = vadd.f32 0.0, %v4147
  %v4149 = vpop.f32.mrb[0].mxu0
  %v4150 = vadd.f32 0.0, %v4149
  %4151 = vmatprep.mubr.f32.mxu0 0.0
  %4152 = vmatmul.mubr.f32.gmra.mrb[0].mxu0 %v4025
  %v4153 = vpop.f32.mrb[0].mxu0
  %v4154 = vadd.f32 0.0, %v4153
  %v4155 = vpop.f32.mrb[0].mxu0
  %v4156 = vadd.f32 0.0, %v4155
  %4157 = vmatprep.mubr.f32.mxu0 0.0
  %4158 = vmatmul.mubr.f32.gmra.mrb[0].mxu0 %v4028
  %v4159 = vpop.f32.mrb[0].mxu0
  %v4160 = vadd.f32 0.0, %v4159
  %v4161 = vpop.f32.mrb[0].mxu0
  %v4162 = vadd.f32 0.0, %v4161
  %4163 = vmatprep.mubr.f32.mxu0 0.0
  %4164 = vmatmul.mubr.f32.gmra.mrb[0].mxu0 %v4031
  %v4165 = vpop.f32.mrb[0].mxu0
  %v4166 = vadd.f32 0.0, %v4165
  %v4167 = vpop.f32.mrb[0].mxu0
  %v4168 = vadd.f32 0.0, %v4167
  %4169 = vmatprep.mubr.f32.mxu0 0.0
  %4170 = vmatmul.mubr.f32.gmra.mrb[0].mxu0 %v4034
  %v4171 = vpop.f32.mrb[0].mxu0
  %v4172 = vadd.f32 0.0, %v4171
  %v4173 = vpop.f32.mrb[0].mxu0
  %v4174 = vadd.f32 0.0, %v4173
  %4175 = vmatprep.mubr.f32.mxu0 0.0
  %4176 = vmatmul.mubr.f32.gmra.mrb[0].mxu0 %v4037
  %v4177 = vpop.f32.mrb[0].mxu0
  %v4178 = vadd.f32 0.0, %v4177
  %v4179 = vpop.f32.mrb[0].mxu0
  %v4180 = vadd.f32 0.0, %v4179
  %4181 = vmatprep.mubr.f32.mxu0 0.0
  %4182 = vmatmul.mubr.f32.gmra.mrb[0].mxu0 %v4040
  %v4183 = vpop.f32.mrb[0].mxu0
  %v4184 = vadd.f32 0.0, %v4183
  %v4185 = vpop.f32.mrb[0].mxu0
  %v4186 = vadd.f32 0.0, %v4185
  %4187 = vmatprep.mubr.f32.mxu0 0.0
  %4188 = vmatmul.mubr.f32.gmra.mrb[0].mxu0 %v4043
  %v4189 = vpop.f32.mrb[0].mxu0
  %v4190 = vadd.f32 0.0, %v4189
  %v4191 = vpop.f32.mrb[0].mxu0
  %v4192 = vadd.f32 0.0, %v4191
  %4193 = vmatprep.mubr.f32.mxu0 0.0
  %4194 = vmatmul.mubr.f32.gmra.mrb[0].mxu0 %v4046
  %v4195 = vpop.f32.mrb[0].mxu0
  %v4196 = vadd.f32 0.0, %v4195
  %v4197 = vpop.f32.mrb[0].mxu0
  %v4198 = vadd.f32 0.0, %v4197
  %4199 = vmatprep.mubr.f32.mxu0 0.0
  %4200 = vmatmul.mubr.f32.gmra.mrb[0].mxu0 %v4049
  %v4201 = vpop.f32.mrb[0].mxu0
  %v4202 = vadd.f32 0.0, %v4201
  %v4203 = vpop.f32.mrb[0].mxu0
  %v4204 = vadd.f32 0.0, %v4203
  %4205 = vdwg.mxu0
  %v4206 = vadd.f32 %v3944, %v4124
  %v4207 = vadd.f32 %v3945, %v4126
  %v4208 = vadd.f32 %v3946, %v4130
  %v4209 = vadd.f32 %v3947, %v4132
  %v4210 = vadd.f32 %v3948, %v4136
  %v4211 = vadd.f32 %v3949, %v4138
  %v4212 = vadd.f32 %v3950, %v4142
  %v4213 = vadd.f32 %v3951, %v4144
  %v4214 = vadd.f32 %v3952, %v4148
  %v4215 = vadd.f32 %v3953, %v4150
  %v4216 = vadd.f32 %v3954, %v4154
  %v4217 = vadd.f32 %v3955, %v4156
  %v4218 = vadd.f32 %v3956, %v4160
  %v4219 = vadd.f32 %v3957, %v4162
  %v4220 = vadd.f32 %v3958, %v4166
  %v4221 = vadd.f32 %v3959, %v4168
  %v4222 = vadd.f32 %v3960, %v4172
  %v4223 = vadd.f32 %v3961, %v4174
  %v4224 = vadd.f32 %v3962, %v4178
  %v4225 = vadd.f32 %v3963, %v4180
  %v4226 = vadd.f32 %v3964, %v4184
  %v4227 = vadd.f32 %v3965, %v4186
  %v4228 = vadd.f32 %v3966, %v4190
  %v4229 = vadd.f32 %v3967, %v4192
  %v4230 = vadd.f32 %v3968, %v4196
  %v4231 = vadd.f32 %v3969, %v4198
  %v4232 = vadd.f32 %v3970, %v4202
  %v4233 = vadd.f32 %v3971, %v4204
  %v4234 = vld [vmem:[#allocation2 + $0x4] sm:$0xff]
  %v4235 = vld [vmem:[#allocation2 + $0xc] sm:$0xff]
  %v4236 = vld [vmem:[#allocation2 + $0x14] sm:$0xff]
  %v4237 = vld [vmem:[#allocation2 + $0x1c] sm:$0xff]
  %v4238 = vld [vmem:[#allocation2 + $0x24] sm:$0xff]
  %v4239 = vld [vmem:[#allocation2 + $0x2c] sm:$0xff]
  %v4240 = vld [vmem:[#allocation2 + $0x34] sm:$0xff]
  %v4241 = vld [vmem:[#allocation2 + $0x3c] sm:$0xff]
  %v4242 = vld [vmem:[#allocation2 + $0x44] sm:$0xff]
  %v4243 = vld [vmem:[#allocation2 + $0x4c] sm:$0xff]
  %v4244 = vld [vmem:[#allocation2 + $0x54] sm:$0xff]
  %v4245 = vld [vmem:[#allocation2 + $0x5c] sm:$0xff]
  %v4246 = vld [vmem:[#allocation2 + $0x64] sm:$0xff]
  %v4247 = vld [vmem:[#allocation2 + $0x6c] sm:$0xf]
  %s4248 = scalar_lea.vmem %s5, 704
  %v4249 = vld [vmem:[%s4248] sm:$0xff]
  %v4250 = vld [vmem:[%s4248 + $0x8] sm:$0xff]
  %v4251 = vld [vmem:[%s4248 + $0x10] sm:$0xff]
  %v4252 = vld [vmem:[%s4248 + $0x18] sm:$0xff]
  %v4253 = vld [vmem:[%s4248 + $0x20] sm:$0xff]
  %v4254 = vld [vmem:[%s4248 + $0x28] sm:$0xff]
  %v4255 = vld [vmem:[%s4248 + $0x30] sm:$0xff]
  %v4256 = vld [vmem:[%s4248 + $0x38] sm:$0xff]
  %v4257 = vld [vmem:[%s4248 + $0x40] sm:$0xff]
  %v4258 = vld [vmem:[%s4248 + $0x48] sm:$0xff]
  %v4259 = vld [vmem:[%s4248 + $0x50] sm:$0xff]
  %v4260 = vld [vmem:[%s4248 + $0x58] sm:$0xff]
  %v4261 = vld [vmem:[%s4248 + $0x60] sm:$0xff]
  %v4262 = vld [vmem:[%s4248 + $0x68] sm:$0xff]
  %v4263 = vld [vmem:[%s4248 + $0x70] sm:$0xff]
  %v4264 = vld [vmem:[%s4248 + $0x78] sm:$0xff]
  %v4265 = vld [vmem:[%s4248 + $0x80] sm:$0xff]
  %v4266 = vld [vmem:[%s4248 + $0x88] sm:$0xff]
  %v4267 = vld [vmem:[%s4248 + $0x90] sm:$0xff]
  %v4268 = vld [vmem:[%s4248 + $0x98] sm:$0xff]
  %v4269 = vld [vmem:[%s4248 + $0xa0] sm:$0xf]
  %v4270 = vld [vmem:[%s4248 + $0xa8] sm:$0xf]
  %v4272 = vsel %vm3228, %v4234, 0
  %v4275 = vsel %vm3228, %v4235, 0
  %v4278 = vsel %vm3228, %v4236, 0
  %v4281 = vsel %vm3228, %v4237, 0
  %v4284 = vsel %vm3228, %v4238, 0
  %v4287 = vsel %vm3228, %v4239, 0
  %v4290 = vsel %vm3228, %v4240, 0
  %v4293 = vsel %vm3228, %v4241, 0
  %v4296 = vsel %vm3228, %v4242, 0
  %v4299 = vsel %vm3228, %v4243, 0
  %v4302 = vsel %vm3228, %v4244, 0
  %v4305 = vsel %vm3228, %v4245, 0
  %v4308 = vsel %vm3228, %v4246, 0
  %v4311 = vsel %vm3228, %v4247, 0
  %v4314 = vsel %vm3089, %v4269, 0
  %v4317 = vsel %vm3089, %v4270, 0
  %4319 = vmatprep.subr.mxu0 %v4250
  %4320 = vmatpush1.msra.mxu0 %v4249
  %4321 = vmatprep.subr.mxu0 %v4252
  %4322 = vmatpush1.msra.mxu0 %v4251
  %4323 = vmatprep.subr.mxu0 %v4254
  %4324 = vmatpush1.msra.mxu0 %v4253
  %4325 = vmatprep.subr.mxu0 %v4256
  %4326 = vmatpush1.msra.mxu0 %v4255
  %4327 = vmatprep.subr.mxu0 %v4258
  %4328 = vmatpush1.msra.mxu0 %v4257
  %4329 = vmatprep.subr.mxu0 %v4260
  %4330 = vmatpush1.msra.mxu0 %v4259
  %4331 = vmatprep.subr.mxu0 %v4262
  %4332 = vmatpush1.msra.mxu0 %v4261
  %4333 = vmatprep.subr.mxu0 %v4264
  %4334 = vmatpush1.msra.mxu0 %v4263
  %4335 = vmatprep.subr.mxu0 %v4266
  %4336 = vmatpush1.msra.mxu0 %v4265
  %4337 = vmatprep.subr.mxu0 %v4268
  %4338 = vmatpush1.msra.mxu0 %v4267
  %4339 = vmatprep.subr.mxu0 %v4317
  %4340 = vmatpush1.msra.mxu0 %v4314
  %4341 = vmatprep.subr.mxu0 0.0
  %4342 = vmatpush1.msra.mxu0 0.0
  %4343 = vmatprep.subr.mxu0 0.0
  %4344 = vmatpush1.msra.mxu0 0.0
  %4345 = vmatprep.subr.mxu0 0.0
  %4346 = vmatpush1.msra.mxu0 0.0
  %4347 = vmatprep.subr.mxu0 0.0
  %4348 = vmatpush1.msra.mxu0 0.0
  %4349 = vmatprep.subr.mxu0 0.0
  %4350 = vmatpush1.msra.mxu0 0.0
  %4351 = vmatprep.subr.mxu0 0.0
  %4352 = vmatpush1.msra.mxu0 0.0
  %4353 = vmatprep.subr.mxu0 0.0
  %4354 = vmatpush1.msra.mxu0 0.0
  %4355 = vmatprep.subr.mxu0 0.0
  %4356 = vmatpush1.msra.mxu0 0.0
  %4357 = vmatprep.subr.mxu0 0.0
  %4358 = vmatpush1.msra.mxu0 0.0
  %4359 = vmatprep.subr.mxu0 0.0
  %4360 = vmatpush1.msra.mxu0 0.0
  %4361 = vmatprep.subr.mxu0 0.0
  %4362 = vmatpush1.msra.mxu0 0.0
  %4363 = vmatprep.subr.mxu0 0.0
  %4364 = vmatpush1.msra.mxu0 0.0
  %4365 = vmatprep.subr.mxu0 0.0
  %4366 = vmatpush1.msra.mxu0 0.0
  %4367 = vmatprep.subr.mxu0 0.0
  %4368 = vmatpush1.msra.mxu0 0.0
  %4369 = vmatprep.subr.mxu0 0.0
  %4370 = vmatpush1.msra.mxu0 0.0
  %4371 = vmatprep.subr.mxu0 0.0
  %4372 = vmatpush1.msra.mxu0 0.0
  %4373 = vmatprep.subr.mxu0 0.0
  %4374 = vmatpush1.msra.mxu0 0.0
  %4375 = vmatprep.subr.mxu0 0.0
  %4376 = vmatpush1.msra.mxu0 0.0
  %4377 = vmatprep.subr.mxu0 0.0
  %4378 = vmatpush1.msra.mxu0 0.0
  %4379 = vmatprep.subr.mxu0 0.0
  %4380 = vmatpush1.msra.mxu0 0.0
  %4381 = vmatprep.subr.mxu0 0.0
  %4382 = vmatpush1.msra.mxu0 0.0
  %4383 = vmatprep.mubr.f32.mxu0 0.0
  %4384 = vmatmul.mubr.f32.gmra.mrb[0].mxu0 %v4272
  %v4385 = vpop.f32.mrb[0].mxu0
  %v4386 = vadd.f32 0.0, %v4385
  %v4387 = vpop.f32.mrb[0].mxu0
  %v4388 = vadd.f32 0.0, %v4387
  %4389 = vmatprep.mubr.f32.mxu0 0.0
  %4390 = vmatmul.mubr.f32.gmra.mrb[0].mxu0 %v4275
  %v4391 = vpop.f32.mrb[0].mxu0
  %v4392 = vadd.f32 0.0, %v4391
  %v4393 = vpop.f32.mrb[0].mxu0
  %v4394 = vadd.f32 0.0, %v4393
  %4395 = vmatprep.mubr.f32.mxu0 0.0
  %4396 = vmatmul.mubr.f32.gmra.mrb[0].mxu0 %v4278
  %v4397 = vpop.f32.mrb[0].mxu0
  %v4398 = vadd.f32 0.0, %v4397
  %v4399 = vpop.f32.mrb[0].mxu0
  %v4400 = vadd.f32 0.0, %v4399
  %4401 = vmatprep.mubr.f32.mxu0 0.0
  %4402 = vmatmul.mubr.f32.gmra.mrb[0].mxu0 %v4281
  %v4403 = vpop.f32.mrb[0].mxu0
  %v4404 = vadd.f32 0.0, %v4403
  %v4405 = vpop.f32.mrb[0].mxu0
  %v4406 = vadd.f32 0.0, %v4405
  %4407 = vmatprep.mubr.f32.mxu0 0.0
  %4408 = vmatmul.mubr.f32.gmra.mrb[0].mxu0 %v4284
  %v4409 = vpop.f32.mrb[0].mxu0
  %v4410 = vadd.f32 0.0, %v4409
  %v4411 = vpop.f32.mrb[0].mxu0
  %v4412 = vadd.f32 0.0, %v4411
  %4413 = vmatprep.mubr.f32.mxu0 0.0
  %4414 = vmatmul.mubr.f32.gmra.mrb[0].mxu0 %v4287
  %v4415 = vpop.f32.mrb[0].mxu0
  %v4416 = vadd.f32 0.0, %v4415
  %v4417 = vpop.f32.mrb[0].mxu0
  %v4418 = vadd.f32 0.0, %v4417
  %4419 = vmatprep.mubr.f32.mxu0 0.0
  %4420 = vmatmul.mubr.f32.gmra.mrb[0].mxu0 %v4290
  %v4421 = vpop.f32.mrb[0].mxu0
  %v4422 = vadd.f32 0.0, %v4421
  %v4423 = vpop.f32.mrb[0].mxu0
  %v4424 = vadd.f32 0.0, %v4423
  %4425 = vmatprep.mubr.f32.mxu0 0.0
  %4426 = vmatmul.mubr.f32.gmra.mrb[0].mxu0 %v4293
  %v4427 = vpop.f32.mrb[0].mxu0
  %v4428 = vadd.f32 0.0, %v4427
  %v4429 = vpop.f32.mrb[0].mxu0
  %v4430 = vadd.f32 0.0, %v4429
  %4431 = vmatprep.mubr.f32.mxu0 0.0
  %4432 = vmatmul.mubr.f32.gmra.mrb[0].mxu0 %v4296
  %v4433 = vpop.f32.mrb[0].mxu0
  %v4434 = vadd.f32 0.0, %v4433
  %v4435 = vpop.f32.mrb[0].mxu0
  %v4436 = vadd.f32 0.0, %v4435
  %4437 = vmatprep.mubr.f32.mxu0 0.0
  %4438 = vmatmul.mubr.f32.gmra.mrb[0].mxu0 %v4299
  %v4439 = vpop.f32.mrb[0].mxu0
  %v4440 = vadd.f32 0.0, %v4439
  %v4441 = vpop.f32.mrb[0].mxu0
  %v4442 = vadd.f32 0.0, %v4441
  %4443 = vmatprep.mubr.f32.mxu0 0.0
  %4444 = vmatmul.mubr.f32.gmra.mrb[0].mxu0 %v4302
  %v4445 = vpop.f32.mrb[0].mxu0
  %v4446 = vadd.f32 0.0, %v4445
  %v4447 = vpop.f32.mrb[0].mxu0
  %v4448 = vadd.f32 0.0, %v4447
  %4449 = vmatprep.mubr.f32.mxu0 0.0
  %4450 = vmatmul.mubr.f32.gmra.mrb[0].mxu0 %v4305
  %v4451 = vpop.f32.mrb[0].mxu0
  %v4452 = vadd.f32 0.0, %v4451
  %v4453 = vpop.f32.mrb[0].mxu0
  %v4454 = vadd.f32 0.0, %v4453
  %4455 = vmatprep.mubr.f32.mxu0 0.0
  %4456 = vmatmul.mubr.f32.gmra.mrb[0].mxu0 %v4308
  %v4457 = vpop.f32.mrb[0].mxu0
  %v4458 = vadd.f32 0.0, %v4457
  %v4459 = vpop.f32.mrb[0].mxu0
  %v4460 = vadd.f32 0.0, %v4459
  %4461 = vmatprep.mubr.f32.mxu0 0.0
  %4462 = vmatmul.mubr.f32.gmra.mrb[0].mxu0 %v4311
  %v4463 = vpop.f32.mrb[0].mxu0
  %v4464 = vadd.f32 0.0, %v4463
  %v4465 = vpop.f32.mrb[0].mxu0
  %v4466 = vadd.f32 0.0, %v4465
  %4467 = vdwg.mxu0
  %v4468 = vadd.f32 %v4206, %v4386
  %v4469 = vadd.f32 %v4207, %v4388
  %v4470 = vadd.f32 %v4208, %v4392
  %v4471 = vadd.f32 %v4209, %v4394
  %v4472 = vadd.f32 %v4210, %v4398
  %v4473 = vadd.f32 %v4211, %v4400
  %v4474 = vadd.f32 %v4212, %v4404
  %v4475 = vadd.f32 %v4213, %v4406
  %v4476 = vadd.f32 %v4214, %v4410
  %v4477 = vadd.f32 %v4215, %v4412
  %v4478 = vadd.f32 %v4216, %v4416
  %v4479 = vadd.f32 %v4217, %v4418
  %v4480 = vadd.f32 %v4218, %v4422
  %v4481 = vadd.f32 %v4219, %v4424
  %v4482 = vadd.f32 %v4220, %v4428
  %v4483 = vadd.f32 %v4221, %v4430
  %v4484 = vadd.f32 %v4222, %v4434
  %v4485 = vadd.f32 %v4223, %v4436
  %v4486 = vadd.f32 %v4224, %v4440
  %v4487 = vadd.f32 %v4225, %v4442
  %v4488 = vadd.f32 %v4226, %v4446
  %v4489 = vadd.f32 %v4227, %v4448
  %v4490 = vadd.f32 %v4228, %v4452
  %v4491 = vadd.f32 %v4229, %v4454
  %v4492 = vadd.f32 %v4230, %v4458
  %v4493 = vadd.f32 %v4231, %v4460
  %v4494 = vadd.f32 %v4232, %v4464
  %v4495 = vadd.f32 %v4233, %v4466
  %v4496 = vld [vmem:[%s6] sm:$0x3]
  %v4498 = vlaneseq
  %v4499 = vshrl.u32 %v4498, 7
  %v4500 = vsub.s32 0, %v4499
  %v4501 = vrot.slane %v4496, %v4500
  %v4502 = vlaneseq
  %v4503 = vshrl.u32 %v4502, 7
  %v4504 = vsub.s32 1, %v4503
  %v4505 = vrot.slane %v4496, %v4504
  %v4508 = vadd.f32 %v4468, %v4501
  %v4509 = vadd.f32 %v4469, %v4505
  %v4510 = vadd.f32 %v4470, %v4501
  %v4511 = vadd.f32 %v4471, %v4505
  %v4512 = vadd.f32 %v4472, %v4501
  %v4513 = vadd.f32 %v4473, %v4505
  %v4514 = vadd.f32 %v4474, %v4501
  %v4515 = vadd.f32 %v4475, %v4505
  %v4516 = vadd.f32 %v4476, %v4501
  %v4517 = vadd.f32 %v4477, %v4505
  %v4518 = vadd.f32 %v4478, %v4501
  %v4519 = vadd.f32 %v4479, %v4505
  %v4520 = vadd.f32 %v4480, %v4501
  %v4521 = vadd.f32 %v4481, %v4505
  %v4522 = vadd.f32 %v4482, %v4501
  %v4523 = vadd.f32 %v4483, %v4505
  %v4524 = vadd.f32 %v4484, %v4501
  %v4525 = vadd.f32 %v4485, %v4505
  %v4526 = vadd.f32 %v4486, %v4501
  %v4527 = vadd.f32 %v4487, %v4505
  %v4528 = vadd.f32 %v4488, %v4501
  %v4529 = vadd.f32 %v4489, %v4505
  %v4530 = vadd.f32 %v4490, %v4501
  %v4531 = vadd.f32 %v4491, %v4505
  %v4532 = vadd.f32 %v4492, %v4501
  %v4533 = vadd.f32 %v4493, %v4505
  %v4534 = vadd.f32 %v4494, %v4501
  %v4535 = vadd.f32 %v4495, %v4505
  %v4536 = vxor.u32 %v4508, 2147483648
  %v4537 = vxor.u32 %v4509, 2147483648
  %v4538 = vxor.u32 %v4510, 2147483648
  %v4539 = vxor.u32 %v4511, 2147483648
  %v4540 = vxor.u32 %v4512, 2147483648
  %v4541 = vxor.u32 %v4513, 2147483648
  %v4542 = vxor.u32 %v4514, 2147483648
  %v4543 = vxor.u32 %v4515, 2147483648
  %v4544 = vxor.u32 %v4516, 2147483648
  %v4545 = vxor.u32 %v4517, 2147483648
  %v4546 = vxor.u32 %v4518, 2147483648
  %v4547 = vxor.u32 %v4519, 2147483648
  %v4548 = vxor.u32 %v4520, 2147483648
  %v4549 = vxor.u32 %v4521, 2147483648
  %v4550 = vxor.u32 %v4522, 2147483648
  %v4551 = vxor.u32 %v4523, 2147483648
  %v4552 = vxor.u32 %v4524, 2147483648
  %v4553 = vxor.u32 %v4525, 2147483648
  %v4554 = vxor.u32 %v4526, 2147483648
  %v4555 = vxor.u32 %v4527, 2147483648
  %v4556 = vxor.u32 %v4528, 2147483648
  %v4557 = vxor.u32 %v4529, 2147483648
  %v4558 = vxor.u32 %v4530, 2147483648
  %v4559 = vxor.u32 %v4531, 2147483648
  %v4560 = vxor.u32 %v4532, 2147483648
  %v4561 = vxor.u32 %v4533, 2147483648
  %v4562 = vxor.u32 %v4534, 2147483648
  %v4563 = vxor.u32 %v4535, 2147483648
  %v4564 = vmul.f32 %v4536, 1.442695
  %v4565 = vpow.pop %v4564
  %v4566 = vmul.f32 %v4537, 1.442695
  %v4567 = vpow.pop %v4566
  %v4568 = vmul.f32 %v4538, 1.442695
  %v4569 = vpow.pop %v4568
  %v4570 = vmul.f32 %v4539, 1.442695
  %v4571 = vpow.pop %v4570
  %v4572 = vmul.f32 %v4540, 1.442695
  %v4573 = vpow.pop %v4572
  %v4574 = vmul.f32 %v4541, 1.442695
  %v4575 = vpow.pop %v4574
  %v4576 = vmul.f32 %v4542, 1.442695
  %v4577 = vpow.pop %v4576
  %v4578 = vmul.f32 %v4543, 1.442695
  %v4579 = vpow.pop %v4578
  %v4580 = vmul.f32 %v4544, 1.442695
  %v4581 = vpow.pop %v4580
  %v4582 = vmul.f32 %v4545, 1.442695
  %v4583 = vpow.pop %v4582
  %v4584 = vmul.f32 %v4546, 1.442695
  %v4585 = vpow.pop %v4584
  %v4586 = vmul.f32 %v4547, 1.442695
  %v4587 = vpow.pop %v4586
  %v4588 = vmul.f32 %v4548, 1.442695
  %v4589 = vpow.pop %v4588
  %v4590 = vmul.f32 %v4549, 1.442695
  %v4591 = vpow.pop %v4590
  %v4592 = vmul.f32 %v4550, 1.442695
  %v4593 = vpow.pop %v4592
  %v4594 = vmul.f32 %v4551, 1.442695
  %v4595 = vpow.pop %v4594
  %v4596 = vmul.f32 %v4552, 1.442695
  %v4597 = vpow.pop %v4596
  %v4598 = vmul.f32 %v4553, 1.442695
  %v4599 = vpow.pop %v4598
  %v4600 = vmul.f32 %v4554, 1.442695
  %v4601 = vpow.pop %v4600
  %v4602 = vmul.f32 %v4555, 1.442695
  %v4603 = vpow.pop %v4602
  %v4604 = vmul.f32 %v4556, 1.442695
  %v4605 = vpow.pop %v4604
  %v4606 = vmul.f32 %v4557, 1.442695
  %v4607 = vpow.pop %v4606
  %v4608 = vmul.f32 %v4558, 1.442695
  %v4609 = vpow.pop %v4608
  %v4610 = vmul.f32 %v4559, 1.442695
  %v4611 = vpow.pop %v4610
  %v4612 = vmul.f32 %v4560, 1.442695
  %v4613 = vpow.pop %v4612
  %v4614 = vmul.f32 %v4561, 1.442695
  %v4615 = vpow.pop %v4614
  %v4616 = vmul.f32 %v4562, 1.442695
  %v4617 = vpow.pop %v4616
  %v4618 = vmul.f32 %v4563, 1.442695
  %v4619 = vpow.pop %v4618
  %v4620 = vadd.f32 %v4565, 1.0
  %v4621 = vadd.f32 %v4567, 1.0
  %v4622 = vadd.f32 %v4569, 1.0
  %v4623 = vadd.f32 %v4571, 1.0
  %v4624 = vadd.f32 %v4573, 1.0
  %v4625 = vadd.f32 %v4575, 1.0
  %v4626 = vadd.f32 %v4577, 1.0
  %v4627 = vadd.f32 %v4579, 1.0
  %v4628 = vadd.f32 %v4581, 1.0
  %v4629 = vadd.f32 %v4583, 1.0
  %v4630 = vadd.f32 %v4585, 1.0
  %v4631 = vadd.f32 %v4587, 1.0
  %v4632 = vadd.f32 %v4589, 1.0
  %v4633 = vadd.f32 %v4591, 1.0
  %v4634 = vadd.f32 %v4593, 1.0
  %v4635 = vadd.f32 %v4595, 1.0
  %v4636 = vadd.f32 %v4597, 1.0
  %v4637 = vadd.f32 %v4599, 1.0
  %v4638 = vadd.f32 %v4601, 1.0
  %v4639 = vadd.f32 %v4603, 1.0
  %v4640 = vadd.f32 %v4605, 1.0
  %v4641 = vadd.f32 %v4607, 1.0
  %v4642 = vadd.f32 %v4609, 1.0
  %v4643 = vadd.f32 %v4611, 1.0
  %v4644 = vadd.f32 %v4613, 1.0
  %v4645 = vadd.f32 %v4615, 1.0
  %v4646 = vadd.f32 %v4617, 1.0
  %v4647 = vadd.f32 %v4619, 1.0
  %v4648 = vrcp.pop %v4620
  %v4649 = vmul.f32 1.0, %v4648
  %v4650 = vrcp.pop %v4621
  %v4651 = vmul.f32 1.0, %v4650
  %v4652 = vrcp.pop %v4622
  %v4653 = vmul.f32 1.0, %v4652
  %v4654 = vrcp.pop %v4623
  %v4655 = vmul.f32 1.0, %v4654
  %v4656 = vrcp.pop %v4624
  %v4657 = vmul.f32 1.0, %v4656
  %v4658 = vrcp.pop %v4625
  %v4659 = vmul.f32 1.0, %v4658
  %v4660 = vrcp.pop %v4626
  %v4661 = vmul.f32 1.0, %v4660
  %v4662 = vrcp.pop %v4627
  %v4663 = vmul.f32 1.0, %v4662
  %v4664 = vrcp.pop %v4628
  %v4665 = vmul.f32 1.0, %v4664
  %v4666 = vrcp.pop %v4629
  %v4667 = vmul.f32 1.0, %v4666
  %v4668 = vrcp.pop %v4630
  %v4669 = vmul.f32 1.0, %v4668
  %v4670 = vrcp.pop %v4631
  %v4671 = vmul.f32 1.0, %v4670
  %v4672 = vrcp.pop %v4632
  %v4673 = vmul.f32 1.0, %v4672
  %v4674 = vrcp.pop %v4633
  %v4675 = vmul.f32 1.0, %v4674
  %v4676 = vrcp.pop %v4634
  %v4677 = vmul.f32 1.0, %v4676
  %v4678 = vrcp.pop %v4635
  %v4679 = vmul.f32 1.0, %v4678
  %v4680 = vrcp.pop %v4636
  %v4681 = vmul.f32 1.0, %v4680
  %v4682 = vrcp.pop %v4637
  %v4683 = vmul.f32 1.0, %v4682
  %v4684 = vrcp.pop %v4638
  %v4685 = vmul.f32 1.0, %v4684
  %v4686 = vrcp.pop %v4639
  %v4687 = vmul.f32 1.0, %v4686
  %v4688 = vrcp.pop %v4640
  %v4689 = vmul.f32 1.0, %v4688
  %v4690 = vrcp.pop %v4641
  %v4691 = vmul.f32 1.0, %v4690
  %v4692 = vrcp.pop %v4642
  %v4693 = vmul.f32 1.0, %v4692
  %v4694 = vrcp.pop %v4643
  %v4695 = vmul.f32 1.0, %v4694
  %v4696 = vrcp.pop %v4644
  %v4697 = vmul.f32 1.0, %v4696
  %v4698 = vrcp.pop %v4645
  %v4699 = vmul.f32 1.0, %v4698
  %v4700 = vrcp.pop %v4646
  %v4701 = vmul.f32 1.0, %v4700
  %v4702 = vrcp.pop %v4647
  %v4703 = vmul.f32 1.0, %v4702
  %v4704 = vld [vmem:[%s8] sm:$0xff]
  %v4705 = vld [vmem:[%s8 + $0x8] sm:$0xff]
  %v4706 = vld [vmem:[%s8 + $0x10] sm:$0xff]
  %v4707 = vld [vmem:[%s8 + $0x18] sm:$0xff]
  %v4708 = vld [vmem:[%s8 + $0x20] sm:$0xff]
  %v4709 = vld [vmem:[%s7] sm:$0xff]
  %v4710 = vld [vmem:[%s7 + $0x8] sm:$0xff]
  %v4711 = vld [vmem:[%s7 + $0x10] sm:$0xff]
  %v4712 = vld [vmem:[%s7 + $0x18] sm:$0xff]
  %v4713 = vld [vmem:[%s7 + $0x20] sm:$0xff]
  %v4714 = vld [vmem:[%s7 + $0x28] sm:$0xff]
  %v4715 = vld [vmem:[%s7 + $0x30] sm:$0xff]
  %v4716 = vld [vmem:[%s7 + $0x38] sm:$0xff]
  %v4717 = vld [vmem:[%s7 + $0x40] sm:$0xff]
  %v4718 = vld [vmem:[%s7 + $0x48] sm:$0xff]
  %v4719 = vld [vmem:[%s7 + $0x50] sm:$0xff]
  %v4720 = vld [vmem:[%s7 + $0x58] sm:$0xff]
  %v4721 = vld [vmem:[%s7 + $0x60] sm:$0xff]
  %v4722 = vld [vmem:[%s7 + $0x68] sm:$0xff]
  %v4723 = vld [vmem:[%s7 + $0x70] sm:$0xff]
  %v4724 = vld [vmem:[%s7 + $0x78] sm:$0xff]
  %v4725 = vld [vmem:[%s7 + $0x80] sm:$0xff]
  %v4726 = vld [vmem:[%s7 + $0x88] sm:$0xff]
  %v4727 = vld [vmem:[%s7 + $0x90] sm:$0xff]
  %v4728 = vld [vmem:[%s7 + $0x98] sm:$0xff]
  %v4730 = vsel %vm134, %v4651, 0
  %v4733 = vsel %vm134, %v4655, 0
  %v4736 = vsel %vm134, %v4659, 0
  %v4739 = vsel %vm134, %v4663, 0
  %v4742 = vsel %vm134, %v4667, 0
  %v4745 = vsel %vm134, %v4671, 0
  %v4748 = vsel %vm134, %v4675, 0
  %v4751 = vsel %vm134, %v4679, 0
  %v4754 = vsel %vm134, %v4683, 0
  %v4757 = vsel %vm134, %v4687, 0
  %v4760 = vsel %vm134, %v4691, 0
  %v4763 = vsel %vm134, %v4695, 0
  %v4766 = vsel %vm134, %v4699, 0
  %v4769 = vsel %vm134, %v4703, 0
  %4771 = vmatprep.subr.mxu0 0.0
  %4772 = vmatpush1.msra.mxu0 %v4709
  %4773 = vmatprep.subr.mxu0 0.0
  %4774 = vmatpush1.msra.mxu0 %v4710
  %4775 = vmatprep.subr.mxu0 0.0
  %4776 = vmatpush1.msra.mxu0 %v4711
  %4777 = vmatprep.subr.mxu0 0.0
  %4778 = vmatpush1.msra.mxu0 %v4712
  %4779 = vmatprep.subr.mxu0 0.0
  %4780 = vmatpush1.msra.mxu0 %v4713
  %4781 = vmatprep.subr.mxu0 0.0
  %4782 = vmatpush1.msra.mxu0 %v4714
  %4783 = vmatprep.subr.mxu0 0.0
  %4784 = vmatpush1.msra.mxu0 %v4715
  %4785 = vmatprep.subr.mxu0 0.0
  %4786 = vmatpush1.msra.mxu0 %v4716
  %4787 = vmatprep.subr.mxu0 0.0
  %4788 = vmatpush1.msra.mxu0 %v4717
  %4789 = vmatprep.subr.mxu0 0.0
  %4790 = vmatpush1.msra.mxu0 %v4718
  %4791 = vmatprep.subr.mxu0 0.0
  %4792 = vmatpush1.msra.mxu0 %v4719
  %4793 = vmatprep.subr.mxu0 0.0
  %4794 = vmatpush1.msra.mxu0 %v4720
  %4795 = vmatprep.subr.mxu0 0.0
  %4796 = vmatpush1.msra.mxu0 %v4721
  %4797 = vmatprep.subr.mxu0 0.0
  %4798 = vmatpush1.msra.mxu0 %v4722
  %4799 = vmatprep.subr.mxu0 0.0
  %4800 = vmatpush1.msra.mxu0 %v4723
  %4801 = vmatprep.subr.mxu0 0.0
  %4802 = vmatpush1.msra.mxu0 %v4724
  %4803 = vmatprep.subr.mxu0 0.0
  %4804 = vmatpush1.msra.mxu0 %v4725
  %4805 = vmatprep.subr.mxu0 0.0
  %4806 = vmatpush1.msra.mxu0 %v4726
  %4807 = vmatprep.subr.mxu0 0.0
  %4808 = vmatpush1.msra.mxu0 %v4727
  %4809 = vmatprep.subr.mxu0 0.0
  %4810 = vmatpush1.msra.mxu0 %v4728
  %4811 = vmatprep.subr.mxu0 0.0
  %4812 = vmatpush1.msra.mxu0 0.0
  %4813 = vmatprep.subr.mxu0 0.0
  %4814 = vmatpush1.msra.mxu0 0.0
  %4815 = vmatprep.subr.mxu0 0.0
  %4816 = vmatpush1.msra.mxu0 0.0
  %4817 = vmatprep.subr.mxu0 0.0
  %4818 = vmatpush1.msra.mxu0 0.0
  %4819 = vmatprep.subr.mxu0 0.0
  %4820 = vmatpush1.msra.mxu0 0.0
  %4821 = vmatprep.subr.mxu0 0.0
  %4822 = vmatpush1.msra.mxu0 0.0
  %4823 = vmatprep.subr.mxu0 0.0
  %4824 = vmatpush1.msra.mxu0 0.0
  %4825 = vmatprep.subr.mxu0 0.0
  %4826 = vmatpush1.msra.mxu0 0.0
  %4827 = vmatprep.subr.mxu0 0.0
  %4828 = vmatpush1.msra.mxu0 0.0
  %4829 = vmatprep.subr.mxu0 0.0
  %4830 = vmatpush1.msra.mxu0 0.0
  %4831 = vmatprep.subr.mxu0 0.0
  %4832 = vmatpush1.msra.mxu0 0.0
  %4833 = vmatprep.subr.mxu0 0.0
  %4834 = vmatpush1.msra.mxu0 0.0
  %4835 = vmatprep.mubr.f32.mxu0 %v4730
  %4836 = vmatmul.mubr.f32.gmra.mrb[0].mxu0 %v4649
  %v4837 = vpop.f32.mrb[0].mxu0
  %v4838 = vadd.f32 0.0, %v4837
  %v4839 = vpop.f32.mrb[0].mxu0
  %4840 = vmatprep.mubr.f32.mxu0 %v4733
  %4841 = vmatmul.mubr.f32.gmra.mrb[0].mxu0 %v4653
  %v4842 = vpop.f32.mrb[0].mxu0
  %v4843 = vadd.f32 0.0, %v4842
  %v4844 = vpop.f32.mrb[0].mxu0
  %4845 = vmatprep.mubr.f32.mxu0 %v4736
  %4846 = vmatmul.mubr.f32.gmra.mrb[0].mxu0 %v4657
  %v4847 = vpop.f32.mrb[0].mxu0
  %v4848 = vadd.f32 0.0, %v4847
  %v4849 = vpop.f32.mrb[0].mxu0
  %4850 = vmatprep.mubr.f32.mxu0 %v4739
  %4851 = vmatmul.mubr.f32.gmra.mrb[0].mxu0 %v4661
  %v4852 = vpop.f32.mrb[0].mxu0
  %v4853 = vadd.f32 0.0, %v4852
  %v4854 = vpop.f32.mrb[0].mxu0
  %4855 = vmatprep.mubr.f32.mxu0 %v4742
  %4856 = vmatmul.mubr.f32.gmra.mrb[0].mxu0 %v4665
  %v4857 = vpop.f32.mrb[0].mxu0
  %v4858 = vadd.f32 0.0, %v4857
  %v4859 = vpop.f32.mrb[0].mxu0
  %4860 = vmatprep.mubr.f32.mxu0 %v4745
  %4861 = vmatmul.mubr.f32.gmra.mrb[0].mxu0 %v4669
  %v4862 = vpop.f32.mrb[0].mxu0
  %v4863 = vadd.f32 0.0, %v4862
  %v4864 = vpop.f32.mrb[0].mxu0
  %4865 = vmatprep.mubr.f32.mxu0 %v4748
  %4866 = vmatmul.mubr.f32.gmra.mrb[0].mxu0 %v4673
  %v4867 = vpop.f32.mrb[0].mxu0
  %v4868 = vadd.f32 0.0, %v4867
  %v4869 = vpop.f32.mrb[0].mxu0
  %4870 = vmatprep.mubr.f32.mxu0 %v4751
  %4871 = vmatmul.mubr.f32.gmra.mrb[0].mxu0 %v4677
  %v4872 = vpop.f32.mrb[0].mxu0
  %v4873 = vadd.f32 0.0, %v4872
  %v4874 = vpop.f32.mrb[0].mxu0
  %4875 = vmatprep.mubr.f32.mxu0 %v4754
  %4876 = vmatmul.mubr.f32.gmra.mrb[0].mxu0 %v4681
  %v4877 = vpop.f32.mrb[0].mxu0
  %v4878 = vadd.f32 0.0, %v4877
  %v4879 = vpop.f32.mrb[0].mxu0
  %4880 = vmatprep.mubr.f32.mxu0 %v4757
  %4881 = vmatmul.mubr.f32.gmra.mrb[0].mxu0 %v4685
  %v4882 = vpop.f32.mrb[0].mxu0
  %v4883 = vadd.f32 0.0, %v4882
  %v4884 = vpop.f32.mrb[0].mxu0
  %4885 = vmatprep.mubr.f32.mxu0 %v4760
  %4886 = vmatmul.mubr.f32.gmra.mrb[0].mxu0 %v4689
  %v4887 = vpop.f32.mrb[0].mxu0
  %v4888 = vadd.f32 0.0, %v4887
  %v4889 = vpop.f32.mrb[0].mxu0
  %4890 = vmatprep.mubr.f32.mxu0 %v4763
  %4891 = vmatmul.mubr.f32.gmra.mrb[0].mxu0 %v4693
  %v4892 = vpop.f32.mrb[0].mxu0
  %v4893 = vadd.f32 0.0, %v4892
  %v4894 = vpop.f32.mrb[0].mxu0
  %4895 = vmatprep.mubr.f32.mxu0 %v4766
  %4896 = vmatmul.mubr.f32.gmra.mrb[0].mxu0 %v4697
  %v4897 = vpop.f32.mrb[0].mxu0
  %v4898 = vadd.f32 0.0, %v4897
  %v4899 = vpop.f32.mrb[0].mxu0
  %4900 = vmatprep.mubr.f32.mxu0 %v4769
  %4901 = vmatmul.mubr.f32.gmra.mrb[0].mxu0 %v4701
  %v4902 = vpop.f32.mrb[0].mxu0
  %v4903 = vadd.f32 0.0, %v4902
  %v4904 = vpop.f32.mrb[0].mxu0
  %4905 = vdwg.mxu0
  %vm4906 = vcmask 883712
  %v4908 = vsel %vm4906, %v4704, 0
  %v4911 = vsel %vm4906, %v4705, 0
  %v4914 = vsel %vm4906, %v4706, 0
  %v4917 = vsel %vm4906, %v4707, 0
  %v4920 = vsel %vm4906, %v4708, 0
  %v4923 = vsel %vm3089, %v4903, 0
  %4925 = vmatprep.subr.mxu0 0.0
  %4926 = vmatpush1.msra.mxu0 %v4838
  %4927 = vmatprep.subr.mxu0 0.0
  %4928 = vmatpush1.msra.mxu0 %v4843
  %4929 = vmatprep.subr.mxu0 0.0
  %4930 = vmatpush1.msra.mxu0 %v4848
  %4931 = vmatprep.subr.mxu0 0.0
  %4932 = vmatpush1.msra.mxu0 %v4853
  %4933 = vmatprep.subr.mxu0 0.0
  %4934 = vmatpush1.msra.mxu0 %v4858
  %4935 = vmatprep.subr.mxu0 0.0
  %4936 = vmatpush1.msra.mxu0 %v4863
  %4937 = vmatprep.subr.mxu0 0.0
  %4938 = vmatpush1.msra.mxu0 %v4868
  %4939 = vmatprep.subr.mxu0 0.0
  %4940 = vmatpush1.msra.mxu0 %v4873
  %4941 = vmatprep.subr.mxu0 0.0
  %4942 = vmatpush1.msra.mxu0 %v4878
  %4943 = vmatprep.subr.mxu0 0.0
  %4944 = vmatpush1.msra.mxu0 %v4883
  %4945 = vmatprep.subr.mxu0 0.0
  %4946 = vmatpush1.msra.mxu0 %v4888
  %4947 = vmatprep.subr.mxu0 0.0
  %4948 = vmatpush1.msra.mxu0 %v4893
  %4949 = vmatprep.subr.mxu0 0.0
  %4950 = vmatpush1.msra.mxu0 %v4898
  %4951 = vmatprep.subr.mxu0 0.0
  %4952 = vmatpush1.msra.mxu0 %v4923
  %4953 = vmatprep.subr.mxu0 0.0
  %4954 = vmatpush1.msra.mxu0 0.0
  %4955 = vmatprep.subr.mxu0 0.0
  %4956 = vmatpush1.msra.mxu0 0.0
  %4957 = vmatprep.subr.mxu0 0.0
  %4958 = vmatpush1.msra.mxu0 0.0
  %4959 = vmatprep.subr.mxu0 0.0
  %4960 = vmatpush1.msra.mxu0 0.0
  %4961 = vmatprep.subr.mxu0 0.0
  %4962 = vmatpush1.msra.mxu0 0.0
  %4963 = vmatprep.subr.mxu0 0.0
  %4964 = vmatpush1.msra.mxu0 0.0
  %4965 = vmatprep.subr.mxu0 0.0
  %4966 = vmatpush1.msra.mxu0 0.0
  %4967 = vmatprep.subr.mxu0 0.0
  %4968 = vmatpush1.msra.mxu0 0.0
  %4969 = vmatprep.subr.mxu0 0.0
  %4970 = vmatpush1.msra.mxu0 0.0
  %4971 = vmatprep.subr.mxu0 0.0
  %4972 = vmatpush1.msra.mxu0 0.0
  %4973 = vmatprep.subr.mxu0 0.0
  %4974 = vmatpush1.msra.mxu0 0.0
  %4975 = vmatprep.subr.mxu0 0.0
  %4976 = vmatpush1.msra.mxu0 0.0
  %4977 = vmatprep.subr.mxu0 0.0
  %4978 = vmatpush1.msra.mxu0 0.0
  %4979 = vmatprep.subr.mxu0 0.0
  %4980 = vmatpush1.msra.mxu0 0.0
  %4981 = vmatprep.subr.mxu0 0.0
  %4982 = vmatpush1.msra.mxu0 0.0
  %4983 = vmatprep.subr.mxu0 0.0
  %4984 = vmatpush1.msra.mxu0 0.0
  %4985 = vmatprep.subr.mxu0 0.0
  %4986 = vmatpush1.msra.mxu0 0.0
  %4987 = vmatprep.subr.mxu0 0.0
  %4988 = vmatpush1.msra.mxu0 0.0
  %4989 = vmatprep.mubr.f32.mxu0 0.0
  %4990 = vmatmul.mubr.f32.gmra.mrb[0].mxu0 %v4908
  %v4991 = vpop.f32.mrb[0].mxu0
  %v4992 = vadd.f32 0.0, %v4991
  %v4993 = vpop.f32.mrb[0].mxu0
  %4994 = vmatprep.mubr.f32.mxu0 0.0
  %4995 = vmatmul.mubr.f32.gmra.mrb[0].mxu0 %v4911
  %v4996 = vpop.f32.mrb[0].mxu0
  %v4997 = vadd.f32 0.0, %v4996
  %v4998 = vpop.f32.mrb[0].mxu0
  %4999 = vmatprep.mubr.f32.mxu0 0.0
  %5000 = vmatmul.mubr.f32.gmra.mrb[0].mxu0 %v4914
  %v5001 = vpop.f32.mrb[0].mxu0
  %v5002 = vadd.f32 0.0, %v5001
  %v5003 = vpop.f32.mrb[0].mxu0
  %5004 = vmatprep.mubr.f32.mxu0 0.0
  %5005 = vmatmul.mubr.f32.gmra.mrb[0].mxu0 %v4917
  %v5006 = vpop.f32.mrb[0].mxu0
  %v5007 = vadd.f32 0.0, %v5006
  %v5008 = vpop.f32.mrb[0].mxu0
  %5009 = vmatprep.mubr.f32.mxu0 0.0
  %5010 = vmatmul.mubr.f32.gmra.mrb[0].mxu0 %v4920
  %v5011 = vpop.f32.mrb[0].mxu0
  %v5012 = vadd.f32 0.0, %v5011
  %v5013 = vpop.f32.mrb[0].mxu0
  %5014 = vdwg.mxu0
  %vm5015 = vcmask 654336
  %5016 = vst.msk [vmem:[#allocation3] sm:$0xff] %vm5015, %v4992
  %5017 = vst.msk [vmem:[#allocation3 + $0x8] sm:$0xff] %vm5015, %v4997
  %5018 = vst.msk [vmem:[#allocation3 + $0x10] sm:$0xff] %vm5015, %v5002
  %5019 = vst.msk [vmem:[#allocation3 + $0x18] sm:$0xff] %vm5015, %v5007
  %5020 = vst.msk [vmem:[#allocation3 + $0x20] sm:$0xff] %vm5015, %v5012
  %v5021 = vld [vmem:[#allocation3] sm:$0xff]
  %v5022 = vld [vmem:[#allocation3 + $0x8] sm:$0xff]
  %v5023 = vld [vmem:[#allocation3 + $0x10] sm:$0xff]
  %v5024 = vld [vmem:[#allocation3 + $0x18] sm:$0xff]
  %v5025 = vld [vmem:[#allocation3 + $0x20] sm:$0xf]
  %v5026 = vld [vmem:[%s9] sm:$0xff]
  %v5027 = vld [vmem:[%s9 + $0x8] sm:$0xff]
  %v5028 = vld [vmem:[%s9 + $0x10] sm:$0xff]
  %v5029 = vld [vmem:[%s9 + $0x18] sm:$0xff]
  %v5030 = vld [vmem:[%s9 + $0x20] sm:$0xff]
  %v5031 = vld [vmem:[%s9 + $0x28] sm:$0xff]
  %v5032 = vld [vmem:[%s9 + $0x30] sm:$0xff]
  %v5033 = vld [vmem:[%s9 + $0x38] sm:$0xff]
  %v5034 = vld [vmem:[%s9 + $0x40] sm:$0xff]
  %v5035 = vld [vmem:[%s9 + $0x48] sm:$0xff]
  %v5036 = vld [vmem:[#allocation3 + $0x1] sm:$0xff]
  %v5037 = vld [vmem:[#allocation3 + $0x9] sm:$0xff]
  %v5038 = vld [vmem:[#allocation3 + $0x11] sm:$0xff]
  %v5039 = vld [vmem:[#allocation3 + $0x19] sm:$0xff]
  %v5040 = vld [vmem:[#allocation3 + $0x21] sm:$0xf]
  %s5041 = scalar_lea.vmem %s9, 80
  %v5042 = vld [vmem:[%s5041] sm:$0xff]
  %v5043 = vld [vmem:[%s5041 + $0x8] sm:$0xff]
  %v5044 = vld [vmem:[%s5041 + $0x10] sm:$0xff]
  %v5045 = vld [vmem:[%s5041 + $0x18] sm:$0xff]
  %v5046 = vld [vmem:[%s5041 + $0x20] sm:$0xff]
  %v5047 = vld [vmem:[%s5041 + $0x28] sm:$0xff]
  %v5048 = vld [vmem:[%s5041 + $0x30] sm:$0xff]
  %v5049 = vld [vmem:[%s5041 + $0x38] sm:$0xff]
  %v5050 = vld [vmem:[%s5041 + $0x40] sm:$0xff]
  %v5051 = vld [vmem:[%s5041 + $0x48] sm:$0xff]
  %v5053 = vsel %vm5015, %v5036, 0
  %v5056 = vsel %vm5015, %v5037, 0
  %v5059 = vsel %vm5015, %v5038, 0
  %v5062 = vsel %vm5015, %v5039, 0
  %v5065 = vsel %vm5015, %v5040, 0
  %5067 = vmatprep.subr.mxu0 0.0
  %5068 = vmatpush1.msra.mxu0 %v5042
  %5069 = vmatprep.subr.mxu0 0.0
  %5070 = vmatpush1.msra.mxu0 %v5043
  %5071 = vmatprep.subr.mxu0 0.0
  %5072 = vmatpush1.msra.mxu0 %v5044
  %5073 = vmatprep.subr.mxu0 0.0
  %5074 = vmatpush1.msra.mxu0 %v5045
  %5075 = vmatprep.subr.mxu0 0.0
  %5076 = vmatpush1.msra.mxu0 %v5046
  %5077 = vmatprep.subr.mxu0 0.0
  %5078 = vmatpush1.msra.mxu0 %v5047
  %5079 = vmatprep.subr.mxu0 0.0
  %5080 = vmatpush1.msra.mxu0 %v5048
  %5081 = vmatprep.subr.mxu0 0.0
  %5082 = vmatpush1.msra.mxu0 %v5049
  %5083 = vmatprep.subr.mxu0 0.0
  %5084 = vmatpush1.msra.mxu0 %v5050
  %5085 = vmatprep.subr.mxu0 0.0
  %5086 = vmatpush1.msra.mxu0 %v5051
  %5087 = vmatprep.subr.mxu0 0.0
  %5088 = vmatpush1.msra.mxu0 0.0
  %5089 = vmatprep.subr.mxu0 0.0
  %5090 = vmatpush1.msra.mxu0 0.0
  %5091 = vmatprep.subr.mxu0 0.0
  %5092 = vmatpush1.msra.mxu0 0.0
  %5093 = vmatprep.subr.mxu0 0.0
  %5094 = vmatpush1.msra.mxu0 0.0
  %5095 = vmatprep.subr.mxu0 0.0
  %5096 = vmatpush1.msra.mxu0 0.0
  %5097 = vmatprep.subr.mxu0 0.0
  %5098 = vmatpush1.msra.mxu0 0.0
  %5099 = vmatprep.subr.mxu0 0.0
  %5100 = vmatpush1.msra.mxu0 0.0
  %5101 = vmatprep.subr.mxu0 0.0
  %5102 = vmatpush1.msra.mxu0 0.0
  %5103 = vmatprep.subr.mxu0 0.0
  %5104 = vmatpush1.msra.mxu0 0.0
  %5105 = vmatprep.subr.mxu0 0.0
  %5106 = vmatpush1.msra.mxu0 0.0
  %5107 = vmatprep.subr.mxu0 0.0
  %5108 = vmatpush1.msra.mxu0 0.0
  %5109 = vmatprep.subr.mxu0 0.0
  %5110 = vmatpush1.msra.mxu0 0.0
  %5111 = vmatprep.subr.mxu0 0.0
  %5112 = vmatpush1.msra.mxu0 0.0
  %5113 = vmatprep.subr.mxu0 0.0
  %5114 = vmatpush1.msra.mxu0 0.0
  %5115 = vmatprep.subr.mxu0 0.0
  %5116 = vmatpush1.msra.mxu0 0.0
  %5117 = vmatprep.subr.mxu0 0.0
  %5118 = vmatpush1.msra.mxu0 0.0
  %5119 = vmatprep.subr.mxu0 0.0
  %5120 = vmatpush1.msra.mxu0 0.0
  %5121 = vmatprep.subr.mxu0 0.0
  %5122 = vmatpush1.msra.mxu0 0.0
  %5123 = vmatprep.subr.mxu0 0.0
  %5124 = vmatpush1.msra.mxu0 0.0
  %5125 = vmatprep.subr.mxu0 0.0
  %5126 = vmatpush1.msra.mxu0 0.0
  %5127 = vmatprep.subr.mxu0 0.0
  %5128 = vmatpush1.msra.mxu0 0.0
  %5129 = vmatprep.subr.mxu0 0.0
  %5130 = vmatpush1.msra.mxu0 0.0
  %5131 = vmatprep.mubr.f32.mxu0 0.0
  %5132 = vmatmul.mubr.f32.gmra.mrb[0].mxu0 %v5053
  %v5133 = vpop.f32.mrb[0].mxu0
  %v5134 = vadd.f32 0.0, %v5133
  %v5135 = vpop.f32.mrb[0].mxu0
  %5136 = vmatprep.mubr.f32.mxu0 0.0
  %5137 = vmatmul.mubr.f32.gmra.mrb[0].mxu0 %v5056
  %v5138 = vpop.f32.mrb[0].mxu0
  %v5139 = vadd.f32 0.0, %v5138
  %v5140 = vpop.f32.mrb[0].mxu0
  %5141 = vmatprep.mubr.f32.mxu0 0.0
  %5142 = vmatmul.mubr.f32.gmra.mrb[0].mxu0 %v5059
  %v5143 = vpop.f32.mrb[0].mxu0
  %v5144 = vadd.f32 0.0, %v5143
  %v5145 = vpop.f32.mrb[0].mxu0
  %5146 = vmatprep.mubr.f32.mxu0 0.0
  %5147 = vmatmul.mubr.f32.gmra.mrb[0].mxu0 %v5062
  %v5148 = vpop.f32.mrb[0].mxu0
  %v5149 = vadd.f32 0.0, %v5148
  %v5150 = vpop.f32.mrb[0].mxu0
  %5151 = vmatprep.mubr.f32.mxu0 0.0
  %5152 = vmatmul.mubr.f32.gmra.mrb[0].mxu0 %v5065
  %v5153 = vpop.f32.mrb[0].mxu0
  %v5154 = vadd.f32 0.0, %v5153
  %v5155 = vpop.f32.mrb[0].mxu0
  %5156 = vdwg.mxu0
  %v5158 = vsel %vm5015, %v5021, 0
  %v5161 = vsel %vm5015, %v5022, 0
  %v5164 = vsel %vm5015, %v5023, 0
  %v5167 = vsel %vm5015, %v5024, 0
  %v5170 = vsel %vm5015, %v5025, 0
  %5172 = vmatprep.subr.mxu0 0.0
  %5173 = vmatpush1.msra.mxu0 %v5026
  %5174 = vmatprep.subr.mxu0 0.0
  %5175 = vmatpush1.msra.mxu0 %v5027
  %5176 = vmatprep.subr.mxu0 0.0
  %5177 = vmatpush1.msra.mxu0 %v5028
  %5178 = vmatprep.subr.mxu0 0.0
  %5179 = vmatpush1.msra.mxu0 %v5029
  %5180 = vmatprep.subr.mxu0 0.0
  %5181 = vmatpush1.msra.mxu0 %v5030
  %5182 = vmatprep.subr.mxu0 0.0
  %5183 = vmatpush1.msra.mxu0 %v5031
  %5184 = vmatprep.subr.mxu0 0.0
  %5185 = vmatpush1.msra.mxu0 %v5032
  %5186 = vmatprep.subr.mxu0 0.0
  %5187 = vmatpush1.msra.mxu0 %v5033
  %5188 = vmatprep.subr.mxu0 0.0
  %5189 = vmatpush1.msra.mxu0 %v5034
  %5190 = vmatprep.subr.mxu0 0.0
  %5191 = vmatpush1.msra.mxu0 %v5035
  %5192 = vmatprep.subr.mxu0 0.0
  %5193 = vmatpush1.msra.mxu0 0.0
  %5194 = vmatprep.subr.mxu0 0.0
  %5195 = vmatpush1.msra.mxu0 0.0
  %5196 = vmatprep.subr.mxu0 0.0
  %5197 = vmatpush1.msra.mxu0 0.0
  %5198 = vmatprep.subr.mxu0 0.0
  %5199 = vmatpush1.msra.mxu0 0.0
  %5200 = vmatprep.subr.mxu0 0.0
  %5201 = vmatpush1.msra.mxu0 0.0
  %5202 = vmatprep.subr.mxu0 0.0
  %5203 = vmatpush1.msra.mxu0 0.0
  %5204 = vmatprep.subr.mxu0 0.0
  %5205 = vmatpush1.msra.mxu0 0.0
  %5206 = vmatprep.subr.mxu0 0.0
  %5207 = vmatpush1.msra.mxu0 0.0
  %5208 = vmatprep.subr.mxu0 0.0
  %5209 = vmatpush1.msra.mxu0 0.0
  %5210 = vmatprep.subr.mxu0 0.0
  %5211 = vmatpush1.msra.mxu0 0.0
  %5212 = vmatprep.subr.mxu0 0.0
  %5213 = vmatpush1.msra.mxu0 0.0
  %5214 = vmatprep.subr.mxu0 0.0
  %5215 = vmatpush1.msra.mxu0 0.0
  %5216 = vmatprep.subr.mxu0 0.0
  %5217 = vmatpush1.msra.mxu0 0.0
  %5218 = vmatprep.subr.mxu0 0.0
  %5219 = vmatpush1.msra.mxu0 0.0
  %5220 = vmatprep.subr.mxu0 0.0
  %5221 = vmatpush1.msra.mxu0 0.0
  %5222 = vmatprep.subr.mxu0 0.0
  %5223 = vmatpush1.msra.mxu0 0.0
  %5224 = vmatprep.subr.mxu0 0.0
  %5225 = vmatpush1.msra.mxu0 0.0
  %5226 = vmatprep.subr.mxu0 0.0
  %5227 = vmatpush1.msra.mxu0 0.0
  %5228 = vmatprep.subr.mxu0 0.0
  %5229 = vmatpush1.msra.mxu0 0.0
  %5230 = vmatprep.subr.mxu0 0.0
  %5231 = vmatpush1.msra.mxu0 0.0
  %5232 = vmatprep.subr.mxu0 0.0
  %5233 = vmatpush1.msra.mxu0 0.0
  %5234 = vmatprep.subr.mxu0 0.0
  %5235 = vmatpush1.msra.mxu0 0.0
  %5236 = vmatprep.mubr.f32.mxu0 0.0
  %5237 = vmatmul.mubr.f32.gmra.mrb[0].mxu0 %v5158
  %v5238 = vpop.f32.mrb[0].mxu0
  %v5239 = vadd.f32 %v5134, %v5238
  %v5240 = vpop.f32.mrb[0].mxu0
  %5241 = vmatprep.mubr.f32.mxu0 0.0
  %5242 = vmatmul.mubr.f32.gmra.mrb[0].mxu0 %v5161
  %v5243 = vpop.f32.mrb[0].mxu0
  %v5244 = vadd.f32 %v5139, %v5243
  %v5245 = vpop.f32.mrb[0].mxu0
  %5246 = vmatprep.mubr.f32.mxu0 0.0
  %5247 = vmatmul.mubr.f32.gmra.mrb[0].mxu0 %v5164
  %v5248 = vpop.f32.mrb[0].mxu0
  %v5249 = vadd.f32 %v5144, %v5248
  %v5250 = vpop.f32.mrb[0].mxu0
  %5251 = vmatprep.mubr.f32.mxu0 0.0
  %5252 = vmatmul.mubr.f32.gmra.mrb[0].mxu0 %v5167
  %v5253 = vpop.f32.mrb[0].mxu0
  %v5254 = vadd.f32 %v5149, %v5253
  %v5255 = vpop.f32.mrb[0].mxu0
  %5256 = vmatprep.mubr.f32.mxu0 0.0
  %5257 = vmatmul.mubr.f32.gmra.mrb[0].mxu0 %v5170
  %v5258 = vpop.f32.mrb[0].mxu0
  %v5259 = vadd.f32 %v5154, %v5258
  %v5260 = vpop.f32.mrb[0].mxu0
  %5261 = vdwg.mxu0
  %v5262 = vld [vmem:[#allocation3 + $0x2] sm:$0xff]
  %v5263 = vld [vmem:[#allocation3 + $0xa] sm:$0xff]
  %v5264 = vld [vmem:[#allocation3 + $0x12] sm:$0xff]
  %v5265 = vld [vmem:[#allocation3 + $0x1a] sm:$0xff]
  %v5266 = vld [vmem:[#allocation3 + $0x22] sm:$0xf]
  %s5267 = scalar_lea.vmem %s9, 160
  %v5268 = vld [vmem:[%s5267] sm:$0xff]
  %v5269 = vld [vmem:[%s5267 + $0x8] sm:$0xff]
  %v5270 = vld [vmem:[%s5267 + $0x10] sm:$0xff]
  %v5271 = vld [vmem:[%s5267 + $0x18] sm:$0xff]
  %v5272 = vld [vmem:[%s5267 + $0x20] sm:$0xff]
  %v5273 = vld [vmem:[%s5267 + $0x28] sm:$0xff]
  %v5274 = vld [vmem:[%s5267 + $0x30] sm:$0xff]
  %v5275 = vld [vmem:[%s5267 + $0x38] sm:$0xff]
  %v5276 = vld [vmem:[%s5267 + $0x40] sm:$0xff]
  %v5277 = vld [vmem:[%s5267 + $0x48] sm:$0xff]
  %v5279 = vsel %vm5015, %v5262, 0
  %v5282 = vsel %vm5015, %v5263, 0
  %v5285 = vsel %vm5015, %v5264, 0
  %v5288 = vsel %vm5015, %v5265, 0
  %v5291 = vsel %vm5015, %v5266, 0
  %5293 = vmatprep.subr.mxu0 0.0
  %5294 = vmatpush1.msra.mxu0 %v5268
  %5295 = vmatprep.subr.mxu0 0.0
  %5296 = vmatpush1.msra.mxu0 %v5269
  %5297 = vmatprep.subr.mxu0 0.0
  %5298 = vmatpush1.msra.mxu0 %v5270
  %5299 = vmatprep.subr.mxu0 0.0
  %5300 = vmatpush1.msra.mxu0 %v5271
  %5301 = vmatprep.subr.mxu0 0.0
  %5302 = vmatpush1.msra.mxu0 %v5272
  %5303 = vmatprep.subr.mxu0 0.0
  %5304 = vmatpush1.msra.mxu0 %v5273
  %5305 = vmatprep.subr.mxu0 0.0
  %5306 = vmatpush1.msra.mxu0 %v5274
  %5307 = vmatprep.subr.mxu0 0.0
  %5308 = vmatpush1.msra.mxu0 %v5275
  %5309 = vmatprep.subr.mxu0 0.0
  %5310 = vmatpush1.msra.mxu0 %v5276
  %5311 = vmatprep.subr.mxu0 0.0
  %5312 = vmatpush1.msra.mxu0 %v5277
  %5313 = vmatprep.subr.mxu0 0.0
  %5314 = vmatpush1.msra.mxu0 0.0
  %5315 = vmatprep.subr.mxu0 0.0
  %5316 = vmatpush1.msra.mxu0 0.0
  %5317 = vmatprep.subr.mxu0 0.0
  %5318 = vmatpush1.msra.mxu0 0.0
  %5319 = vmatprep.subr.mxu0 0.0
  %5320 = vmatpush1.msra.mxu0 0.0
  %5321 = vmatprep.subr.mxu0 0.0
  %5322 = vmatpush1.msra.mxu0 0.0
  %5323 = vmatprep.subr.mxu0 0.0
  %5324 = vmatpush1.msra.mxu0 0.0
  %5325 = vmatprep.subr.mxu0 0.0
  %5326 = vmatpush1.msra.mxu0 0.0
  %5327 = vmatprep.subr.mxu0 0.0
  %5328 = vmatpush1.msra.mxu0 0.0
  %5329 = vmatprep.subr.mxu0 0.0
  %5330 = vmatpush1.msra.mxu0 0.0
  %5331 = vmatprep.subr.mxu0 0.0
  %5332 = vmatpush1.msra.mxu0 0.0
  %5333 = vmatprep.subr.mxu0 0.0
  %5334 = vmatpush1.msra.mxu0 0.0
  %5335 = vmatprep.subr.mxu0 0.0
  %5336 = vmatpush1.msra.mxu0 0.0
  %5337 = vmatprep.subr.mxu0 0.0
  %5338 = vmatpush1.msra.mxu0 0.0
  %5339 = vmatprep.subr.mxu0 0.0
  %5340 = vmatpush1.msra.mxu0 0.0
  %5341 = vmatprep.subr.mxu0 0.0
  %5342 = vmatpush1.msra.mxu0 0.0
  %5343 = vmatprep.subr.mxu0 0.0
  %5344 = vmatpush1.msra.mxu0 0.0
  %5345 = vmatprep.subr.mxu0 0.0
  %5346 = vmatpush1.msra.mxu0 0.0
  %5347 = vmatprep.subr.mxu0 0.0
  %5348 = vmatpush1.msra.mxu0 0.0
  %5349 = vmatprep.subr.mxu0 0.0
  %5350 = vmatpush1.msra.mxu0 0.0
  %5351 = vmatprep.subr.mxu0 0.0
  %5352 = vmatpush1.msra.mxu0 0.0
  %5353 = vmatprep.subr.mxu0 0.0
  %5354 = vmatpush1.msra.mxu0 0.0
  %5355 = vmatprep.subr.mxu0 0.0
  %5356 = vmatpush1.msra.mxu0 0.0
  %5357 = vmatprep.mubr.f32.mxu0 0.0
  %5358 = vmatmul.mubr.f32.gmra.mrb[0].mxu0 %v5279
  %v5359 = vpop.f32.mrb[0].mxu0
  %v5360 = vadd.f32 0.0, %v5359
  %v5361 = vpop.f32.mrb[0].mxu0
  %5362 = vmatprep.mubr.f32.mxu0 0.0
  %5363 = vmatmul.mubr.f32.gmra.mrb[0].mxu0 %v5282
  %v5364 = vpop.f32.mrb[0].mxu0
  %v5365 = vadd.f32 0.0, %v5364
  %v5366 = vpop.f32.mrb[0].mxu0
  %5367 = vmatprep.mubr.f32.mxu0 0.0
  %5368 = vmatmul.mubr.f32.gmra.mrb[0].mxu0 %v5285
  %v5369 = vpop.f32.mrb[0].mxu0
  %v5370 = vadd.f32 0.0, %v5369
  %v5371 = vpop.f32.mrb[0].mxu0
  %5372 = vmatprep.mubr.f32.mxu0 0.0
  %5373 = vmatmul.mubr.f32.gmra.mrb[0].mxu0 %v5288
  %v5374 = vpop.f32.mrb[0].mxu0
  %v5375 = vadd.f32 0.0, %v5374
  %v5376 = vpop.f32.mrb[0].mxu0
  %5377 = vmatprep.mubr.f32.mxu0 0.0
  %5378 = vmatmul.mubr.f32.gmra.mrb[0].mxu0 %v5291
  %v5379 = vpop.f32.mrb[0].mxu0
  %v5380 = vadd.f32 0.0, %v5379
  %v5381 = vpop.f32.mrb[0].mxu0
  %5382 = vdwg.mxu0
  %v5383 = vadd.f32 %v5239, %v5360
  %v5384 = vadd.f32 %v5244, %v5365
  %v5385 = vadd.f32 %v5249, %v5370
  %v5386 = vadd.f32 %v5254, %v5375
  %v5387 = vadd.f32 %v5259, %v5380
  %v5388 = vld [vmem:[#allocation3 + $0x3] sm:$0xff]
  %v5389 = vld [vmem:[#allocation3 + $0xb] sm:$0xff]
  %v5390 = vld [vmem:[#allocation3 + $0x13] sm:$0xff]
  %v5391 = vld [vmem:[#allocation3 + $0x1b] sm:$0xff]
  %v5392 = vld [vmem:[#allocation3 + $0x23] sm:$0xf]
  %s5393 = scalar_lea.vmem %s9, 240
  %v5394 = vld [vmem:[%s5393] sm:$0xff]
  %v5395 = vld [vmem:[%s5393 + $0x8] sm:$0xff]
  %v5396 = vld [vmem:[%s5393 + $0x10] sm:$0xff]
  %v5397 = vld [vmem:[%s5393 + $0x18] sm:$0xff]
  %v5398 = vld [vmem:[%s5393 + $0x20] sm:$0xff]
  %v5399 = vld [vmem:[%s5393 + $0x28] sm:$0xff]
  %v5400 = vld [vmem:[%s5393 + $0x30] sm:$0xff]
  %v5401 = vld [vmem:[%s5393 + $0x38] sm:$0xff]
  %v5402 = vld [vmem:[%s5393 + $0x40] sm:$0xff]
  %v5403 = vld [vmem:[%s5393 + $0x48] sm:$0xff]
  %v5405 = vsel %vm5015, %v5388, 0
  %v5408 = vsel %vm5015, %v5389, 0
  %v5411 = vsel %vm5015, %v5390, 0
  %v5414 = vsel %vm5015, %v5391, 0
  %v5417 = vsel %vm5015, %v5392, 0
  %5419 = vmatprep.subr.mxu0 0.0
  %5420 = vmatpush1.msra.mxu0 %v5394
  %5421 = vmatprep.subr.mxu0 0.0
  %5422 = vmatpush1.msra.mxu0 %v5395
  %5423 = vmatprep.subr.mxu0 0.0
  %5424 = vmatpush1.msra.mxu0 %v5396
  %5425 = vmatprep.subr.mxu0 0.0
  %5426 = vmatpush1.msra.mxu0 %v5397
  %5427 = vmatprep.subr.mxu0 0.0
  %5428 = vmatpush1.msra.mxu0 %v5398
  %5429 = vmatprep.subr.mxu0 0.0
  %5430 = vmatpush1.msra.mxu0 %v5399
  %5431 = vmatprep.subr.mxu0 0.0
  %5432 = vmatpush1.msra.mxu0 %v5400
  %5433 = vmatprep.subr.mxu0 0.0
  %5434 = vmatpush1.msra.mxu0 %v5401
  %5435 = vmatprep.subr.mxu0 0.0
  %5436 = vmatpush1.msra.mxu0 %v5402
  %5437 = vmatprep.subr.mxu0 0.0
  %5438 = vmatpush1.msra.mxu0 %v5403
  %5439 = vmatprep.subr.mxu0 0.0
  %5440 = vmatpush1.msra.mxu0 0.0
  %5441 = vmatprep.subr.mxu0 0.0
  %5442 = vmatpush1.msra.mxu0 0.0
  %5443 = vmatprep.subr.mxu0 0.0
  %5444 = vmatpush1.msra.mxu0 0.0
  %5445 = vmatprep.subr.mxu0 0.0
  %5446 = vmatpush1.msra.mxu0 0.0
  %5447 = vmatprep.subr.mxu0 0.0
  %5448 = vmatpush1.msra.mxu0 0.0
  %5449 = vmatprep.subr.mxu0 0.0
  %5450 = vmatpush1.msra.mxu0 0.0
  %5451 = vmatprep.subr.mxu0 0.0
  %5452 = vmatpush1.msra.mxu0 0.0
  %5453 = vmatprep.subr.mxu0 0.0
  %5454 = vmatpush1.msra.mxu0 0.0
  %5455 = vmatprep.subr.mxu0 0.0
  %5456 = vmatpush1.msra.mxu0 0.0
  %5457 = vmatprep.subr.mxu0 0.0
  %5458 = vmatpush1.msra.mxu0 0.0
  %5459 = vmatprep.subr.mxu0 0.0
  %5460 = vmatpush1.msra.mxu0 0.0
  %5461 = vmatprep.subr.mxu0 0.0
  %5462 = vmatpush1.msra.mxu0 0.0
  %5463 = vmatprep.subr.mxu0 0.0
  %5464 = vmatpush1.msra.mxu0 0.0
  %5465 = vmatprep.subr.mxu0 0.0
  %5466 = vmatpush1.msra.mxu0 0.0
  %5467 = vmatprep.subr.mxu0 0.0
  %5468 = vmatpush1.msra.mxu0 0.0
  %5469 = vmatprep.subr.mxu0 0.0
  %5470 = vmatpush1.msra.mxu0 0.0
  %5471 = vmatprep.subr.mxu0 0.0
  %5472 = vmatpush1.msra.mxu0 0.0
  %5473 = vmatprep.subr.mxu0 0.0
  %5474 = vmatpush1.msra.mxu0 0.0
  %5475 = vmatprep.subr.mxu0 0.0
  %5476 = vmatpush1.msra.mxu0 0.0
  %5477 = vmatprep.subr.mxu0 0.0
  %5478 = vmatpush1.msra.mxu0 0.0
  %5479 = vmatprep.subr.mxu0 0.0
  %5480 = vmatpush1.msra.mxu0 0.0
  %5481 = vmatprep.subr.mxu0 0.0
  %5482 = vmatpush1.msra.mxu0 0.0
  %5483 = vmatprep.mubr.f32.mxu0 0.0
  %5484 = vmatmul.mubr.f32.gmra.mrb[0].mxu0 %v5405
  %v5485 = vpop.f32.mrb[0].mxu0
  %v5486 = vadd.f32 0.0, %v5485
  %v5487 = vpop.f32.mrb[0].mxu0
  %5488 = vmatprep.mubr.f32.mxu0 0.0
  %5489 = vmatmul.mubr.f32.gmra.mrb[0].mxu0 %v5408
  %v5490 = vpop.f32.mrb[0].mxu0
  %v5491 = vadd.f32 0.0, %v5490
  %v5492 = vpop.f32.mrb[0].mxu0
  %5493 = vmatprep.mubr.f32.mxu0 0.0
  %5494 = vmatmul.mubr.f32.gmra.mrb[0].mxu0 %v5411
  %v5495 = vpop.f32.mrb[0].mxu0
  %v5496 = vadd.f32 0.0, %v5495
  %v5497 = vpop.f32.mrb[0].mxu0
  %5498 = vmatprep.mubr.f32.mxu0 0.0
  %5499 = vmatmul.mubr.f32.gmra.mrb[0].mxu0 %v5414
  %v5500 = vpop.f32.mrb[0].mxu0
  %v5501 = vadd.f32 0.0, %v5500
  %v5502 = vpop.f32.mrb[0].mxu0
  %5503 = vmatprep.mubr.f32.mxu0 0.0
  %5504 = vmatmul.mubr.f32.gmra.mrb[0].mxu0 %v5417
  %v5505 = vpop.f32.mrb[0].mxu0
  %v5506 = vadd.f32 0.0, %v5505
  %v5507 = vpop.f32.mrb[0].mxu0
  %5508 = vdwg.mxu0
  %v5509 = vadd.f32 %v5383, %v5486
  %v5510 = vadd.f32 %v5384, %v5491
  %v5511 = vadd.f32 %v5385, %v5496
  %v5512 = vadd.f32 %v5386, %v5501
  %v5513 = vadd.f32 %v5387, %v5506
  %v5514 = vld [vmem:[#allocation3 + $0x4] sm:$0xff]
  %v5515 = vld [vmem:[#allocation3 + $0xc] sm:$0xff]
  %v5516 = vld [vmem:[#allocation3 + $0x14] sm:$0xff]
  %v5517 = vld [vmem:[#allocation3 + $0x1c] sm:$0xff]
  %v5518 = vld [vmem:[#allocation3 + $0x24] sm:$0xf]
  %s5519 = scalar_lea.vmem %s9, 320
  %v5520 = vld [vmem:[%s5519] sm:$0xff]
  %v5521 = vld [vmem:[%s5519 + $0x8] sm:$0xff]
  %v5522 = vld [vmem:[%s5519 + $0x10] sm:$0xff]
  %v5523 = vld [vmem:[%s5519 + $0x18] sm:$0xff]
  %v5524 = vld [vmem:[%s5519 + $0x20] sm:$0xff]
  %v5525 = vld [vmem:[%s5519 + $0x28] sm:$0xff]
  %v5526 = vld [vmem:[%s5519 + $0x30] sm:$0xff]
  %v5527 = vld [vmem:[%s5519 + $0x38] sm:$0xff]
  %v5528 = vld [vmem:[%s5519 + $0x40] sm:$0xff]
  %v5529 = vld [vmem:[%s5519 + $0x48] sm:$0xff]
  %v5531 = vsel %vm5015, %v5514, 0
  %v5534 = vsel %vm5015, %v5515, 0
  %v5537 = vsel %vm5015, %v5516, 0
  %v5540 = vsel %vm5015, %v5517, 0
  %v5543 = vsel %vm5015, %v5518, 0
  %5545 = vmatprep.subr.mxu0 0.0
  %5546 = vmatpush1.msra.mxu0 %v5520
  %5547 = vmatprep.subr.mxu0 0.0
  %5548 = vmatpush1.msra.mxu0 %v5521
  %5549 = vmatprep.subr.mxu0 0.0
  %5550 = vmatpush1.msra.mxu0 %v5522
  %5551 = vmatprep.subr.mxu0 0.0
  %5552 = vmatpush1.msra.mxu0 %v5523
  %5553 = vmatprep.subr.mxu0 0.0
  %5554 = vmatpush1.msra.mxu0 %v5524
  %5555 = vmatprep.subr.mxu0 0.0
  %5556 = vmatpush1.msra.mxu0 %v5525
  %5557 = vmatprep.subr.mxu0 0.0
  %5558 = vmatpush1.msra.mxu0 %v5526
  %5559 = vmatprep.subr.mxu0 0.0
  %5560 = vmatpush1.msra.mxu0 %v5527
  %5561 = vmatprep.subr.mxu0 0.0
  %5562 = vmatpush1.msra.mxu0 %v5528
  %5563 = vmatprep.subr.mxu0 0.0
  %5564 = vmatpush1.msra.mxu0 %v5529
  %5565 = vmatprep.subr.mxu0 0.0
  %5566 = vmatpush1.msra.mxu0 0.0
  %5567 = vmatprep.subr.mxu0 0.0
  %5568 = vmatpush1.msra.mxu0 0.0
  %5569 = vmatprep.subr.mxu0 0.0
  %5570 = vmatpush1.msra.mxu0 0.0
  %5571 = vmatprep.subr.mxu0 0.0
  %5572 = vmatpush1.msra.mxu0 0.0
  %5573 = vmatprep.subr.mxu0 0.0
  %5574 = vmatpush1.msra.mxu0 0.0
  %5575 = vmatprep.subr.mxu0 0.0
  %5576 = vmatpush1.msra.mxu0 0.0
  %5577 = vmatprep.subr.mxu0 0.0
  %5578 = vmatpush1.msra.mxu0 0.0
  %5579 = vmatprep.subr.mxu0 0.0
  %5580 = vmatpush1.msra.mxu0 0.0
  %5581 = vmatprep.subr.mxu0 0.0
  %5582 = vmatpush1.msra.mxu0 0.0
  %5583 = vmatprep.subr.mxu0 0.0
  %5584 = vmatpush1.msra.mxu0 0.0
  %5585 = vmatprep.subr.mxu0 0.0
  %5586 = vmatpush1.msra.mxu0 0.0
  %5587 = vmatprep.subr.mxu0 0.0
  %5588 = vmatpush1.msra.mxu0 0.0
  %5589 = vmatprep.subr.mxu0 0.0
  %5590 = vmatpush1.msra.mxu0 0.0
  %5591 = vmatprep.subr.mxu0 0.0
  %5592 = vmatpush1.msra.mxu0 0.0
  %5593 = vmatprep.subr.mxu0 0.0
  %5594 = vmatpush1.msra.mxu0 0.0
  %5595 = vmatprep.subr.mxu0 0.0
  %5596 = vmatpush1.msra.mxu0 0.0
  %5597 = vmatprep.subr.mxu0 0.0
  %5598 = vmatpush1.msra.mxu0 0.0
  %5599 = vmatprep.subr.mxu0 0.0
  %5600 = vmatpush1.msra.mxu0 0.0
  %5601 = vmatprep.subr.mxu0 0.0
  %5602 = vmatpush1.msra.mxu0 0.0
  %5603 = vmatprep.subr.mxu0 0.0
  %5604 = vmatpush1.msra.mxu0 0.0
  %5605 = vmatprep.subr.mxu0 0.0
  %5606 = vmatpush1.msra.mxu0 0.0
  %5607 = vmatprep.subr.mxu0 0.0
  %5608 = vmatpush1.msra.mxu0 0.0
  %5609 = vmatprep.mubr.f32.mxu0 0.0
  %5610 = vmatmul.mubr.f32.gmra.mrb[0].mxu0 %v5531
  %v5611 = vpop.f32.mrb[0].mxu0
  %v5612 = vadd.f32 0.0, %v5611
  %v5613 = vpop.f32.mrb[0].mxu0
  %5614 = vmatprep.mubr.f32.mxu0 0.0
  %5615 = vmatmul.mubr.f32.gmra.mrb[0].mxu0 %v5534
  %v5616 = vpop.f32.mrb[0].mxu0
  %v5617 = vadd.f32 0.0, %v5616
  %v5618 = vpop.f32.mrb[0].mxu0
  %5619 = vmatprep.mubr.f32.mxu0 0.0
  %5620 = vmatmul.mubr.f32.gmra.mrb[0].mxu0 %v5537
  %v5621 = vpop.f32.mrb[0].mxu0
  %v5622 = vadd.f32 0.0, %v5621
  %v5623 = vpop.f32.mrb[0].mxu0
  %5624 = vmatprep.mubr.f32.mxu0 0.0
  %5625 = vmatmul.mubr.f32.gmra.mrb[0].mxu0 %v5540
  %v5626 = vpop.f32.mrb[0].mxu0
  %v5627 = vadd.f32 0.0, %v5626
  %v5628 = vpop.f32.mrb[0].mxu0
  %5629 = vmatprep.mubr.f32.mxu0 0.0
  %5630 = vmatmul.mubr.f32.gmra.mrb[0].mxu0 %v5543
  %v5631 = vpop.f32.mrb[0].mxu0
  %v5632 = vadd.f32 0.0, %v5631
  %v5633 = vpop.f32.mrb[0].mxu0
  %5634 = vdwg.mxu0
  %v5635 = vadd.f32 %v5509, %v5612
  %v5636 = vadd.f32 %v5510, %v5617
  %v5637 = vadd.f32 %v5511, %v5622
  %v5638 = vadd.f32 %v5512, %v5627
  %v5639 = vadd.f32 %v5513, %v5632
  %v5640 = vld [vmem:[%s11] sm:$0xff]
  %v5641 = vld [vmem:[%s10] sm:$0x1]
  %v5643 = vlaneseq
  %v5644 = vshrl.u32 %v5643, 7
  %v5645 = vsub.s32 0, %v5644
  %v5646 = vrot.slane %v5641, %v5645
  %vm5648 = vcmask 293888
  %v5650 = vsel %vm5648, %v5640, 0
  %v5653 = vsel %vm3089, %v5639, 0
  %5655 = vmatprep.subr.mxu0 0.0
  %5656 = vmatpush1.msra.mxu0 %v5635
  %5657 = vmatprep.subr.mxu0 0.0
  %5658 = vmatpush1.msra.mxu0 %v5636
  %5659 = vmatprep.subr.mxu0 0.0
  %5660 = vmatpush1.msra.mxu0 %v5637
  %5661 = vmatprep.subr.mxu0 0.0
  %5662 = vmatpush1.msra.mxu0 %v5638
  %5663 = vmatprep.subr.mxu0 0.0
  %5664 = vmatpush1.msra.mxu0 %v5653
  %5665 = vmatprep.subr.mxu0 0.0
  %5666 = vmatpush1.msra.mxu0 0.0
  %5667 = vmatprep.subr.mxu0 0.0
  %5668 = vmatpush1.msra.mxu0 0.0
  %5669 = vmatprep.subr.mxu0 0.0
  %5670 = vmatpush1.msra.mxu0 0.0
  %5671 = vmatprep.subr.mxu0 0.0
  %5672 = vmatpush1.msra.mxu0 0.0
  %5673 = vmatprep.subr.mxu0 0.0
  %5674 = vmatpush1.msra.mxu0 0.0
  %5675 = vmatprep.subr.mxu0 0.0
  %5676 = vmatpush1.msra.mxu0 0.0
  %5677 = vmatprep.subr.mxu0 0.0
  %5678 = vmatpush1.msra.mxu0 0.0
  %5679 = vmatprep.subr.mxu0 0.0
  %5680 = vmatpush1.msra.mxu0 0.0
  %5681 = vmatprep.subr.mxu0 0.0
  %5682 = vmatpush1.msra.mxu0 0.0
  %5683 = vmatprep.subr.mxu0 0.0
  %5684 = vmatpush1.msra.mxu0 0.0
  %5685 = vmatprep.subr.mxu0 0.0
  %5686 = vmatpush1.msra.mxu0 0.0
  %5687 = vmatprep.subr.mxu0 0.0
  %5688 = vmatpush1.msra.mxu0 0.0
  %5689 = vmatprep.subr.mxu0 0.0
  %5690 = vmatpush1.msra.mxu0 0.0
  %5691 = vmatprep.subr.mxu0 0.0
  %5692 = vmatpush1.msra.mxu0 0.0
  %5693 = vmatprep.subr.mxu0 0.0
  %5694 = vmatpush1.msra.mxu0 0.0
  %5695 = vmatprep.subr.mxu0 0.0
  %5696 = vmatpush1.msra.mxu0 0.0
  %5697 = vmatprep.subr.mxu0 0.0
  %5698 = vmatpush1.msra.mxu0 0.0
  %5699 = vmatprep.subr.mxu0 0.0
  %5700 = vmatpush1.msra.mxu0 0.0
  %5701 = vmatprep.subr.mxu0 0.0
  %5702 = vmatpush1.msra.mxu0 0.0
  %5703 = vmatprep.subr.mxu0 0.0
  %5704 = vmatpush1.msra.mxu0 0.0
  %5705 = vmatprep.subr.mxu0 0.0
  %5706 = vmatpush1.msra.mxu0 0.0
  %5707 = vmatprep.subr.mxu0 0.0
  %5708 = vmatpush1.msra.mxu0 0.0
  %5709 = vmatprep.subr.mxu0 0.0
  %5710 = vmatpush1.msra.mxu0 0.0
  %5711 = vmatprep.subr.mxu0 0.0
  %5712 = vmatpush1.msra.mxu0 0.0
  %5713 = vmatprep.subr.mxu0 0.0
  %5714 = vmatpush1.msra.mxu0 0.0
  %5715 = vmatprep.subr.mxu0 0.0
  %5716 = vmatpush1.msra.mxu0 0.0
  %5717 = vmatprep.subr.mxu0 0.0
  %5718 = vmatpush1.msra.mxu0 0.0
  %5719 = vmatprep.mubr.f32.mxu0 0.0
  %5720 = vmatmul.mubr.f32.gmra.mrb[0].mxu0 %v5650
  %v5721 = vpop.f32.mrb[0].mxu0
  %v5722 = vadd.f32 %v5646, %v5721
  %v5723 = vpop.f32.mrb[0].mxu0
  %5724 = vdwg.mxu0
  %v5725 = vxor.u32 %v5722, 2147483648
  %v5726 = vmul.f32 %v5725, 1.442695
  %v5727 = vpow.pop %v5726
  %v5728 = vadd.f32 %v5727, 1.0
  %v5729 = vrcp.pop %v5728
  %v5730 = vmul.f32 1.0, %v5729
  %v5731 = vld [vmem:[%s12] sm:$0xff]
  %v5732 = vld [vmem:[%s12 + $0x8] sm:$0xff]
  %v5733 = vld [vmem:[%s12 + $0x10] sm:$0xff]
  %v5734 = vld [vmem:[%s12 + $0x18] sm:$0xff]
  %v5735 = vld [vmem:[%s12 + $0x20] sm:$0xff]
  %v5736 = vld [vmem:[%s12 + $0x28] sm:$0xff]
  %v5737 = vld [vmem:[%s12 + $0x30] sm:$0xff]
  %v5738 = vld [vmem:[%s12 + $0x38] sm:$0xff]
  %v5739 = vld [vmem:[%s12 + $0x40] sm:$0xff]
  %v5740 = vld [vmem:[%s12 + $0x48] sm:$0xff]
  %v5741 = vld [vmem:[%s12 + $0x50] sm:$0xff]
  %v5742 = vld [vmem:[%s12 + $0x58] sm:$0xff]
  %v5743 = vld [vmem:[%s12 + $0x60] sm:$0xff]
  %v5744 = vld [vmem:[%s12 + $0x68] sm:$0xff]
  %v5745 = vld [vmem:[%s12 + $0x70] sm:$0xff]
  %v5746 = vld [vmem:[%s13] sm:$0x1]
  %v5748 = vlaneseq
  %v5749 = vshrl.u32 %v5748, 7
  %v5750 = vsub.s32 0, %v5749
  %v5751 = vrot.slane %v5746, %v5750
  %vm5753 = vcmask 982016
  %v5755 = vsel %vm5753, %v5730, 0
  %5757 = vmatprep.subr.mxu0 0.0
  %5758 = vmatpush1.msra.mxu0 %v5731
  %5759 = vmatprep.subr.mxu0 0.0
  %5760 = vmatpush1.msra.mxu0 %v5732
  %5761 = vmatprep.subr.mxu0 0.0
  %5762 = vmatpush1.msra.mxu0 %v5733
  %5763 = vmatprep.subr.mxu0 0.0
  %5764 = vmatpush1.msra.mxu0 %v5734
  %5765 = vmatprep.subr.mxu0 0.0
  %5766 = vmatpush1.msra.mxu0 %v5735
  %5767 = vmatprep.subr.mxu0 0.0
  %5768 = vmatpush1.msra.mxu0 %v5736
  %5769 = vmatprep.subr.mxu0 0.0
  %5770 = vmatpush1.msra.mxu0 %v5737
  %5771 = vmatprep.subr.mxu0 0.0
  %5772 = vmatpush1.msra.mxu0 %v5738
  %5773 = vmatprep.subr.mxu0 0.0
  %5774 = vmatpush1.msra.mxu0 %v5739
  %5775 = vmatprep.subr.mxu0 0.0
  %5776 = vmatpush1.msra.mxu0 %v5740
  %5777 = vmatprep.subr.mxu0 0.0
  %5778 = vmatpush1.msra.mxu0 %v5741
  %5779 = vmatprep.subr.mxu0 0.0
  %5780 = vmatpush1.msra.mxu0 %v5742
  %5781 = vmatprep.subr.mxu0 0.0
  %5782 = vmatpush1.msra.mxu0 %v5743
  %5783 = vmatprep.subr.mxu0 0.0
  %5784 = vmatpush1.msra.mxu0 %v5744
  %5785 = vmatprep.subr.mxu0 0.0
  %5786 = vmatpush1.msra.mxu0 %v5745
  %5787 = vmatprep.subr.mxu0 0.0
  %5788 = vmatpush1.msra.mxu0 0.0
  %5789 = vmatprep.subr.mxu0 0.0
  %5790 = vmatpush1.msra.mxu0 0.0
  %5791 = vmatprep.subr.mxu0 0.0
  %5792 = vmatpush1.msra.mxu0 0.0
  %5793 = vmatprep.subr.mxu0 0.0
  %5794 = vmatpush1.msra.mxu0 0.0
  %5795 = vmatprep.subr.mxu0 0.0
  %5796 = vmatpush1.msra.mxu0 0.0
  %5797 = vmatprep.subr.mxu0 0.0
  %5798 = vmatpush1.msra.mxu0 0.0
  %5799 = vmatprep.subr.mxu0 0.0
  %5800 = vmatpush1.msra.mxu0 0.0
  %5801 = vmatprep.subr.mxu0 0.0
  %5802 = vmatpush1.msra.mxu0 0.0
  %5803 = vmatprep.subr.mxu0 0.0
  %5804 = vmatpush1.msra.mxu0 0.0
  %5805 = vmatprep.subr.mxu0 0.0
  %5806 = vmatpush1.msra.mxu0 0.0
  %5807 = vmatprep.subr.mxu0 0.0
  %5808 = vmatpush1.msra.mxu0 0.0
  %5809 = vmatprep.subr.mxu0 0.0
  %5810 = vmatpush1.msra.mxu0 0.0
  %5811 = vmatprep.subr.mxu0 0.0
  %5812 = vmatpush1.msra.mxu0 0.0
  %5813 = vmatprep.subr.mxu0 0.0
  %5814 = vmatpush1.msra.mxu0 0.0
  %5815 = vmatprep.subr.mxu0 0.0
  %5816 = vmatpush1.msra.mxu0 0.0
  %5817 = vmatprep.subr.mxu0 0.0
  %5818 = vmatpush1.msra.mxu0 0.0
  %5819 = vmatprep.subr.mxu0 0.0
  %5820 = vmatpush1.msra.mxu0 0.0
  %5821 = vmatprep.mubr.f32.mxu0 0.0
  %5822 = vmatmul.mubr.f32.gmra.mrb[0].mxu0 %v5755
  %v5823 = vpop.f32.mrb[0].mxu0
  %v5824 = vadd.f32 %v5751, %v5823
  %v5825 = vpop.f32.mrb[0].mxu0
  %5826 = vdwg.mxu0
  %v5827 = vxor.u32 %v5824, 2147483648
  %v5828 = vmul.f32 %v5827, 1.442695
  %v5829 = vpow.pop %v5828
  %v5830 = vadd.f32 %v5829, 1.0
  %v5831 = vrcp.pop %v5830
  %v5832 = vmul.f32 1.0, %v5831
  %v5833 = vld [vmem:[%s14] sm:$0xff]
  %v5834 = vld [vmem:[%s14 + $0x8] sm:$0xff]
  %v5835 = vld [vmem:[%s14 + $0x10] sm:$0xff]
  %v5836 = vld [vmem:[%s14 + $0x18] sm:$0xff]
  %v5837 = vld [vmem:[%s14 + $0x20] sm:$0xff]
  %v5838 = vld [vmem:[%s14 + $0x28] sm:$0xff]
  %v5839 = vld [vmem:[%s14 + $0x30] sm:$0xff]
  %v5840 = vld [vmem:[%s14 + $0x38] sm:$0xff]
  %v5841 = vld [vmem:[%s14 + $0x40] sm:$0xff]
  %v5842 = vld [vmem:[%s14 + $0x48] sm:$0xff]
  %v5843 = vld [vmem:[%s14 + $0x50] sm:$0xf]
  %v5844 = vld [vmem:[%s15] sm:$0x1]
  %v5846 = vlaneseq
  %v5847 = vshrl.u32 %v5846, 7
  %v5848 = vsub.s32 0, %v5847
  %v5849 = vrot.slane %v5844, %v5848
  %v5852 = vsel %vm3228, %v5832, 0
  %v5855 = vsel %vm3089, %v5843, 0
  %5857 = vmatprep.subr.mxu0 0.0
  %5858 = vmatpush1.msra.mxu0 %v5833
  %5859 = vmatprep.subr.mxu0 0.0
  %5860 = vmatpush1.msra.mxu0 %v5834
  %5861 = vmatprep.subr.mxu0 0.0
  %5862 = vmatpush1.msra.mxu0 %v5835
  %5863 = vmatprep.subr.mxu0 0.0
  %5864 = vmatpush1.msra.mxu0 %v5836
  %5865 = vmatprep.subr.mxu0 0.0
  %5866 = vmatpush1.msra.mxu0 %v5837
  %5867 = vmatprep.subr.mxu0 0.0
  %5868 = vmatpush1.msra.mxu0 %v5838
  %5869 = vmatprep.subr.mxu0 0.0
  %5870 = vmatpush1.msra.mxu0 %v5839
  %5871 = vmatprep.subr.mxu0 0.0
  %5872 = vmatpush1.msra.mxu0 %v5840
  %5873 = vmatprep.subr.mxu0 0.0
  %5874 = vmatpush1.msra.mxu0 %v5841
  %5875 = vmatprep.subr.mxu0 0.0
  %5876 = vmatpush1.msra.mxu0 %v5842
  %5877 = vmatprep.subr.mxu0 0.0
  %5878 = vmatpush1.msra.mxu0 %v5855
  %5879 = vmatprep.subr.mxu0 0.0
  %5880 = vmatpush1.msra.mxu0 0.0
  %5881 = vmatprep.subr.mxu0 0.0
  %5882 = vmatpush1.msra.mxu0 0.0
  %5883 = vmatprep.subr.mxu0 0.0
  %5884 = vmatpush1.msra.mxu0 0.0
  %5885 = vmatprep.subr.mxu0 0.0
  %5886 = vmatpush1.msra.mxu0 0.0
  %5887 = vmatprep.subr.mxu0 0.0
  %5888 = vmatpush1.msra.mxu0 0.0
  %5889 = vmatprep.subr.mxu0 0.0
  %5890 = vmatpush1.msra.mxu0 0.0
  %5891 = vmatprep.subr.mxu0 0.0
  %5892 = vmatpush1.msra.mxu0 0.0
  %5893 = vmatprep.subr.mxu0 0.0
  %5894 = vmatpush1.msra.mxu0 0.0
  %5895 = vmatprep.subr.mxu0 0.0
  %5896 = vmatpush1.msra.mxu0 0.0
  %5897 = vmatprep.subr.mxu0 0.0
  %5898 = vmatpush1.msra.mxu0 0.0
  %5899 = vmatprep.subr.mxu0 0.0
  %5900 = vmatpush1.msra.mxu0 0.0
  %5901 = vmatprep.subr.mxu0 0.0
  %5902 = vmatpush1.msra.mxu0 0.0
  %5903 = vmatprep.subr.mxu0 0.0
  %5904 = vmatpush1.msra.mxu0 0.0
  %5905 = vmatprep.subr.mxu0 0.0
  %5906 = vmatpush1.msra.mxu0 0.0
  %5907 = vmatprep.subr.mxu0 0.0
  %5908 = vmatpush1.msra.mxu0 0.0
  %5909 = vmatprep.subr.mxu0 0.0
  %5910 = vmatpush1.msra.mxu0 0.0
  %5911 = vmatprep.subr.mxu0 0.0
  %5912 = vmatpush1.msra.mxu0 0.0
  %5913 = vmatprep.subr.mxu0 0.0
  %5914 = vmatpush1.msra.mxu0 0.0
  %5915 = vmatprep.subr.mxu0 0.0
  %5916 = vmatpush1.msra.mxu0 0.0
  %5917 = vmatprep.subr.mxu0 0.0
  %5918 = vmatpush1.msra.mxu0 0.0
  %5919 = vmatprep.subr.mxu0 0.0
  %5920 = vmatpush1.msra.mxu0 0.0
  %5921 = vmatprep.mubr.f32.mxu0 0.0
  %5922 = vmatmul.mubr.f32.gmra.mrb[0].mxu0 %v5852
  %v5923 = vpop.f32.mrb[0].mxu0
  %v5924 = vadd.f32 %v5849, %v5923
  %v5925 = vpop.f32.mrb[0].mxu0
  %5926 = vdwg.mxu0
  %vm5927 = vcmask 80896
  %5928 = vst.msk [vmem:[%s16] sm:$0xff] %vm5927, %v5924
  // Predicated region
  $region66: #{lenet_forward.1} parent=0 // pred_check
    _
  $region67: #{lenet_forward.1} parent=0 // pred_check_branch
    %5930 = sbr.rel (0) target = $region69
  $region68: #{lenet_forward.1} parent=0 // pred_region
    _
  $region69: #{lenet_forward.1} parent=0 // pred_fallthru
    _
  // Predicated region
  $region70: #{lenet_forward.1} parent=0 // pred_check
    _
  $region71: #{lenet_forward.1} parent=0 // pred_check_branch
    %5932 = sbr.rel (0) target = $region73
  $region72: #{lenet_forward.1} parent=0 // pred_region
    _
  $region73: #{lenet_forward.1} parent=0 // pred_fallthru
    _

</llo_original>
